<compile_context>
chip_gen: v6e
topology: v6e:2x2x1
jax: 0.10.0
libtpu: 0.0.40
codegen_flags: <defaults>
</compile_context>

<pallas_src>
import functools
import math

import jax
import jax.numpy as jnp
from jax.experimental import pallas as pl
from jax.experimental.pallas import tpu as pltpu

_NEG_BIG = -1e30  # "minus infinity" that stays NaN-free under f32 arithmetic


def _round_up(x, m):
    return ((x + m - 1) // m) * m


def _vmem_capacity_bytes():
    try:
        return int(pltpu.get_tpu_info().vmem_capacity_bytes)
    except Exception:
        return 64 << 20  # conservative fallback: v7x per-TensorCore VMEM


def _spec(block_shape, index_map, buffers=None):
    """BlockSpec with optional N-deep buffering (pipeline_mode=pl.Buffered).
    Falls back to a plain BlockSpec if the installed Pallas lacks the kwarg."""
    if buffers is not None and hasattr(pl, "Buffered"):
        try:
            return pl.BlockSpec(block_shape, index_map, pipeline_mode=pl.Buffered(buffers))
        except TypeError:
            pass
    return pl.BlockSpec(block_shape, index_map)


# --------------------------------------------------------------------------- #
# Kernel
# --------------------------------------------------------------------------- #
def decoder_step_kernel(
    x_ref,       # (Bp, Ep)          embedded decoder input (zero padded), f32
    h_ref,       # (Bp, Hp)          previous hidden state (zero padded), f32
    enc_ref,     # (Bp, Sp, Hp)      encoder outputs, batch-major, zero padded, f32
    wa_h_ref,    # (Hp, Hp)          attention Wa, hidden half (transposed, padded)
    wa_e_ref,    # (Hp, Hp)          attention Wa, encoder half
    wa_b_ref,    # (1, Hp)
    va_ref,      # (1, Hp)
    wih_ref,     # (Ep+Hp, 3*Hp)     fused GRU W_ih for [embed; context], gate-major cols
    whh_ref,     # (Hp, 3*Hp)
    bih_ref,     # (1, 3*Hp)
    bhh_ref,     # (1, 3*Hp)
    wlin_ref,    # (Kext, TILE_V)    bf16 output-projection tile for [h_new; ctx; 1]
                 #                   (bias folded into row 2*Hp; padded cols hold -1e30)
    logits_ref,  # OUT (Bp, TILE_V)  raw logits tile (lane-dense stores), f32
    lse_ref,     # OUT (1, Bp, 128)  per-core partial log-sum-exp (lane broadcast)
    hnew_ref,    # OUT (1, Bp, Hp)   new hidden state (per-core copy)
    hc_scratch,  # VMEM (Bp, Kext)   bf16 MXU operand [h_new | context | 1, 0...]
    m_scratch,   # VMEM (Bp, 128)    running max of logits (lane-dense)
    s_scratch,   # VMEM (Bp, 128)    running sum of exp(logits - m) (lane-dense)
    *,
    seq_len,     # real (unpadded) encoder sequence length (static)
):
    j = pl.program_id(1)  # vocab-tile index within this core's half

    # ------------------------------------------------------------------ #
    # First tile of each core: attention + single-step GRU (cached in scratch)
    # ------------------------------------------------------------------ #
    @pl.when(j == 0)
    def _attention_and_gru():
        bp, sp, hp = enc_ref.shape
        h = h_ref[...]
        enc = enc_ref[...]

        # energies = relu(Wa @ [h; enc] + b); K=Hp halves kept split so the hidden
        # projection is done once per batch row and no (Bp*Sp, 2*Hp) concat exists.
        hpart = jnp.dot(h, wa_h_ref[...], preferred_element_type=jnp.float32)        # (Bp, Hp)
        epart = jnp.dot(enc.reshape(bp * sp, hp), wa_e_ref[...],
                        preferred_element_type=jnp.float32).reshape(bp, sp, hp)
        energies = jnp.maximum(
            epart + hpart[:, None, :] + wa_b_ref[...][None, :, :], 0.0)               # (Bp, Sp, Hp)
        scores = jnp.sum(energies * va_ref[...][None, :, :], axis=-1)                 # (Bp, Sp)
        if seq_len < sp:  # static: mask padded sequence positions
            col = jax.lax.broadcasted_iota(jnp.int32, (bp, sp), 1)
            scores = jnp.where(col < seq_len, scores, _NEG_BIG)

        m = jnp.max(scores, axis=-1, keepdims=True)
        e = jnp.exp(scores - m)
        # EUP approximate reciprocal: frees the VPU, keeps step-0 latency minimal.
        att = e * pl.reciprocal(jnp.sum(e, axis=-1, keepdims=True), approx=True)      # (Bp, Sp)
        context = jnp.sum(att[:, :, None] * enc, axis=1)                              # (Bp, Hp)

        # Single-step GRU on [embed; context]: one fused K = Ep+Hp matmul; gate
        # slices are 128-lane aligned because Hp is a multiple of 128.
        xc = jnp.concatenate([x_ref[...], context], axis=-1)                          # (Bp, Ep+Hp)
        gi = jnp.dot(xc, wih_ref[...], preferred_element_type=jnp.float32) + bih_ref[...]
        gh = jnp.dot(h, whh_ref[...], preferred_element_type=jnp.float32) + bhh_ref[...]
        r = jax.nn.sigmoid(gi[:, :hp] + gh[:, :hp])
        z = jax.nn.sigmoid(gi[:, hp:2 * hp] + gh[:, hp:2 * hp])
        n = jnp.tanh(gi[:, 2 * hp:] + r * gh[:, 2 * hp:])
        h_new = (1.0 - z) * n + z * h                                                 # (Bp, Hp)

        # bf16 MXU operand [h_new | context | 1, 0...]: aligned slice stores, no concat.
        hc_scratch[:, :hp] = h_new.astype(hc_scratch.dtype)
        hc_scratch[:, hp:2 * hp] = context.astype(hc_scratch.dtype)
        ktail = hc_scratch.shape[1] - 2 * hp
        tail = jax.lax.broadcasted_iota(jnp.int32, (bp, ktail), 1)
        hc_scratch[:, 2 * hp:] = jnp.where(tail == 0, 1.0, 0.0).astype(hc_scratch.dtype)

        # hidden state is emitted in f32 (output block is resident across the grid).
        hnew_ref[0] = h_new
        m_scratch[...] = jnp.full(m_scratch.shape, _NEG_BIG, m_scratch.dtype)
        s_scratch[...] = jnp.zeros(s_scratch.shape, s_scratch.dtype)

    # ------------------------------------------------------------------ #
    # Every grid step: one bf16 vocab tile of the output projection + online LSE
    # (bias already folded into the weight tile via the appended ones column).
    # ------------------------------------------------------------------ #
    logits = jnp.dot(hc_scratch[...], wlin_ref[...],
                     preferred_element_type=jnp.float32)                              # (Bp, TILE_V)
    logits_ref[...] = logits

    m_prev = m_scratch[...]                                                            # (Bp, 128)
    m_new = jnp.maximum(m_prev, jnp.max(logits, axis=-1, keepdims=True))
    p_sum = jnp.sum(jnp.exp(logits - m_new[:, :1]), axis=-1, keepdims=True)            # (Bp, 1)
    s_scratch[...] = s_scratch[...] * jnp.exp(m_prev - m_new) + p_sum
    m_scratch[...] = m_new

    # ------------------------------------------------------------------ #
    # Last tile of this core's half: emit the partial logsumexp
    # ------------------------------------------------------------------ #
    @pl.when(j == pl.num_programs(1) - 1)
    def _finalize():
        lse_ref[0] = m_scratch[...] + jnp.log(s_scratch[...])


# --------------------------------------------------------------------------- #
# One-time preprocessing (hoisted out of the per-token decode loop)
# --------------------------------------------------------------------------- #
def prepare_params(params, *, tile_v=None, vocab_splits=2):
    """Pad / transpose / split / quantize all weights once; reuse every decode step."""
    emb = jnp.asarray(params["embedding"], jnp.float32)
    V, E = emb.shape
    H = params["w_hh"].shape[1]
    Ep = _round_up(E, 128)
    Hp = _round_up(H, 128)
    Kext = 2 * Hp + 16           # [h_new | context | 1, 0*15]: bias row folded into wlin
    f32 = jnp.float32

    vmem_cap = _vmem_capacity_bytes()
    if tile_v is None:
        # ~25% of physical VMEM for the (up to) 3-deep bf16 wlin stream; target 1-2k cols.
        cap_cols = ((vmem_cap // 4) // (3 * Kext * 2)) // 128 * 128
        tile_v = int(min(max(cap_cols, 512), 2048, _round_up(V, 128)))
    assert tile_v % 128 == 0

    n_tiles = -(-V // tile_v)
    splits = vocab_splits if n_tiles >= max(vocab_splits, 2) else 1   # v7x: 2 TCs pull on HBM
    n_tiles = _round_up(n_tiles, splits)
    Vp = n_tiles * tile_v

    emb_p = jnp.zeros((V, Ep), f32).at[:, :E].set(emb)

    wa_w = jnp.asarray(params["wa_w"], f32)                        # (H, 2H): [hidden | enc]
    wa_h = jnp.zeros((Hp, Hp), f32).at[:H, :H].set(wa_w[:, :H].T)
    wa_e = jnp.zeros((Hp, Hp), f32).at[:H, :H].set(wa_w[:, H:].T)
    wa_b = jnp.zeros((1, Hp), f32).at[0, :H].set(jnp.asarray(params["wa_b"], f32))
    va = jnp.zeros((1, Hp), f32).at[0, :H].set(jnp.asarray(params["va"], f32))

    w_ih = jnp.asarray(params["w_ih"], f32)                        # (3H, E+H), gates [r,z,n]
    w_hh = jnp.asarray(params["w_hh"], f32)                        # (3H, H)
    b_ih = jnp.asarray(params["b_ih"], f32)
    b_hh = jnp.asarray(params["b_hh"], f32)
    wih_p = jnp.zeros((Ep + Hp, 3 * Hp), f32)
    whh_p = jnp.zeros((Hp, 3 * Hp), f32)
    bih_p = jnp.zeros((1, 3 * Hp), f32)
    bhh_p = jnp.zeros((1, 3 * Hp), f32)
    for g in range(3):
        wg = w_ih[g * H:(g + 1) * H]                               # (H, E+H)
        wih_p = wih_p.at[:E, g * Hp:g * Hp + H].set(wg[:, :E].T)   # embedding rows
        wih_p = wih_p.at[Ep:Ep + H, g * Hp:g * Hp + H].set(wg[:, E:].T)  # context rows
        whh_p = whh_p.at[:H, g * Hp:g * Hp + H].set(w_hh[g * H:(g + 1) * H].T)
        bih_p = bih_p.at[0, g * Hp:g * Hp + H].set(b_ih[g * H:(g + 1) * H])
        bhh_p = bhh_p.at[0, g * Hp:g * Hp + H].set(b_hh[g * H:(g + 1) * H])
    # TODO(synk): optionally store wih/whh/wa_* in bf16 too (~5-10% extra HBM saving);
    # kept f32 here because they feed the f32 hidden-state output at tight tolerance.

    # Output projection for [h_new | context | 1]: bf16 storage (dominant HBM stream),
    # bias folded into row 2*Hp, padded vocab columns get a -1e30 bias so the online
    # logsumexp ignores them.
    w_lin = jnp.asarray(params["w_lin"], f32)                      # (V, 2H): [h_new | context]
    b_lin = jnp.asarray(params["b_lin"], f32)
    wlin_p = jnp.zeros((Kext, Vp), f32)
    wlin_p = wlin_p.at[:H, :V].set(w_lin[:, :H].T)
    wlin_p = wlin_p.at[Hp:Hp + H, :V].set(w_lin[:, H:].T)
    wlin_p = wlin_p.at[2 * Hp, :].set(jnp.full((Vp,), _NEG_BIG, f32).at[:V].set(b_lin))
    wlin_p = wlin_p.astype(jnp.bfloat16)
    # TODO(synk): int8 wlin (+ per-column scales) on v5e/v6e and fp8 on v7x for another ~2x.

    return dict(
        embedding=emb_p, wa_h=wa_h, wa_e=wa_e, wa_b=wa_b, va=va,
        wih=wih_p, whh=whh_p, bih=bih_p, bhh=bhh_p, wlin=wlin_p,
        dims=dict(V=V, E=E, H=H, Ep=Ep, Hp=Hp, Vp=Vp, Kext=Kext, tile_v=tile_v,
                  splits=splits, tiles_per_split=n_tiles // splits, vmem_cap=vmem_cap),
    )


def prepare_encoder(prepped, keycode_enc_outputs):
    """(S, B, H) seq-major encoder outputs -> padded batch-major (Bp, Sp, Hp).
    Done once per source sequence; reused by every decode step."""
    d = prepped["dims"]
    S, B, H = keycode_enc_outputs.shape
    Bp, Sp = _round_up(B, 8), _round_up(S, 8)
    enc = jnp.zeros((Bp, Sp, d["Hp"]), jnp.float32).at[:B, :S, :H].set(
        jnp.transpose(keycode_enc_outputs, (1, 0, 2)).astype(jnp.float32))
    return dict(enc=enc, seq_len=S)


# --------------------------------------------------------------------------- #
# Per-step wrapper
# --------------------------------------------------------------------------- #
def decoder_step(prepped, enc_prepped, inputs, last_hidden):
    """One Decoder.forward step: returns (log_probs (B, V), hidden (1, B, H))."""
    d = prepped["dims"]
    V, H, Hp, Ep = d["V"], d["H"], d["Hp"], d["Ep"]
    Vp, tile_v, Kext = d["Vp"], d["tile_v"], d["Kext"]
    splits, tps = d["splits"], d["tiles_per_split"]
    enc = enc_prepped["enc"]
    Bp, Sp, _ = enc.shape
    B = inputs.shape[0]

    # per-step glue: embedding gather + padding of the tiny per-step tensors
    ids = jnp.zeros((Bp,), jnp.int32).at[:B].set(inputs.astype(jnp.int32))
    x = jnp.take(prepped["embedding"], ids, axis=0)                                   # (Bp, Ep)
    h = jnp.zeros((Bp, Hp), jnp.float32).at[:B, :H].set(last_hidden[0].astype(jnp.float32))

    const2 = lambda c, j: (0, 0)
    const3 = lambda c, j: (0, 0, 0)
    wlin_bufs = 3 if tps >= 3 else None          # deep-buffer the streamed weight when useful
    in_specs = [
        _spec((Bp, Ep), const2, 1),              # x            (resident, single-buffered)
        _spec((Bp, Hp), const2, 1),              # h
        _spec((Bp, Sp, Hp), const3, 1),          # enc
        _spec((Hp, Hp), const2, 1),              # wa_h
        _spec((Hp, Hp), const2, 1),              # wa_e
        _spec((1, Hp), const2, 1),               # wa_b
        _spec((1, Hp), const2, 1),               # va
        _spec((Ep + Hp, 3 * Hp), const2, 1),     # wih (fused)
        _spec((Hp, 3 * Hp), const2, 1),          # whh
        _spec((1, 3 * Hp), const2, 1),           # bih
        _spec((1, 3 * Hp), const2, 1),           # bhh
        _spec((Kext, tile_v), lambda c, j: (0, c * tps + j), wlin_bufs),  # wlin (streamed bf16)
    ]
    out_specs = (
        pl.BlockSpec((Bp, tile_v), lambda c, j: (0, c * tps + j)),  # raw logits tiles
        pl.BlockSpec((1, Bp, 128), lambda c, j: (c, 0, 0)),         # per-core partial lse
        pl.BlockSpec((1, Bp, Hp), lambda c, j: (c, 0, 0)),          # h_new (per-core copy)
    )
    out_shape = (
        jax.ShapeDtypeStruct((Bp, Vp), jnp.float32),
        jax.ShapeDtypeStruct((splits, Bp, 128), jnp.float32),
        jax.ShapeDtypeStruct((splits, Bp, Hp), jnp.float32),
    )
    scratch_shapes = [
        pltpu.VMEM((Bp, Kext), jnp.bfloat16),    # [h_new | context | 1] MXU operand
        pltpu.VMEM((Bp, 128), jnp.float32),      # running max (lane-dense)
        pltpu.VMEM((Bp, 128), jnp.float32),      # running sum (lane-dense)
    ]

    # VMEM budget (assume worst-case double-buffered residents), clamped to the chip.
    resident = 4 * (Bp * Ep + Bp * Hp + Bp * Sp * Hp + 2 * Hp * Hp + 2 * Hp
                    + (Ep + Hp) * 3 * Hp + Hp * 3 * Hp + 2 * 3 * Hp)
    streamed = ((wlin_bufs or 2) * Kext * tile_v * 2
                + 2 * Bp * tile_v * 4 + 2 * Bp * (128 + Hp) * 4)
    scratch = Bp * Kext * 2 + 2 * Bp * 128 * 4
    need = 2 * resident + streamed + scratch
    vmem_limit = int(min(int(0.85 * d["vmem_cap"]), max(2 * need, 16 << 20)))

    flops = (2 * Bp * Kext * Vp + 2 * Bp * Sp * Hp * Hp + 2 * Bp * Hp * Hp
             + 2 * Bp * (Ep + Hp) * 3 * Hp + 2 * Bp * Hp * 3 * Hp + 2 * Bp * Sp * Hp)
    bytes_accessed = (2 * Kext * Vp + resident
                      + 4 * (Bp * Vp + splits * Bp * (128 + Hp)))
    cost = pl.CostEstimate(flops=int(flops),
                           transcendentals=int(Bp * (Sp + 3 * Hp + Vp)),
                           bytes_accessed=int(bytes_accessed))

    kernel = functools.partial(decoder_step_kernel, seq_len=enc_prepped["seq_len"])
    logits, lse, h_new = pl.pallas_call(
        kernel,
        out_shape=out_shape,
        grid_spec=pltpu.PrefetchScalarGridSpec(
            num_scalar_prefetch=0,
            grid=(splits, tps),
            in_specs=in_specs,
            out_specs=out_specs,
            scratch_shapes=scratch_shapes,
        ),
        compiler_params=pltpu.CompilerParams(
            dimension_semantics=("parallel", "arbitrary"),
            vmem_limit_bytes=vmem_limit,
        ),
        cost_estimate=cost,
    )(x, h, enc,
      prepped["wa_h"], prepped["wa_e"], prepped["wa_b"], prepped["va"],
      prepped["wih"], prepped["whh"], prepped["bih"], prepped["bhh"],
      prepped["wlin"])

    # Combine per-core partial logsumexps and normalize: one cheap (B, V) pass; the
    # expensive (Kext, V) projection was fully tiled / pipelined inside the kernel.
    lse_parts = lse[:, :B, :1]                                     # (splits, B, 1)
    m = jnp.max(lse_parts, axis=0)
    lse_tot = m + jnp.log(jnp.sum(jnp.exp(lse_parts - m), axis=0))
    logp = logits[:B, :V] - lse_tot
    hidden = h_new[0, :B, :H][None]
    return logp, hidden


def decoder_forward(inputs, last_hidden, keycode_enc_outputs, params, *, tile_v=None):
    """Signature-compatible convenience wrapper (preprocesses weights per call).
    In a real decode loop, call prepare_params/prepare_encoder once instead."""
    prepped = prepare_params(params, tile_v=tile_v)
    enc_prepped = prepare_encoder(prepped, keycode_enc_outputs)
    return decoder_step(prepped, enc_prepped, inputs, last_hidden)


# --------------------------------------------------------------------------- #
# Pure-JAX reference + synthetic init (for the correctness check)
# --------------------------------------------------------------------------- #
def decoder_forward_ref(inputs, last_hidden, keycode_enc_outputs, params):
    emb_tbl = params["embedding"]
    S, B, H = keycode_enc_outputs.shape
    x = jnp.take(emb_tbl, inputs, axis=0)
    h = last_hidden[0]
    enc = jnp.transpose(keycode_enc_outputs, (1, 0, 2))

    cat = jnp.concatenate([jnp.broadcast_to(h[:, None, :], (B, S, H)), enc], axis=-1)
    energies = jax.nn.relu(cat @ params["wa_w"].T + params["wa_b"])
    scores = jnp.einsum("bso,o->bs", energies, params["va"])
    att = jax.nn.softmax(scores, axis=-1)
    context = jnp.einsum("bs,bsh->bh", att, enc)

    x_cat = jnp.concatenate([x, context], axis=-1)
    gi = x_cat @ params["w_ih"].T + params["b_ih"]
    gh = h @ params["w_hh"].T + params["b_hh"]
    r = jax.nn.sigmoid(gi[:, :H] + gh[:, :H])
    z = jax.nn.sigmoid(gi[:, H:2 * H] + gh[:, H:2 * H])
    n = jnp.tanh(gi[:, 2 * H:] + r * gh[:, 2 * H:])
    h_new = (1.0 - z) * n + z * h

    logits = jnp.concatenate([h_new, context], axis=-1) @ params["w_lin"].T + params["b_lin"]
    return jax.nn.log_softmax(logits, axis=1), h_new[None]


def init_params(key, vocab, emb_dim, hidden):
    ks = jax.random.split(key, 8)
    init_std = 1e-4
    H, E, V = hidden, emb_dim, vocab
    return {
        "embedding": init_std * jax.random.normal(ks[0], (V, E), jnp.float32),
        "wa_w": (1.0 / math.sqrt(2 * H)) * jax.random.normal(ks[1], (H, 2 * H), jnp.float32),
        "wa_b": (1.0 / math.sqrt(2 * H)) * jax.random.normal(ks[2], (H,), jnp.float32),
        "va": (1.0 / math.sqrt(H)) * jax.random.normal(ks[3], (H,), jnp.float32),
        "w_ih": jax.random.uniform(ks[4], (3 * H, E + H), jnp.float32, -0.02, 0.02),
        "w_hh": jax.random.uniform(ks[5], (3 * H, H), jnp.float32, -0.02, 0.02),
        "b_ih": jnp.zeros((3 * H,), jnp.float32).at[(3 * H) // 4:(3 * H) // 2].set(1.0),
        "b_hh": jnp.zeros((3 * H,), jnp.float32).at[(3 * H) // 4:(3 * H) // 2].set(1.0),
        "w_lin": init_std * jax.random.normal(ks[6], (V, 2 * H), jnp.float32),
        "b_lin": init_std * jax.random.normal(ks[7], (V,), jnp.float32),
    }


if __name__ == "__main__":
    # batch, src seq len, decoder_hdn_size, embedding_dim, tgt vocab
    # (V chosen so the default tile policy yields a multi-tile, 2-way-split grid.)
    B, S, H, E, V = 6, 10, 32, 32, 5000

    key = jax.random.PRNGKey(0)
    kp, ki, kh, ke = jax.random.split(key, 4)
    params = init_params(kp, V, E, H)

    inputs = jax.random.randint(ki, (B,), 0, V, dtype=jnp.int32)              # (B,)
    last_hidden = jax.random.normal(kh, (1, B, H), jnp.float32)               # (1, B, H)
    keycode_enc_outputs = jax.random.normal(ke, (S, B, H), jnp.float32)       # (S, B, H)

    # Hoisted preprocessing (once per model / per sequence), then the per-step kernel.
    prepped = prepare_params(params)                  # auto tile_v (>=1024) + 2-way vocab split
    enc_prepped = prepare_encoder(prepped, keycode_enc_outputs)
    step = jax.jit(functools.partial(decoder_step, prepped, enc_prepped))

    logp, hidden = step(inputs, last_hidden)
    jax.block_until_ready((logp, hidden))

    logp_ref, hidden_ref = decoder_forward_ref(inputs, last_hidden, keycode_enc_outputs, params)
    assert logp.shape == (B, V) and hidden.shape == (1, B, H)
    # bf16 wlin storage + EUP approx reciprocal in the attention softmax => tolerances
    # slightly looser than pure-f32 but still tight.
    assert jnp.allclose(logp, logp_ref, atol=2e-4, rtol=2e-4), \
        float(jnp.max(jnp.abs(logp - logp_ref)))
    assert jnp.allclose(hidden, hidden_ref, atol=5e-4, rtol=1e-3), \
        float(jnp.max(jnp.abs(hidden - hidden_ref)))

    print("KERNEL_OK")
</pallas_src>

<mosaic_0001>
module attributes {stable_mosaic.version = 11 : i64} {
  func.func @decoder_step_kernel(%arg0: i32, %arg1: i32, %arg2: memref<8x128xf32, #tpu.memory_space<vmem>>, %arg3: memref<8x128xf32, #tpu.memory_space<vmem>>, %arg4: memref<8x16x128xf32, #tpu.memory_space<vmem>>, %arg5: memref<128x128xf32, #tpu.memory_space<vmem>>, %arg6: memref<128x128xf32, #tpu.memory_space<vmem>>, %arg7: memref<1x128xf32, #tpu.memory_space<vmem>>, %arg8: memref<1x128xf32, #tpu.memory_space<vmem>>, %arg9: memref<256x384xf32, #tpu.memory_space<vmem>>, %arg10: memref<128x384xf32, #tpu.memory_space<vmem>>, %arg11: memref<1x384xf32, #tpu.memory_space<vmem>>, %arg12: memref<1x384xf32, #tpu.memory_space<vmem>>, %arg13: memref<272x2048xbf16, #tpu.memory_space<vmem>>, %arg14: memref<8x2048xf32, #tpu.memory_space<vmem>>, %arg15: memref<1x8x128xf32, #tpu.memory_space<vmem>>, %arg16: memref<1x8x128xf32, #tpu.memory_space<vmem>>, %arg17: memref<8x272xbf16, #tpu.memory_space<vmem>>, %arg18: memref<8x128xf32, #tpu.memory_space<vmem>>, %arg19: memref<8x128xf32, #tpu.memory_space<vmem>>) attributes {dimension_semantics = [#tpu.dimension_semantics<parallel>, #tpu.dimension_semantics<arbitrary>], iteration_bounds = array<i64: 2, 2>, scalar_prefetch = 0 : i64, scratch_operands = 3 : i64, tpu.core_type = #tpu.core_type<tc>, window_params = [{pipeline_mode = #tpu.pipeline_mode<synchronous>, transform_indices = @transform_0, window_bounds = array<i64: 8, 128>}, {pipeline_mode = #tpu.pipeline_mode<synchronous>, transform_indices = @transform_1, window_bounds = array<i64: 8, 128>}, {pipeline_mode = #tpu.pipeline_mode<synchronous>, transform_indices = @transform_2, window_bounds = array<i64: 8, 16, 128>}, {pipeline_mode = #tpu.pipeline_mode<synchronous>, transform_indices = @transform_3, window_bounds = array<i64: 128, 128>}, {pipeline_mode = #tpu.pipeline_mode<synchronous>, transform_indices = @transform_4, window_bounds = array<i64: 128, 128>}, {pipeline_mode = #tpu.pipeline_mode<synchronous>, transform_indices = @transform_5, window_bounds = array<i64: 1, 128>}, {pipeline_mode = #tpu.pipeline_mode<synchronous>, transform_indices = @transform_6, window_bounds = array<i64: 1, 128>}, {pipeline_mode = #tpu.pipeline_mode<synchronous>, transform_indices = @transform_7, window_bounds = array<i64: 256, 384>}, {pipeline_mode = #tpu.pipeline_mode<synchronous>, transform_indices = @transform_8, window_bounds = array<i64: 128, 384>}, {pipeline_mode = #tpu.pipeline_mode<synchronous>, transform_indices = @transform_9, window_bounds = array<i64: 1, 384>}, {pipeline_mode = #tpu.pipeline_mode<synchronous>, transform_indices = @transform_10, window_bounds = array<i64: 1, 384>}, {transform_indices = @transform_11, window_bounds = array<i64: 272, 2048>}, {transform_indices = @transform_12, window_bounds = array<i64: 8, 2048>}, {transform_indices = @transform_13, window_bounds = array<i64: 1, 8, 128>}, {transform_indices = @transform_14, window_bounds = array<i64: 1, 8, 128>}]} {
    %c0_i32 = arith.constant 0 : i32
    %0 = arith.cmpi eq, %arg1, %c0_i32 : i32
    %1 = arith.extui %0 : i1 to i32
    %c0_i32_0 = arith.constant 0 : i32
    %2 = arith.cmpi ne, %1, %c0_i32_0 : i32
    scf.if %2 {
      %c0_17 = arith.constant 0 : index
      %c0_18 = arith.constant 0 : index
      %29 = vector.load %arg3[%c0_17, %c0_18] : memref<8x128xf32, #tpu.memory_space<vmem>>, vector<8x128xf32>
      %c0_19 = arith.constant 0 : index
      %c0_20 = arith.constant 0 : index
      %c0_21 = arith.constant 0 : index
      %30 = vector.load %arg4[%c0_19, %c0_20, %c0_21] : memref<8x16x128xf32, #tpu.memory_space<vmem>>, vector<8x16x128xf32>
      %c0_22 = arith.constant 0 : index
      %c0_23 = arith.constant 0 : index
      %31 = vector.load %arg5[%c0_22, %c0_23] : memref<128x128xf32, #tpu.memory_space<vmem>>, vector<128x128xf32>
      %cst_24 = arith.constant dense<0.000000e+00> : vector<8x128xf32>
      %32 = tpu.matmul %29, %31, %cst_24 {dimension_numbers = #tpu.dot_dimension_numbers<[1], [0], [0], [1], [0, 0, 1, 1], [], []>} : vector<8x128xf32>, vector<128x128xf32>, vector<8x128xf32> -> vector<8x128xf32>
      %33 = vector.shape_cast %30 : vector<8x16x128xf32> to vector<128x128xf32>
      %c0_25 = arith.constant 0 : index
      %c0_26 = arith.constant 0 : index
      %34 = vector.load %arg6[%c0_25, %c0_26] : memref<128x128xf32, #tpu.memory_space<vmem>>, vector<128x128xf32>
      %cst_27 = arith.constant dense<0.000000e+00> : vector<128x128xf32>
      %35 = tpu.matmul %33, %34, %cst_27 {dimension_numbers = #tpu.dot_dimension_numbers<[1], [0], [0], [1], [0, 0, 1, 1], [], []>} : vector<128x128xf32>, vector<128x128xf32>, vector<128x128xf32> -> vector<128x128xf32>
      %36 = vector.shape_cast %35 : vector<128x128xf32> to vector<8x16x128xf32>
      %37 = vector.shape_cast %32 : vector<8x128xf32> to vector<8x1x128xf32>
      %38 = vector.broadcast %37 : vector<8x1x128xf32> to vector<8x16x128xf32>
      %39 = arith.addf %36, %38 : vector<8x16x128xf32>
      %c0_28 = arith.constant 0 : index
      %c0_29 = arith.constant 0 : index
      %40 = vector.load %arg7[%c0_28, %c0_29] : memref<1x128xf32, #tpu.memory_space<vmem>>, vector<1x128xf32>
      %41 = vector.shape_cast %40 : vector<1x128xf32> to vector<1x1x128xf32>
      %42 = vector.broadcast %41 : vector<1x1x128xf32> to vector<8x16x128xf32>
      %43 = arith.addf %39, %42 : vector<8x16x128xf32>
      %cst_30 = arith.constant 0.000000e+00 : f32
      %44 = vector.broadcast %cst_30 : f32 to vector<8x16x128xf32>
      %45 = arith.maximumf %43, %44 : vector<8x16x128xf32>
      %c0_31 = arith.constant 0 : index
      %c0_32 = arith.constant 0 : index
      %46 = vector.load %arg8[%c0_31, %c0_32] : memref<1x128xf32, #tpu.memory_space<vmem>>, vector<1x128xf32>
      %47 = vector.shape_cast %46 : vector<1x128xf32> to vector<1x1x128xf32>
      %48 = vector.broadcast %47 : vector<1x1x128xf32> to vector<8x16x128xf32>
      %49 = arith.mulf %45, %48 : vector<8x16x128xf32>
      %cst_33 = arith.constant dense<0.000000e+00> : vector<8x16xf32>
      %50 = vector.multi_reduction <add>, %49, %cst_33 [2] : vector<8x16x128xf32> to vector<8x16xf32>
      %51 = tpu.iota {dimensions = array<i32: 1>} : vector<8x16xi32>
      %c10_i32 = arith.constant 10 : i32
      %52 = vector.broadcast %c10_i32 : i32 to vector<8x16xi32>
      %53 = arith.cmpi slt, %51, %52 : vector<8x16xi32>
      %cst_34 = arith.constant -1.000000e+30 : f32
      %54 = vector.broadcast %cst_34 : f32 to vector<8x16xf32>
      %55 = arith.select %53, %50, %54 : vector<8x16xi1>, vector<8x16xf32>
      %cst_35 = arith.constant dense<0xFF800000> : vector<8xf32>
      %56 = vector.multi_reduction <maximumf>, %55, %cst_35 [1] : vector<8x16xf32> to vector<8xf32>
      %57 = vector.shape_cast %56 : vector<8xf32> to vector<8x1xf32>
      %58 = vector.broadcast %57 : vector<8x1xf32> to vector<8x16xf32>
      %59 = arith.subf %55, %58 : vector<8x16xf32>
      %60 = math.exp %59 : vector<8x16xf32>
      %cst_36 = arith.constant dense<0.000000e+00> : vector<8xf32>
      %61 = vector.multi_reduction <add>, %60, %cst_36 [1] : vector<8x16xf32> to vector<8xf32>
      %62 = vector.shape_cast %61 : vector<8xf32> to vector<8x1xf32>
      %63 = tpu.reciprocal %62 {approx = true} : vector<8x1xf32> -> vector<8x1xf32>
      %64 = vector.broadcast %63 : vector<8x1xf32> to vector<8x16xf32>
      %65 = arith.mulf %60, %64 : vector<8x16xf32>
      %66 = vector.shape_cast %65 : vector<8x16xf32> to vector<8x16x1xf32>
      %67 = vector.broadcast %66 : vector<8x16x1xf32> to vector<8x16x128xf32>
      %68 = arith.mulf %67, %30 : vector<8x16x128xf32>
      %cst_37 = arith.constant dense<0.000000e+00> : vector<8x128xf32>
      %69 = vector.multi_reduction <add>, %68, %cst_37 [1] : vector<8x16x128xf32> to vector<8x128xf32>
      %c0_38 = arith.constant 0 : index
      %c0_39 = arith.constant 0 : index
      %70 = vector.load %arg2[%c0_38, %c0_39] : memref<8x128xf32, #tpu.memory_space<vmem>>, vector<8x128xf32>
      %71 = tpu.concatenate %70, %69 in 1 : vector<8x128xf32>, vector<8x128xf32> -> vector<8x256xf32>
      %c0_40 = arith.constant 0 : index
      %c0_41 = arith.constant 0 : index
      %72 = vector.load %arg9[%c0_40, %c0_41] : memref<256x384xf32, #tpu.memory_space<vmem>>, vector<256x384xf32>
      %cst_42 = arith.constant dense<0.000000e+00> : vector<8x384xf32>
      %73 = tpu.matmul %71, %72, %cst_42 {dimension_numbers = #tpu.dot_dimension_numbers<[1], [0], [0], [1], [0, 0, 1, 1], [], []>} : vector<8x256xf32>, vector<256x384xf32>, vector<8x384xf32> -> vector<8x384xf32>
      %c0_43 = arith.constant 0 : index
      %c0_44 = arith.constant 0 : index
      %74 = vector.load %arg11[%c0_43, %c0_44] : memref<1x384xf32, #tpu.memory_space<vmem>>, vector<1x384xf32>
      %75 = vector.broadcast %74 : vector<1x384xf32> to vector<8x384xf32>
      %76 = arith.addf %73, %75 : vector<8x384xf32>
      %c0_45 = arith.constant 0 : index
      %c0_46 = arith.constant 0 : index
      %77 = vector.load %arg10[%c0_45, %c0_46] : memref<128x384xf32, #tpu.memory_space<vmem>>, vector<128x384xf32>
      %cst_47 = arith.constant dense<0.000000e+00> : vector<8x384xf32>
      %78 = tpu.matmul %29, %77, %cst_47 {dimension_numbers = #tpu.dot_dimension_numbers<[1], [0], [0], [1], [0, 0, 1, 1], [], []>} : vector<8x128xf32>, vector<128x384xf32>, vector<8x384xf32> -> vector<8x384xf32>
      %c0_48 = arith.constant 0 : index
      %c0_49 = arith.constant 0 : index
      %79 = vector.load %arg12[%c0_48, %c0_49] : memref<1x384xf32, #tpu.memory_space<vmem>>, vector<1x384xf32>
      %80 = vector.broadcast %79 : vector<1x384xf32> to vector<8x384xf32>
      %81 = arith.addf %78, %80 : vector<8x384xf32>
      %82 = vector.extract_strided_slice %76 {offsets = [0, 0], sizes = [8, 128], strides = [1, 1]} : vector<8x384xf32> to vector<8x128xf32>
      %83 = vector.extract_strided_slice %81 {offsets = [0, 0], sizes = [8, 128], strides = [1, 1]} : vector<8x384xf32> to vector<8x128xf32>
      %84 = arith.addf %82, %83 : vector<8x128xf32>
      %85 = arith.negf %84 : vector<8x128xf32>
      %86 = math.exp %85 : vector<8x128xf32>
      %cst_50 = arith.constant 1.000000e+00 : f32
      %87 = vector.broadcast %cst_50 : f32 to vector<8x128xf32>
      %88 = arith.addf %87, %86 : vector<8x128xf32>
      %89 = arith.divf %87, %88 : vector<8x128xf32>
      %90 = vector.extract_strided_slice %76 {offsets = [0, 128], sizes = [8, 128], strides = [1, 1]} : vector<8x384xf32> to vector<8x128xf32>
      %91 = vector.extract_strided_slice %81 {offsets = [0, 128], sizes = [8, 128], strides = [1, 1]} : vector<8x384xf32> to vector<8x128xf32>
      %92 = arith.addf %90, %91 : vector<8x128xf32>
      %93 = arith.negf %92 : vector<8x128xf32>
      %94 = math.exp %93 : vector<8x128xf32>
      %cst_51 = arith.constant 1.000000e+00 : f32
      %95 = vector.broadcast %cst_51 : f32 to vector<8x128xf32>
      %96 = arith.addf %95, %94 : vector<8x128xf32>
      %97 = arith.divf %95, %96 : vector<8x128xf32>
      %98 = vector.extract_strided_slice %76 {offsets = [0, 256], sizes = [8, 128], strides = [1, 1]} : vector<8x384xf32> to vector<8x128xf32>
      %99 = vector.extract_strided_slice %81 {offsets = [0, 256], sizes = [8, 128], strides = [1, 1]} : vector<8x384xf32> to vector<8x128xf32>
      %100 = arith.mulf %89, %99 : vector<8x128xf32>
      %101 = arith.addf %98, %100 : vector<8x128xf32>
      %102 = math.tanh %101 : vector<8x128xf32>
      %cst_52 = arith.constant 1.000000e+00 : f32
      %103 = vector.broadcast %cst_52 : f32 to vector<8x128xf32>
      %104 = arith.subf %103, %97 : vector<8x128xf32>
      %105 = arith.mulf %104, %102 : vector<8x128xf32>
      %106 = arith.mulf %97, %29 : vector<8x128xf32>
      %107 = arith.addf %105, %106 : vector<8x128xf32>
      %108 = arith.truncf %107 : vector<8x128xf32> to vector<8x128xbf16>
      %c0_53 = arith.constant 0 : index
      %c0_54 = arith.constant 0 : index
      %109 = vector.load %arg17[%c0_53, %c0_54] : memref<8x272xbf16, #tpu.memory_space<vmem>>, vector<8x128xbf16>
      tpu.vector_store %arg17[%c0_53, %c0_54], %108 {strides = array<i32>} : memref<8x272xbf16, #tpu.memory_space<vmem>>, vector<8x128xbf16>,
      %110 = arith.truncf %69 : vector<8x128xf32> to vector<8x128xbf16>
      %c0_55 = arith.constant 0 : index
      %c128 = arith.constant 128 : index
      %111 = vector.load %arg17[%c0_55, %c128] : memref<8x272xbf16, #tpu.memory_space<vmem>>, vector<8x128xbf16>
      tpu.vector_store %arg17[%c0_55, %c128], %110 {strides = array<i32>} : memref<8x272xbf16, #tpu.memory_space<vmem>>, vector<8x128xbf16>,
      %112 = tpu.iota {dimensions = array<i32: 1>} : vector<8x16xi32>
      %c0_i32_56 = arith.constant 0 : i32
      %113 = vector.broadcast %c0_i32_56 : i32 to vector<8x16xi32>
      %114 = arith.cmpi eq, %112, %113 : vector<8x16xi32>
      %cst_57 = arith.constant 1.000000e+00 : f32
      %cst_58 = arith.constant 0.000000e+00 : f32
      %115 = vector.broadcast %cst_57 : f32 to vector<8x16xf32>
      %116 = vector.broadcast %cst_58 : f32 to vector<8x16xf32>
      %117 = arith.select %114, %115, %116 : vector<8x16xi1>, vector<8x16xf32>
      %118 = arith.truncf %117 : vector<8x16xf32> to vector<8x16xbf16>
      %c0_59 = arith.constant 0 : index
      %c256 = arith.constant 256 : index
      %119 = vector.load %arg17[%c0_59, %c256] : memref<8x272xbf16, #tpu.memory_space<vmem>>, vector<8x16xbf16>
      tpu.vector_store %arg17[%c0_59, %c256], %118 {strides = array<i32>} : memref<8x272xbf16, #tpu.memory_space<vmem>>, vector<8x16xbf16>,
      %c0_60 = arith.constant 0 : index
      %c0_61 = arith.constant 0 : index
      %c0_62 = arith.constant 0 : index
      %120 = vector.load %arg16[%c0_60, %c0_61, %c0_62] : memref<1x8x128xf32, #tpu.memory_space<vmem>>, vector<1x8x128xf32>
      %121 = vector.shape_cast %120 : vector<1x8x128xf32> to vector<8x128xf32>
      %122 = vector.shape_cast %107 : vector<8x128xf32> to vector<1x8x128xf32>
      tpu.vector_store %arg16[%c0_60, %c0_61, %c0_62], %122 {strides = array<i32>} : memref<1x8x128xf32, #tpu.memory_space<vmem>>, vector<1x8x128xf32>,
      %cst_63 = arith.constant -1.000000e+30 : f32
      %123 = vector.broadcast %cst_63 : f32 to vector<8x128xf32>
      %c0_64 = arith.constant 0 : index
      %c0_65 = arith.constant 0 : index
      %124 = vector.load %arg18[%c0_64, %c0_65] : memref<8x128xf32, #tpu.memory_space<vmem>>, vector<8x128xf32>
      tpu.vector_store %arg18[%c0_64, %c0_65], %123 {strides = array<i32>} : memref<8x128xf32, #tpu.memory_space<vmem>>, vector<8x128xf32>,
      %cst_66 = arith.constant 0.000000e+00 : f32
      %125 = vector.broadcast %cst_66 : f32 to vector<8x128xf32>
      %c0_67 = arith.constant 0 : index
      %c0_68 = arith.constant 0 : index
      %126 = vector.load %arg19[%c0_67, %c0_68] : memref<8x128xf32, #tpu.memory_space<vmem>>, vector<8x128xf32>
      tpu.vector_store %arg19[%c0_67, %c0_68], %125 {strides = array<i32>} : memref<8x128xf32, #tpu.memory_space<vmem>>, vector<8x128xf32>,
    } else {
    }
    %c0 = arith.constant 0 : index
    %c0_1 = arith.constant 0 : index
    %3 = vector.load %arg17[%c0, %c0_1] : memref<8x272xbf16, #tpu.memory_space<vmem>>, vector<8x272xbf16>
    %c0_2 = arith.constant 0 : index
    %c0_3 = arith.constant 0 : index
    %4 = vector.load %arg13[%c0_2, %c0_3] : memref<272x2048xbf16, #tpu.memory_space<vmem>>, vector<272x2048xbf16>
    %cst = arith.constant dense<0.000000e+00> : vector<8x2048xf32>
    %5 = tpu.matmul %3, %4, %cst {dimension_numbers = #tpu.dot_dimension_numbers<[1], [0], [0], [1], [0, 0, 1, 1], [], []>} : vector<8x272xbf16>, vector<272x2048xbf16>, vector<8x2048xf32> -> vector<8x2048xf32>
    %c0_4 = arith.constant 0 : index
    %c0_5 = arith.constant 0 : index
    %6 = vector.load %arg14[%c0_4, %c0_5] : memref<8x2048xf32, #tpu.memory_space<vmem>>, vector<8x2048xf32>
    tpu.vector_store %arg14[%c0_4, %c0_5], %5 {strides = array<i32>} : memref<8x2048xf32, #tpu.memory_space<vmem>>, vector<8x2048xf32>,
    %c0_6 = arith.constant 0 : index
    %c0_7 = arith.constant 0 : index
    %7 = vector.load %arg18[%c0_6, %c0_7] : memref<8x128xf32, #tpu.memory_space<vmem>>, vector<8x128xf32>
    %cst_8 = arith.constant dense<0xFF800000> : vector<8xf32>
    %8 = vector.multi_reduction <maximumf>, %5, %cst_8 [1] : vector<8x2048xf32> to vector<8xf32>
    %9 = vector.shape_cast %8 : vector<8xf32> to vector<8x1xf32>
    %10 = vector.broadcast %9 : vector<8x1xf32> to vector<8x128xf32>
    %11 = arith.maximumf %7, %10 : vector<8x128xf32>
    %12 = vector.extract_strided_slice %11 {offsets = [0, 0], sizes = [8, 1], strides = [1, 1]} : vector<8x128xf32> to vector<8x1xf32>
    %13 = vector.broadcast %12 : vector<8x1xf32> to vector<8x2048xf32>
    %14 = arith.subf %5, %13 : vector<8x2048xf32>
    %15 = math.exp %14 : vector<8x2048xf32>
    %cst_9 = arith.constant dense<0.000000e+00> : vector<8xf32>
    %16 = vector.multi_reduction <add>, %15, %cst_9 [1] : vector<8x2048xf32> to vector<8xf32>
    %17 = vector.shape_cast %16 : vector<8xf32> to vector<8x1xf32>
    %c0_10 = arith.constant 0 : index
    %c0_11 = arith.constant 0 : index
    %18 = vector.load %arg19[%c0_10, %c0_11] : memref<8x128xf32, #tpu.memory_space<vmem>>, vector<8x128xf32>
    %19 = arith.subf %7, %11 : vector<8x128xf32>
    %20 = math.exp %19 : vector<8x128xf32>
    %21 = arith.mulf %18, %20 : vector<8x128xf32>
    %22 = vector.broadcast %17 : vector<8x1xf32> to vector<8x128xf32>
    %23 = arith.addf %21, %22 : vector<8x128xf32>
    %c0_12 = arith.constant 0 : index
    %c0_13 = arith.constant 0 : index
    %24 = vector.load %arg19[%c0_12, %c0_13] : memref<8x128xf32, #tpu.memory_space<vmem>>, vector<8x128xf32>
    tpu.vector_store %arg19[%c0_12, %c0_13], %23 {strides = array<i32>} : memref<8x128xf32, #tpu.memory_space<vmem>>, vector<8x128xf32>,
    %c0_14 = arith.constant 0 : index
    %c0_15 = arith.constant 0 : index
    %25 = vector.load %arg18[%c0_14, %c0_15] : memref<8x128xf32, #tpu.memory_space<vmem>>, vector<8x128xf32>
    tpu.vector_store %arg18[%c0_14, %c0_15], %11 {strides = array<i32>} : memref<8x128xf32, #tpu.memory_space<vmem>>, vector<8x128xf32>,
    %c1_i32 = arith.constant 1 : i32
    %26 = arith.cmpi eq, %arg1, %c1_i32 : i32
    %27 = arith.extui %26 : i1 to i32
    %c0_i32_16 = arith.constant 0 : i32
    %28 = arith.cmpi ne, %27, %c0_i32_16 : i32
    scf.if %28 {
      %c0_17 = arith.constant 0 : index
      %c0_18 = arith.constant 0 : index
      %29 = vector.load %arg18[%c0_17, %c0_18] : memref<8x128xf32, #tpu.memory_space<vmem>>, vector<8x128xf32>
      %c0_19 = arith.constant 0 : index
      %c0_20 = arith.constant 0 : index
      %30 = vector.load %arg19[%c0_19, %c0_20] : memref<8x128xf32, #tpu.memory_space<vmem>>, vector<8x128xf32>
      %31 = math.log %30 : vector<8x128xf32>
      %32 = arith.addf %29, %31 : vector<8x128xf32>
      %c0_21 = arith.constant 0 : index
      %c0_22 = arith.constant 0 : index
      %c0_23 = arith.constant 0 : index
      %33 = vector.load %arg15[%c0_21, %c0_22, %c0_23] : memref<1x8x128xf32, #tpu.memory_space<vmem>>, vector<1x8x128xf32>
      %34 = vector.shape_cast %33 : vector<1x8x128xf32> to vector<8x128xf32>
      %35 = vector.shape_cast %32 : vector<8x128xf32> to vector<1x8x128xf32>
      tpu.vector_store %arg15[%c0_21, %c0_22, %c0_23], %35 {strides = array<i32>} : memref<1x8x128xf32, #tpu.memory_space<vmem>>, vector<1x8x128xf32>,
    } else {
    }
    return
  }
  func.func @transform_0(%arg0: i32, %arg1: i32) -> (i32, i32) {
    %c0_i32 = arith.constant 0 : i32
    %c0_i32_0 = arith.constant 0 : i32
    %c0_i32_1 = arith.constant 0 : i32
    return %c0_i32, %c0_i32_0 : i32, i32
  }
  func.func @transform_1(%arg0: i32, %arg1: i32) -> (i32, i32) {
    %c0_i32 = arith.constant 0 : i32
    %c0_i32_0 = arith.constant 0 : i32
    %c0_i32_1 = arith.constant 0 : i32
    return %c0_i32, %c0_i32_0 : i32, i32
  }
  func.func @transform_2(%arg0: i32, %arg1: i32) -> (i32, i32, i32) {
    %c0_i32 = arith.constant 0 : i32
    %c0_i32_0 = arith.constant 0 : i32
    %c0_i32_1 = arith.constant 0 : i32
    %c0_i32_2 = arith.constant 0 : i32
    return %c0_i32, %c0_i32_0, %c0_i32_1 : i32, i32, i32
  }
  func.func @transform_3(%arg0: i32, %arg1: i32) -> (i32, i32) {
    %c0_i32 = arith.constant 0 : i32
    %c0_i32_0 = arith.constant 0 : i32
    %c0_i32_1 = arith.constant 0 : i32
    return %c0_i32, %c0_i32_0 : i32, i32
  }
  func.func @transform_4(%arg0: i32, %arg1: i32) -> (i32, i32) {
    %c0_i32 = arith.constant 0 : i32
    %c0_i32_0 = arith.constant 0 : i32
    %c0_i32_1 = arith.constant 0 : i32
    return %c0_i32, %c0_i32_0 : i32, i32
  }
  func.func @transform_5(%arg0: i32, %arg1: i32) -> (i32, i32) {
    %c0_i32 = arith.constant 0 : i32
    %c0_i32_0 = arith.constant 0 : i32
    %c0_i32_1 = arith.constant 0 : i32
    return %c0_i32, %c0_i32_0 : i32, i32
  }
  func.func @transform_6(%arg0: i32, %arg1: i32) -> (i32, i32) {
    %c0_i32 = arith.constant 0 : i32
    %c0_i32_0 = arith.constant 0 : i32
    %c0_i32_1 = arith.constant 0 : i32
    return %c0_i32, %c0_i32_0 : i32, i32
  }
  func.func @transform_7(%arg0: i32, %arg1: i32) -> (i32, i32) {
    %c0_i32 = arith.constant 0 : i32
    %c0_i32_0 = arith.constant 0 : i32
    %c0_i32_1 = arith.constant 0 : i32
    return %c0_i32, %c0_i32_0 : i32, i32
  }
  func.func @transform_8(%arg0: i32, %arg1: i32) -> (i32, i32) {
    %c0_i32 = arith.constant 0 : i32
    %c0_i32_0 = arith.constant 0 : i32
    %c0_i32_1 = arith.constant 0 : i32
    return %c0_i32, %c0_i32_0 : i32, i32
  }
  func.func @transform_9(%arg0: i32, %arg1: i32) -> (i32, i32) {
    %c0_i32 = arith.constant 0 : i32
    %c0_i32_0 = arith.constant 0 : i32
    %c0_i32_1 = arith.constant 0 : i32
    return %c0_i32, %c0_i32_0 : i32, i32
  }
  func.func @transform_10(%arg0: i32, %arg1: i32) -> (i32, i32) {
    %c0_i32 = arith.constant 0 : i32
    %c0_i32_0 = arith.constant 0 : i32
    %c0_i32_1 = arith.constant 0 : i32
    return %c0_i32, %c0_i32_0 : i32, i32
  }
  func.func @transform_11(%arg0: i32, %arg1: i32) -> (i32, i32) {
    %c2_i32 = arith.constant 2 : i32
    %0 = arith.muli %arg0, %c2_i32 : i32
    %1 = arith.addi %0, %arg1 : i32
    %c0_i32 = arith.constant 0 : i32
    %c0_i32_0 = arith.constant 0 : i32
    return %c0_i32, %1 : i32, i32
  }
  func.func @transform_12(%arg0: i32, %arg1: i32) -> (i32, i32) {
    %c2_i32 = arith.constant 2 : i32
    %0 = arith.muli %arg0, %c2_i32 : i32
    %1 = arith.addi %0, %arg1 : i32
    %c0_i32 = arith.constant 0 : i32
    %c0_i32_0 = arith.constant 0 : i32
    return %c0_i32, %1 : i32, i32
  }
  func.func @transform_13(%arg0: i32, %arg1: i32) -> (i32, i32, i32) {
    %c0_i32 = arith.constant 0 : i32
    %c0_i32_0 = arith.constant 0 : i32
    %c0_i32_1 = arith.constant 0 : i32
    return %arg0, %c0_i32, %c0_i32_0 : i32, i32, i32
  }
  func.func @transform_14(%arg0: i32, %arg1: i32) -> (i32, i32, i32) {
    %c0_i32 = arith.constant 0 : i32
    %c0_i32_0 = arith.constant 0 : i32
    %c0_i32_1 = arith.constant 0 : i32
    return %arg0, %c0_i32, %c0_i32_0 : i32, i32, i32
  }
}

</mosaic_0001>

<llo_original>
// kernel: decoder_step.1
$region0: #{decoder_step.1}
  #allocation0 [shape = 'u32[]', space=smem, size = 0x4, offset = 0x4, fixed_abs, tag = 'smem constant byte address 0x4 - core index']
  #allocation1 [shape = 'u32[144,128]{1,0:T(1,128)}', space=vmem, size = 0x12000, scoped, tag = 'internal scratch']
  #allocation2 [shape = 'bf16[8,272]{1,0:T(8,128)(2,1)}', space=vmem, size = 0x1800, scoped, tag = 'scratch operand']
  #allocation3 [shape = 'f32[8,128]{1,0:T(8,128)}', space=vmem, size = 0x1000, scoped, tag = 'scratch operand']
  #allocation4 [shape = 'f32[8,128]{1,0:T(8,128)}', space=vmem, size = 0x1000, scoped, tag = 'scratch operand']
  %s0 = inlined_call_operand.vmem [shape: f32[8,128], index: 0, kind: input, shape index: {}]
  %s1 = inlined_call_operand.vmem [shape: f32[8,128], index: 1, kind: input, shape index: {}]
  %s2 = inlined_call_operand.hbm [shape: f32[8,16,128], index: 2, kind: input, shape index: {}]
  %s3 = inlined_call_operand.hbm [shape: f32[128,128], index: 3, kind: input, shape index: {}]
  %s4 = inlined_call_operand.hbm [shape: f32[128,128], index: 4, kind: input, shape index: {}]
  %s5 = inlined_call_operand.hbm [shape: f32[1,128], index: 5, kind: input, shape index: {}]
  %s6 = inlined_call_operand.hbm [shape: f32[1,128], index: 6, kind: input, shape index: {}]
  %s7 = inlined_call_operand.hbm [shape: f32[256,384], index: 7, kind: input, shape index: {}]
  %s8 = inlined_call_operand.hbm [shape: f32[128,384], index: 8, kind: input, shape index: {}]
  %s9 = inlined_call_operand.hbm [shape: f32[1,384], index: 9, kind: input, shape index: {}, may-alias: {9,10}]
  %s10 = inlined_call_operand.hbm [shape: f32[1,384], index: 10, kind: input, shape index: {}, may-alias: {9,10}]
  %s11 = inlined_call_operand.hbm [shape: bf16[272,8192], index: 11, kind: input, shape index: {}]
  %s12 = inlined_call_operand.vmem [shape: f32[8,8192], index: 12, kind: output, shape index: {0}]
  %s13 = inlined_call_operand.vmem [shape: f32[2,8,128], index: 13, kind: output, shape index: {1}]
  %s14 = inlined_call_operand.vmem [shape: f32[2,8,128], index: 14, kind: output, shape index: {2}]
  %15 = xla_tuple %s12, %s13, %s14
  %s16 = sld [smem:[#allocation0]]
  $region145: #{decoder_step.1} parent=0
    _
  %s18 = ssub.s32 1, %s16
  %s19 = scalar_select 0, %s18, %s16
  $region1: #{decoder_step.1} parent=0
    #allocation5 [shape = 'u8[65536]{0}', space=vmem, size = 0x10000, scoped, tag = 'input window, operand 2, single buffered']
    #allocation6 [shape = 's32[2]{0}', space=sflag, size = 0x8, scoped, tag = 'scoped memory for decoder_step.1']
    #allocation7 [shape = 'u8[65536]{0}', space=vmem, size = 0x10000, scoped, tag = 'input window, operand 3, single buffered']
    #allocation8 [shape = 's32[1]{0}', space=sflag, size = 0x4, scoped, tag = 'scoped memory for decoder_step.1']
    #allocation9 [shape = 'u8[65536]{0}', space=vmem, size = 0x10000, scoped, tag = 'input window, operand 4, single buffered']
    #allocation10 [shape = 'u8[512]{0}', space=vmem, size = 0x400, scoped, tag = 'input window, operand 5, single buffered']
    #allocation11 [shape = 's32[1]{0}', space=sflag, size = 0x4, scoped, tag = 'scoped memory for decoder_step.1']
    #allocation12 [shape = 'u8[512]{0}', space=vmem, size = 0x400, scoped, tag = 'input window, operand 6, single buffered']
    #allocation13 [shape = 'u8[393216]{0}', space=vmem, size = 0x60000, scoped, tag = 'input window, operand 7, single buffered']
    #allocation14 [shape = 's32[1]{0}', space=sflag, size = 0x4, scoped, tag = 'scoped memory for decoder_step.1']
    #allocation15 [shape = 'u8[196608]{0}', space=vmem, size = 0x30000, scoped, tag = 'input window, operand 8, single buffered']
    #allocation16 [shape = 'u8[1536]{0}', space=vmem, size = 0x800, scoped, tag = 'input window, operand 9, single buffered']
    #allocation17 [shape = 's32[1]{0}', space=sflag, size = 0x4, scoped, tag = 'scoped memory for decoder_step.1']
    #allocation18 [shape = 'u8[1536]{0}', space=vmem, size = 0x800, scoped, tag = 'input window, operand 10, single buffered']
    #allocation19 [shape = 'u8[2228224]{0}', space=vmem, size = 0x220000, scoped, tag = 'input window, operand 11']
    #allocation20 [shape = 's32[2]{0}', space=sflag, size = 0x8, scoped, tag = 'scoped memory for decoder_step.1']
    %20 = vsyncpa [#allocation6], 0
    %21 = vsyncpa [#allocation8], 0
    %22 = vsyncpa [#allocation11], 0
    %23 = vsyncpa [#allocation14], 0
    %24 = vsyncpa [#allocation17], 0
    %25 = vsyncpa [#allocation20], 0
    %s26 = scalar_lea.sflag [#allocation20], 1
    %27 = vsyncpa %s26, 0
    loop: start=0, step=1, limit=6
    $region2: #{decoder_step.1} parent=1 // loop_pre_header
      _
    $region3: #{decoder_step.1} parent=1 // loop_header
      %s29 = sphi 0, %s33
      %p30 = scmp.ge.s32.totalorder %s29, 6
      %s36 = sphi 0, %s48
      %s37 = sphi 0, %s44
      %s38 = sphi 0, %s36
      %s39 = sphi 0, %s37
      %s40 = sphi 0, %s38
      %s41 = sphi 0, %s39
      %s49 = sphi 0, %s49
      %s51 = sphi 0, %s49
      %s52 = sphi 0, %s51
      %s66 = sphi 0, %s52
      %s70 = sphi 0, %s70
      %s72 = sphi 0, %s70
      %s73 = sphi 0, %s72
      %s87 = sphi 0, %s73
      %s91 = sphi 0, %s91
      %s93 = sphi 0, %s91
      %s94 = sphi 0, %s93
      %s108 = sphi 0, %s94
      %s112 = sphi 0, %s112
      %s114 = sphi 0, %s112
      %s115 = sphi 0, %s114
      %s129 = sphi 0, %s115
      %s133 = sphi 0, %s133
      %s135 = sphi 0, %s133
      %s136 = sphi 0, %s135
      %s150 = sphi 0, %s136
      %s154 = sphi 0, %s154
      %s156 = sphi 0, %s154
      %s157 = sphi 0, %s156
      %s171 = sphi 0, %s157
      %s175 = sphi 0, %s175
      %s177 = sphi 0, %s175
      %s178 = sphi 0, %s177
      %s192 = sphi 0, %s178
      %s196 = sphi 0, %s196
      %s198 = sphi 0, %s196
      %s199 = sphi 0, %s198
      %s213 = sphi 0, %s199
      %s217 = sphi 0, %s217
      %s219 = sphi 0, %s217
      %s220 = sphi 0, %s219
      %s234 = sphi 0, %s220
      %s238 = sphi 0, %s238
      %s240 = sphi 0, %s238
      %s241 = sphi 0, %s240
      %s255 = sphi 0, %s241
      %s259 = sphi 0, %s259
      %s261 = sphi 0, %s259
      %s262 = sphi 0, %s261
      %s276 = sphi 0, %s262
      %s286 = sphi 0, %s288
      %s289 = sphi 0, %s286
      %s290 = sphi 0, %s289
      %s306 = sphi 0, %s290
      %s316 = sphi 0, %s318
      %s319 = sphi 0, %s316
      %s320 = sphi 0, %s319
      %s336 = sphi 0, %s320
      %s342 = sphi 0, %s344
      %s345 = sphi 0, %s342
      %s346 = sphi 0, %s345
      %s362 = sphi 0, %s346
      %s368 = sphi 0, %s370
      %s371 = sphi 0, %s368
      %s372 = sphi 0, %s371
      %s388 = sphi 0, %s372
    $region4: #{decoder_step.1} parent=1 // loop_header_branch
      %32 = sbr.rel (%p30) target = $region8
    $region5: #{decoder_step.1} parent=1 // loop_body
      %s34 = ssub.s32 %s29, 1
      %s35 = ssub.s32 %s29, 2
      %s42 = sadd.s32 1, %s37
      %p43 = scmp.ge.s32.totalorder %s42, 2
      %s44 = scalar_select %p43, 0, %s42
      %s45 = sadd.s32 1, %s36
      %s46 = scalar_select %p43, %s45, %s36
      %p47 = scmp.ge.s32.totalorder %s46, 2
      %s48 = scalar_select %p47, 0, %s46
      %s50 = sadd.s32 %s49, 1
      %p53 = scmp.eq.s32.totalorder %s29, 3
      %p54 = scmp.ne.s32.totalorder %s49, %s51
      %p55 = scmp.eq.s32.totalorder %s29, 0
      %p56 = por %p54, %p55
      %p57 = scmp.ne.s32.totalorder %s49, %s51
      %p58 = scmp.eq.s32.totalorder %s34, 3
      %p59 = por %p57, %p58
      %p60 = scmp.ne.s32.totalorder %s51, %s52
      %p61 = scmp.eq.s32.totalorder %s34, 0
      %p62 = por %p60, %p61
      %p63 = scmp.ne.s32.totalorder %s51, %s52
      %p64 = scmp.eq.s32.totalorder %s35, 3
      %p65 = por %p63, %p64
      %p67 = scmp.ne.s32.totalorder %s52, %s66
      %p68 = scmp.eq.s32.totalorder %s35, 0
      %p69 = por %p67, %p68
      %s71 = sadd.s32 %s70, 1
      %p74 = scmp.eq.s32.totalorder %s29, 3
      %p75 = scmp.ne.s32.totalorder %s70, %s72
      %p76 = scmp.eq.s32.totalorder %s29, 0
      %p77 = por %p75, %p76
      %p78 = scmp.ne.s32.totalorder %s70, %s72
      %p79 = scmp.eq.s32.totalorder %s34, 3
      %p80 = por %p78, %p79
      %p81 = scmp.ne.s32.totalorder %s72, %s73
      %p82 = scmp.eq.s32.totalorder %s34, 0
      %p83 = por %p81, %p82
      %p84 = scmp.ne.s32.totalorder %s72, %s73
      %p85 = scmp.eq.s32.totalorder %s35, 3
      %p86 = por %p84, %p85
      %p88 = scmp.ne.s32.totalorder %s73, %s87
      %p89 = scmp.eq.s32.totalorder %s35, 0
      %p90 = por %p88, %p89
      %s92 = sadd.s32 %s91, 1
      %p95 = scmp.eq.s32.totalorder %s29, 3
      %p96 = scmp.ne.s32.totalorder %s91, %s93
      %p97 = scmp.eq.s32.totalorder %s29, 0
      %p98 = por %p96, %p97
      %p99 = scmp.ne.s32.totalorder %s91, %s93
      %p100 = scmp.eq.s32.totalorder %s34, 3
      %p101 = por %p99, %p100
      %p102 = scmp.ne.s32.totalorder %s93, %s94
      %p103 = scmp.eq.s32.totalorder %s34, 0
      %p104 = por %p102, %p103
      %p105 = scmp.ne.s32.totalorder %s93, %s94
      %p106 = scmp.eq.s32.totalorder %s35, 3
      %p107 = por %p105, %p106
      %p109 = scmp.ne.s32.totalorder %s94, %s108
      %p110 = scmp.eq.s32.totalorder %s35, 0
      %p111 = por %p109, %p110
      %s113 = sadd.s32 %s112, 1
      %p116 = scmp.eq.s32.totalorder %s29, 3
      %p117 = scmp.ne.s32.totalorder %s112, %s114
      %p118 = scmp.eq.s32.totalorder %s29, 0
      %p119 = por %p117, %p118
      %p120 = scmp.ne.s32.totalorder %s112, %s114
      %p121 = scmp.eq.s32.totalorder %s34, 3
      %p122 = por %p120, %p121
      %p123 = scmp.ne.s32.totalorder %s114, %s115
      %p124 = scmp.eq.s32.totalorder %s34, 0
      %p125 = por %p123, %p124
      %p126 = scmp.ne.s32.totalorder %s114, %s115
      %p127 = scmp.eq.s32.totalorder %s35, 3
      %p128 = por %p126, %p127
      %p130 = scmp.ne.s32.totalorder %s115, %s129
      %p131 = scmp.eq.s32.totalorder %s35, 0
      %p132 = por %p130, %p131
      %s134 = sadd.s32 %s133, 1
      %p137 = scmp.eq.s32.totalorder %s29, 3
      %p138 = scmp.ne.s32.totalorder %s133, %s135
      %p139 = scmp.eq.s32.totalorder %s29, 0
      %p140 = por %p138, %p139
      %p141 = scmp.ne.s32.totalorder %s133, %s135
      %p142 = scmp.eq.s32.totalorder %s34, 3
      %p143 = por %p141, %p142
      %p144 = scmp.ne.s32.totalorder %s135, %s136
      %p145 = scmp.eq.s32.totalorder %s34, 0
      %p146 = por %p144, %p145
      %p147 = scmp.ne.s32.totalorder %s135, %s136
      %p148 = scmp.eq.s32.totalorder %s35, 3
      %p149 = por %p147, %p148
      %p151 = scmp.ne.s32.totalorder %s136, %s150
      %p152 = scmp.eq.s32.totalorder %s35, 0
      %p153 = por %p151, %p152
      %s155 = sadd.s32 %s154, 1
      %p158 = scmp.eq.s32.totalorder %s29, 3
      %p159 = scmp.ne.s32.totalorder %s154, %s156
      %p160 = scmp.eq.s32.totalorder %s29, 0
      %p161 = por %p159, %p160
      %p162 = scmp.ne.s32.totalorder %s154, %s156
      %p163 = scmp.eq.s32.totalorder %s34, 3
      %p164 = por %p162, %p163
      %p165 = scmp.ne.s32.totalorder %s156, %s157
      %p166 = scmp.eq.s32.totalorder %s34, 0
      %p167 = por %p165, %p166
      %p168 = scmp.ne.s32.totalorder %s156, %s157
      %p169 = scmp.eq.s32.totalorder %s35, 3
      %p170 = por %p168, %p169
      %p172 = scmp.ne.s32.totalorder %s157, %s171
      %p173 = scmp.eq.s32.totalorder %s35, 0
      %p174 = por %p172, %p173
      %s176 = sadd.s32 %s175, 1
      %p179 = scmp.eq.s32.totalorder %s29, 3
      %p180 = scmp.ne.s32.totalorder %s175, %s177
      %p181 = scmp.eq.s32.totalorder %s29, 0
      %p182 = por %p180, %p181
      %p183 = scmp.ne.s32.totalorder %s175, %s177
      %p184 = scmp.eq.s32.totalorder %s34, 3
      %p185 = por %p183, %p184
      %p186 = scmp.ne.s32.totalorder %s177, %s178
      %p187 = scmp.eq.s32.totalorder %s34, 0
      %p188 = por %p186, %p187
      %p189 = scmp.ne.s32.totalorder %s177, %s178
      %p190 = scmp.eq.s32.totalorder %s35, 3
      %p191 = por %p189, %p190
      %p193 = scmp.ne.s32.totalorder %s178, %s192
      %p194 = scmp.eq.s32.totalorder %s35, 0
      %p195 = por %p193, %p194
      %s197 = sadd.s32 %s196, 1
      %p200 = scmp.eq.s32.totalorder %s29, 3
      %p201 = scmp.ne.s32.totalorder %s196, %s198
      %p202 = scmp.eq.s32.totalorder %s29, 0
      %p203 = por %p201, %p202
      %p204 = scmp.ne.s32.totalorder %s196, %s198
      %p205 = scmp.eq.s32.totalorder %s34, 3
      %p206 = por %p204, %p205
      %p207 = scmp.ne.s32.totalorder %s198, %s199
      %p208 = scmp.eq.s32.totalorder %s34, 0
      %p209 = por %p207, %p208
      %p210 = scmp.ne.s32.totalorder %s198, %s199
      %p211 = scmp.eq.s32.totalorder %s35, 3
      %p212 = por %p210, %p211
      %p214 = scmp.ne.s32.totalorder %s199, %s213
      %p215 = scmp.eq.s32.totalorder %s35, 0
      %p216 = por %p214, %p215
      %s218 = sadd.s32 %s217, 1
      %p221 = scmp.eq.s32.totalorder %s29, 3
      %p222 = scmp.ne.s32.totalorder %s217, %s219
      %p223 = scmp.eq.s32.totalorder %s29, 0
      %p224 = por %p222, %p223
      %p225 = scmp.ne.s32.totalorder %s217, %s219
      %p226 = scmp.eq.s32.totalorder %s34, 3
      %p227 = por %p225, %p226
      %p228 = scmp.ne.s32.totalorder %s219, %s220
      %p229 = scmp.eq.s32.totalorder %s34, 0
      %p230 = por %p228, %p229
      %p231 = scmp.ne.s32.totalorder %s219, %s220
      %p232 = scmp.eq.s32.totalorder %s35, 3
      %p233 = por %p231, %p232
      %p235 = scmp.ne.s32.totalorder %s220, %s234
      %p236 = scmp.eq.s32.totalorder %s35, 0
      %p237 = por %p235, %p236
      %s239 = sadd.s32 %s238, 1
      %p242 = scmp.eq.s32.totalorder %s29, 3
      %p243 = scmp.ne.s32.totalorder %s238, %s240
      %p244 = scmp.eq.s32.totalorder %s29, 0
      %p245 = por %p243, %p244
      %p246 = scmp.ne.s32.totalorder %s238, %s240
      %p247 = scmp.eq.s32.totalorder %s34, 3
      %p248 = por %p246, %p247
      %p249 = scmp.ne.s32.totalorder %s240, %s241
      %p250 = scmp.eq.s32.totalorder %s34, 0
      %p251 = por %p249, %p250
      %p252 = scmp.ne.s32.totalorder %s240, %s241
      %p253 = scmp.eq.s32.totalorder %s35, 3
      %p254 = por %p252, %p253
      %p256 = scmp.ne.s32.totalorder %s241, %s255
      %p257 = scmp.eq.s32.totalorder %s35, 0
      %p258 = por %p256, %p257
      %s260 = sadd.s32 %s259, 1
      %p263 = scmp.eq.s32.totalorder %s29, 3
      %p264 = scmp.ne.s32.totalorder %s259, %s261
      %p265 = scmp.eq.s32.totalorder %s29, 0
      %p266 = por %p264, %p265
      %p267 = scmp.ne.s32.totalorder %s259, %s261
      %p268 = scmp.eq.s32.totalorder %s34, 3
      %p269 = por %p267, %p268
      %p270 = scmp.ne.s32.totalorder %s261, %s262
      %p271 = scmp.eq.s32.totalorder %s34, 0
      %p272 = por %p270, %p271
      %p273 = scmp.ne.s32.totalorder %s261, %s262
      %p274 = scmp.eq.s32.totalorder %s35, 3
      %p275 = por %p273, %p274
      %p277 = scmp.ne.s32.totalorder %s262, %s276
      %p278 = scmp.eq.s32.totalorder %s35, 0
      %p279 = por %p277, %p278
      %s280 = smul.u32 %s36, 2
      %s281 = sadd.s32 %s280, %s37
      %s282 = smul.u32 %s48, 2
      %s283 = sadd.s32 %s282, %s44
      %s284 = ssub.s32 %s281, %s283
      %p285 = scmp.eq.s32.totalorder %s284, 0
      %s287 = sadd.s32 %s286, 1
      %s288 = scalar_select %p285, %s286, %s287
      %p291 = pneg %p285
      %p292 = scmp.eq.s32.totalorder %s29, 3
      %p293 = por %p291, %p292
      %p294 = scmp.ne.s32.totalorder %s286, %s289
      %p295 = scmp.eq.s32.totalorder %s29, 0
      %p296 = por %p294, %p295
      %p297 = scmp.ne.s32.totalorder %s286, %s289
      %p298 = scmp.eq.s32.totalorder %s34, 3
      %p299 = por %p297, %p298
      %p300 = scmp.ne.s32.totalorder %s289, %s290
      %p301 = scmp.eq.s32.totalorder %s34, 0
      %p302 = por %p300, %p301
      %p303 = scmp.ne.s32.totalorder %s289, %s290
      %p304 = scmp.eq.s32.totalorder %s35, 3
      %p305 = por %p303, %p304
      %p307 = scmp.ne.s32.totalorder %s290, %s306
      %p308 = scmp.eq.s32.totalorder %s35, 0
      %p309 = por %p307, %p308
      %s310 = smul.u32 %s36, 2
      %s311 = sadd.s32 %s310, %s37
      %s312 = smul.u32 %s48, 2
      %s313 = sadd.s32 %s312, %s44
      %s314 = ssub.s32 %s311, %s313
      %p315 = scmp.eq.s32.totalorder %s314, 0
      %s317 = sadd.s32 %s316, 1
      %s318 = scalar_select %p315, %s316, %s317
      %p321 = pneg %p315
      %p322 = scmp.eq.s32.totalorder %s29, 3
      %p323 = por %p321, %p322
      %p324 = scmp.ne.s32.totalorder %s316, %s319
      %p325 = scmp.eq.s32.totalorder %s29, 0
      %p326 = por %p324, %p325
      %p327 = scmp.ne.s32.totalorder %s316, %s319
      %p328 = scmp.eq.s32.totalorder %s34, 3
      %p329 = por %p327, %p328
      %p330 = scmp.ne.s32.totalorder %s319, %s320
      %p331 = scmp.eq.s32.totalorder %s34, 0
      %p332 = por %p330, %p331
      %p333 = scmp.ne.s32.totalorder %s319, %s320
      %p334 = scmp.eq.s32.totalorder %s35, 3
      %p335 = por %p333, %p334
      %p337 = scmp.ne.s32.totalorder %s320, %s336
      %p338 = scmp.eq.s32.totalorder %s35, 0
      %p339 = por %p337, %p338
      %s340 = ssub.s32 %s36, %s48
      %p341 = scmp.eq.s32.totalorder %s340, 0
      %s343 = sadd.s32 %s342, 1
      %s344 = scalar_select %p341, %s342, %s343
      %p347 = pneg %p341
      %p348 = scmp.eq.s32.totalorder %s29, 3
      %p349 = por %p347, %p348
      %p350 = scmp.ne.s32.totalorder %s342, %s345
      %p351 = scmp.eq.s32.totalorder %s29, 0
      %p352 = por %p350, %p351
      %p353 = scmp.ne.s32.totalorder %s342, %s345
      %p354 = scmp.eq.s32.totalorder %s34, 3
      %p355 = por %p353, %p354
      %p356 = scmp.ne.s32.totalorder %s345, %s346
      %p357 = scmp.eq.s32.totalorder %s34, 0
      %p358 = por %p356, %p357
      %p359 = scmp.ne.s32.totalorder %s345, %s346
      %p360 = scmp.eq.s32.totalorder %s35, 3
      %p361 = por %p359, %p360
      %p363 = scmp.ne.s32.totalorder %s346, %s362
      %p364 = scmp.eq.s32.totalorder %s35, 0
      %p365 = por %p363, %p364
      %s366 = ssub.s32 %s36, %s48
      %p367 = scmp.eq.s32.totalorder %s366, 0
      %s369 = sadd.s32 %s368, 1
      %s370 = scalar_select %p367, %s368, %s369
      %p373 = pneg %p367
      %p374 = scmp.eq.s32.totalorder %s29, 3
      %p375 = por %p373, %p374
      %p376 = scmp.ne.s32.totalorder %s368, %s371
      %p377 = scmp.eq.s32.totalorder %s29, 0
      %p378 = por %p376, %p377
      %p379 = scmp.ne.s32.totalorder %s368, %s371
      %p380 = scmp.eq.s32.totalorder %s34, 3
      %p381 = por %p379, %p380
      %p382 = scmp.ne.s32.totalorder %s371, %s372
      %p383 = scmp.eq.s32.totalorder %s34, 0
      %p384 = por %p382, %p383
      %p385 = scmp.ne.s32.totalorder %s371, %s372
      %p386 = scmp.eq.s32.totalorder %s35, 3
      %p387 = por %p385, %p386
      %p389 = scmp.ne.s32.totalorder %s372, %s388
      %p390 = scmp.eq.s32.totalorder %s35, 0
      %p391 = por %p389, %p390
      %p392 = scmp.le.s32.totalorder 1, %s29
      %p393 = scmp.lt.s32.totalorder %s29, 5
      %p394 = pnand %p392, %p393
      %p395 = pneg %p394
      // Predicated region
      $region9: #{decoder_step.1} parent=5 // pred_check
        _
      $region10: #{decoder_step.1} parent=5 // pred_check_branch
        %397 = sbr.rel (%p394) target = $region12
      $region11: #{decoder_step.1} parent=5 // pred_region
        %s398 = ssub.s32 %s29, 1
        // Predicated region
        $region13: #{decoder_step.1} parent=11 // pred_check
          %p399 = pneg %p62
        $region14: #{decoder_step.1} parent=11 // pred_check_branch
          %401 = sbr.rel (%p399) target = $region16
        $region15: #{decoder_step.1} parent=11 // pred_region
          _
        $region16: #{decoder_step.1} parent=11 // pred_fallthru
          _
        // Predicated region
        $region17: #{decoder_step.1} parent=11 // pred_check
          %p402 = pneg %p83
        $region18: #{decoder_step.1} parent=11 // pred_check_branch
          %404 = sbr.rel (%p402) target = $region20
        $region19: #{decoder_step.1} parent=11 // pred_region
          _
        $region20: #{decoder_step.1} parent=11 // pred_fallthru
          _
        // Predicated region
        $region21: #{decoder_step.1} parent=11 // pred_check
          %p405 = pneg %p104
        $region22: #{decoder_step.1} parent=11 // pred_check_branch
          %407 = sbr.rel (%p405) target = $region24
        $region23: #{decoder_step.1} parent=11 // pred_region
          %s409 = ssub.s32 2048, 2048
          %410 = vsyncadd [#allocation6], %s409
          %s411 = sshll.u32 [#allocation5], 4
          %s412 = int_to_ptr.vmem [resolvable:$true] %s411
          %417 = dma.hbm_to_vmem [thread:$0]  %s2, 2048, %s412, [#allocation6], 128, 128, 8
        $region24: #{decoder_step.1} parent=11 // pred_fallthru
          _
        // Predicated region
        $region25: #{decoder_step.1} parent=11 // pred_check
          %p418 = pneg %p125
        $region26: #{decoder_step.1} parent=11 // pred_check_branch
          %420 = sbr.rel (%p418) target = $region28
        $region27: #{decoder_step.1} parent=11 // pred_region
          %s422 = ssub.s32 2048, 2048
          %423 = vsyncadd [#allocation8], %s422
          %s424 = sshll.u32 [#allocation7], 4
          %s425 = int_to_ptr.vmem [resolvable:$true] %s424
          %430 = dma.hbm_to_vmem [thread:$0]  %s3, 2048, %s425, [#allocation8], 128, 128, 8
        $region28: #{decoder_step.1} parent=11 // pred_fallthru
          _
        // Predicated region
        $region29: #{decoder_step.1} parent=11 // pred_check
          %p431 = pneg %p146
        $region30: #{decoder_step.1} parent=11 // pred_check_branch
          %433 = sbr.rel (%p431) target = $region32
        $region31: #{decoder_step.1} parent=11 // pred_region
          %s435 = ssub.s32 2048, 2048
          %436 = vsyncadd [#allocation8], %s435
          %s437 = sshll.u32 [#allocation9], 4
          %s438 = int_to_ptr.vmem [resolvable:$true] %s437
          %443 = dma.hbm_to_vmem [thread:$0]  %s4, 2048, %s438, [#allocation8], 128, 128, 8
        $region32: #{decoder_step.1} parent=11 // pred_fallthru
          _
        // Predicated region
        $region33: #{decoder_step.1} parent=11 // pred_check
          %p444 = pneg %p167
        $region34: #{decoder_step.1} parent=11 // pred_check_branch
          %446 = sbr.rel (%p444) target = $region36
        $region35: #{decoder_step.1} parent=11 // pred_region
          %s448 = ssub.s32 16, 16
          %449 = vsyncadd [#allocation11], %s448
          %s451 = sshll.u32 [#allocation10], 4
          %s452 = int_to_ptr.vmem [resolvable:$true] %s451
          %454 = dma.hbm_to_vmem [thread:$0]  %s5, 16, %s452, [#allocation11]
        $region36: #{decoder_step.1} parent=11 // pred_fallthru
          _
        // Predicated region
        $region37: #{decoder_step.1} parent=11 // pred_check
          %p455 = pneg %p188
        $region38: #{decoder_step.1} parent=11 // pred_check_branch
          %457 = sbr.rel (%p455) target = $region40
        $region39: #{decoder_step.1} parent=11 // pred_region
          %s459 = ssub.s32 16, 16
          %460 = vsyncadd [#allocation11], %s459
          %s462 = sshll.u32 [#allocation12], 4
          %s463 = int_to_ptr.vmem [resolvable:$true] %s462
          %465 = dma.hbm_to_vmem [thread:$0]  %s6, 16, %s463, [#allocation11]
        $region40: #{decoder_step.1} parent=11 // pred_fallthru
          _
        // Predicated region
        $region41: #{decoder_step.1} parent=11 // pred_check
          %p466 = pneg %p209
        $region42: #{decoder_step.1} parent=11 // pred_check_branch
          %468 = sbr.rel (%p466) target = $region44
        $region43: #{decoder_step.1} parent=11 // pred_region
          %s470 = ssub.s32 12288, 12288
          %471 = vsyncadd [#allocation14], %s470
          %s472 = sshll.u32 [#allocation13], 4
          %s473 = int_to_ptr.vmem [resolvable:$true] %s472
          %478 = dma.hbm_to_vmem [thread:$0]  %s7, 12288, %s473, [#allocation14], 384, 384, 24
        $region44: #{decoder_step.1} parent=11 // pred_fallthru
          _
        // Predicated region
        $region45: #{decoder_step.1} parent=11 // pred_check
          %p479 = pneg %p230
        $region46: #{decoder_step.1} parent=11 // pred_check_branch
          %481 = sbr.rel (%p479) target = $region48
        $region47: #{decoder_step.1} parent=11 // pred_region
          %s483 = ssub.s32 6144, 6144
          %484 = vsyncadd [#allocation14], %s483
          %s485 = sshll.u32 [#allocation15], 4
          %s486 = int_to_ptr.vmem [resolvable:$true] %s485
          %491 = dma.hbm_to_vmem [thread:$0]  %s8, 6144, %s486, [#allocation14], 384, 384, 24
        $region48: #{decoder_step.1} parent=11 // pred_fallthru
          _
        // Predicated region
        $region49: #{decoder_step.1} parent=11 // pred_check
          %p492 = pneg %p251
        $region50: #{decoder_step.1} parent=11 // pred_check_branch
          %494 = sbr.rel (%p492) target = $region52
        $region51: #{decoder_step.1} parent=11 // pred_region
          %s496 = ssub.s32 48, 48
          %497 = vsyncadd [#allocation17], %s496
          %s499 = sshll.u32 [#allocation16], 4
          %s500 = int_to_ptr.vmem [resolvable:$true] %s499
          %502 = dma.hbm_to_vmem [thread:$0]  %s9, 48, %s500, [#allocation17]
        $region52: #{decoder_step.1} parent=11 // pred_fallthru
          _
        // Predicated region
        $region53: #{decoder_step.1} parent=11 // pred_check
          %p503 = pneg %p272
        $region54: #{decoder_step.1} parent=11 // pred_check_branch
          %505 = sbr.rel (%p503) target = $region56
        $region55: #{decoder_step.1} parent=11 // pred_region
          %s507 = ssub.s32 48, 48
          %508 = vsyncadd [#allocation17], %s507
          %s510 = sshll.u32 [#allocation18], 4
          %s511 = int_to_ptr.vmem [resolvable:$true] %s510
          %513 = dma.hbm_to_vmem [thread:$0]  %s10, 48, %s511, [#allocation17]
        $region56: #{decoder_step.1} parent=11 // pred_fallthru
          _
      $region12: #{decoder_step.1} parent=5 // pred_fallthru
        _
      %p514 = scmp.lt.s32.totalorder %s29, 4
      // Predicated region
      $region57: #{decoder_step.1} parent=5 // pred_check
        %p515 = pneg %p514
      $region58: #{decoder_step.1} parent=5 // pred_check_branch
        %517 = sbr.rel (%p515) target = $region60
      $region59: #{decoder_step.1} parent=5 // pred_region
        // Predicated region
        $region61: #{decoder_step.1} parent=59 // pred_check
          %p518 = pneg %p296
        $region62: #{decoder_step.1} parent=59 // pred_check_branch
          %520 = sbr.rel (%p518) target = $region64
        $region63: #{decoder_step.1} parent=59 // pred_region
          %s521 = sand.u32 %s286, 1
          %s522 = scalar_lea.sflag [#allocation20], %s521
          %s523 = sand.u32 %s286, 1
          %s524 = smul.addr %s523, 2176
          %s525 = scalar_lea.vmem [#allocation19], %s524
          %s526 = smul.u32 %s36, 2
          %s527 = sadd.s32 %s526, %s37
          %s528 = smul.u32 16, %s527
          %s530 = ssub.s32 34816, 34816
          %531 = vsyncadd %s522, %s530
          %s532 = smul.addr %s528, 64
          %s533 = scalar_lea.hbm %s11, %s532
          %s534 = sshll.u32 %s525, 4
          %s535 = int_to_ptr.vmem [resolvable:$true] %s534
          %540 = dma.hbm_to_vmem [thread:$0]  %s533, 34816, %s535, %s522, 4096, 1024, 64
        $region64: #{decoder_step.1} parent=59 // pred_fallthru
          _
      $region60: #{decoder_step.1} parent=5 // pred_fallthru
        _
      %p541 = scmp.le.s32.totalorder 1, %s29
      %p542 = scmp.lt.s32.totalorder %s29, 5
      %p543 = pnand %p541, %p542
      %p544 = pneg %p543
      // Predicated region
      $region65: #{decoder_step.1} parent=5 // pred_check
        _
      $region66: #{decoder_step.1} parent=5 // pred_check_branch
        %546 = sbr.rel (%p543) target = $region68
      $region67: #{decoder_step.1} parent=5 // pred_region
        %s547 = ssub.s32 %s29, 1
        // Predicated region
        $region69: #{decoder_step.1} parent=67 // pred_check
          %p548 = pneg %p104
        $region70: #{decoder_step.1} parent=67 // pred_check_branch
          %550 = sbr.rel (%p548) target = $region72
        $region71: #{decoder_step.1} parent=67 // pred_region
          %551 = dma.done [#allocation6], 2048
        $region72: #{decoder_step.1} parent=67 // pred_fallthru
          _
        // Predicated region
        $region73: #{decoder_step.1} parent=67 // pred_check
          %p552 = pneg %p125
        $region74: #{decoder_step.1} parent=67 // pred_check_branch
          %554 = sbr.rel (%p552) target = $region76
        $region75: #{decoder_step.1} parent=67 // pred_region
          %555 = dma.done [#allocation8], 2048
        $region76: #{decoder_step.1} parent=67 // pred_fallthru
          _
        // Predicated region
        $region77: #{decoder_step.1} parent=67 // pred_check
          %p556 = pneg %p146
        $region78: #{decoder_step.1} parent=67 // pred_check_branch
          %558 = sbr.rel (%p556) target = $region80
        $region79: #{decoder_step.1} parent=67 // pred_region
          %559 = dma.done [#allocation8], 2048
        $region80: #{decoder_step.1} parent=67 // pred_fallthru
          _
        // Predicated region
        $region81: #{decoder_step.1} parent=67 // pred_check
          %p560 = pneg %p167
        $region82: #{decoder_step.1} parent=67 // pred_check_branch
          %562 = sbr.rel (%p560) target = $region84
        $region83: #{decoder_step.1} parent=67 // pred_region
          %563 = dma.done [#allocation11], 16
        $region84: #{decoder_step.1} parent=67 // pred_fallthru
          _
        // Predicated region
        $region85: #{decoder_step.1} parent=67 // pred_check
          %p564 = pneg %p188
        $region86: #{decoder_step.1} parent=67 // pred_check_branch
          %566 = sbr.rel (%p564) target = $region88
        $region87: #{decoder_step.1} parent=67 // pred_region
          %567 = dma.done [#allocation11], 16
        $region88: #{decoder_step.1} parent=67 // pred_fallthru
          _
        // Predicated region
        $region89: #{decoder_step.1} parent=67 // pred_check
          %p568 = pneg %p209
        $region90: #{decoder_step.1} parent=67 // pred_check_branch
          %570 = sbr.rel (%p568) target = $region92
        $region91: #{decoder_step.1} parent=67 // pred_region
          %571 = dma.done [#allocation14], 12288
        $region92: #{decoder_step.1} parent=67 // pred_fallthru
          _
        // Predicated region
        $region93: #{decoder_step.1} parent=67 // pred_check
          %p572 = pneg %p230
        $region94: #{decoder_step.1} parent=67 // pred_check_branch
          %574 = sbr.rel (%p572) target = $region96
        $region95: #{decoder_step.1} parent=67 // pred_region
          %575 = dma.done [#allocation14], 6144
        $region96: #{decoder_step.1} parent=67 // pred_fallthru
          _
        // Predicated region
        $region97: #{decoder_step.1} parent=67 // pred_check
          %p576 = pneg %p251
        $region98: #{decoder_step.1} parent=67 // pred_check_branch
          %578 = sbr.rel (%p576) target = $region100
        $region99: #{decoder_step.1} parent=67 // pred_region
          %579 = dma.done [#allocation17], 48
        $region100: #{decoder_step.1} parent=67 // pred_fallthru
          _
        // Predicated region
        $region101: #{decoder_step.1} parent=67 // pred_check
          %p580 = pneg %p272
        $region102: #{decoder_step.1} parent=67 // pred_check_branch
          %582 = sbr.rel (%p580) target = $region104
        $region103: #{decoder_step.1} parent=67 // pred_region
          %583 = dma.done [#allocation17], 48
        $region104: #{decoder_step.1} parent=67 // pred_fallthru
          _
        %s584 = sand.u32 %s289, 1
        %s585 = scalar_lea.sflag [#allocation20], %s584
        %s586 = sand.u32 %s289, 1
        %s587 = smul.addr %s586, 2176
        %s588 = scalar_lea.vmem [#allocation19], %s587
        // Predicated region
        $region105: #{decoder_step.1} parent=67 // pred_check
          %p589 = pneg %p302
        $region106: #{decoder_step.1} parent=67 // pred_check_branch
          %591 = sbr.rel (%p589) target = $region108
        $region107: #{decoder_step.1} parent=67 // pred_region
          %592 = dma.done %s585, 34816
        $region108: #{decoder_step.1} parent=67 // pred_fallthru
          _
        %p593 = pneg %p62
        %p594 = pneg %p59
        %p595 = pneg %p83
        %p596 = pneg %p80
        %p597 = pneg %p104
        %p598 = pneg %p101
        %p599 = pneg %p125
        %p600 = pneg %p122
        %p601 = pneg %p146
        %p602 = pneg %p143
        %p603 = pneg %p167
        %p604 = pneg %p164
        %p605 = pneg %p188
        %p606 = pneg %p185
        %p607 = pneg %p209
        %p608 = pneg %p206
        %p609 = pneg %p230
        %p610 = pneg %p227
        %p611 = pneg %p251
        %p612 = pneg %p248
        %p613 = pneg %p272
        %p614 = pneg %p269
        %s615 = sand.u32 %s289, 1
        %s616 = scalar_lea.sflag [#allocation20], %s615
        %s617 = sand.u32 %s289, 1
        %s618 = smul.addr %s617, 2176
        %s619 = scalar_lea.vmem [#allocation19], %s618
        %p620 = pneg %p302
        %p621 = pneg %p299
        %p622 = pneg %p332
        %p623 = pneg %p329
        %s624 = smul.u32 %s38, 2
        %s625 = sadd.s32 %s624, %s39
        %s626 = smul.u32 16, %s625
        %p627 = scmp.lt.s32.totalorder %s626, 63
        %s628 = scalar_select %p627, %s626, 63
        %s629 = smul.addr %s628, 8
        %s630 = scalar_lea.vmem %s12, %s629
        %p631 = pneg %p358
        %p632 = pneg %p355
        %p633 = scmp.lt.s32.totalorder %s38, 1
        %s634 = scalar_select %p633, %s38, 1
        %s635 = smul.addr %s634, 8
        %s636 = scalar_lea.vmem %s13, %s635
        %p637 = pneg %p384
        %p638 = pneg %p381
        %p639 = scmp.lt.s32.totalorder %s38, 1
        %s640 = scalar_select %p639, %s38, 1
        %s641 = smul.addr %s640, 8
        %s642 = scalar_lea.vmem %s14, %s641
        %s643 = smul.u32 %s38, 2
        %s644 = sadd.s32 %s643, %s39
        %s645 = smul.u32 16, %s644
        %s646 = smul.u32 %s38, 2
        %s647 = sadd.s32 %s646, %s39
        %s648 = smul.u32 16, %s647
        %p649 = scmp.lt.s32.totalorder %s648, 63
        %s650 = scalar_select %p649, %s648, 63
        %s651 = smul.addr %s650, 8
        %s652 = scalar_lea.vmem %s12, %s651
        %s653 = smul.u32 %s38, 2
        %s654 = sadd.s32 %s653, %s39
        %s655 = smul.u32 16, %s654
        %p656 = scmp.lt.s32.totalorder %s38, 1
        %s657 = scalar_select %p656, %s38, 1
        %s658 = smul.addr %s657, 8
        %s659 = scalar_lea.vmem %s13, %s658
        %p660 = scmp.lt.s32.totalorder %s38, 1
        %s661 = scalar_select %p660, %s38, 1
        %s662 = smul.addr %s661, 8
        %s663 = scalar_lea.vmem %s14, %s662
        %p665 = scmp.eq.s32.totalorder %s39, 0
        // Predicated region
        $region109: #{decoder_step.1} parent=67 // pred_check
          %p666 = pneg %p665
        $region110: #{decoder_step.1} parent=67 // pred_check_branch
          %668 = sbr.rel (%p666) target = $region112
        $region111: #{decoder_step.1} parent=67 // pred_region
          %v669 = vld [vmem:[%s1] sm:$0xff]
          %v670 = vld [vmem:[#allocation5] sm:$0xff]
          %v671 = vld [vmem:[#allocation5 + $0x8] sm:$0xff]
          %v672 = vld [vmem:[#allocation5 + $0x10] sm:$0xff]
          %v673 = vld [vmem:[#allocation5 + $0x18] sm:$0xff]
          %v674 = vld [vmem:[#allocation5 + $0x20] sm:$0xff]
          %v675 = vld [vmem:[#allocation5 + $0x28] sm:$0xff]
          %v676 = vld [vmem:[#allocation5 + $0x30] sm:$0xff]
          %v677 = vld [vmem:[#allocation5 + $0x38] sm:$0xff]
          %v678 = vld [vmem:[#allocation5 + $0x40] sm:$0xff]
          %v679 = vld [vmem:[#allocation5 + $0x48] sm:$0xff]
          %v680 = vld [vmem:[#allocation5 + $0x50] sm:$0xff]
          %v681 = vld [vmem:[#allocation5 + $0x58] sm:$0xff]
          %v682 = vld [vmem:[#allocation5 + $0x60] sm:$0xff]
          %v683 = vld [vmem:[#allocation5 + $0x68] sm:$0xff]
          %v684 = vld [vmem:[#allocation5 + $0x70] sm:$0xff]
          %v685 = vld [vmem:[#allocation5 + $0x78] sm:$0xff]
          %v686 = vld [vmem:[#allocation7] sm:$0xff]
          %v687 = vld [vmem:[#allocation7 + $0x8] sm:$0xff]
          %v688 = vld [vmem:[#allocation7 + $0x10] sm:$0xff]
          %v689 = vld [vmem:[#allocation7 + $0x18] sm:$0xff]
          %v690 = vld [vmem:[#allocation7 + $0x20] sm:$0xff]
          %v691 = vld [vmem:[#allocation7 + $0x28] sm:$0xff]
          %v692 = vld [vmem:[#allocation7 + $0x30] sm:$0xff]
          %v693 = vld [vmem:[#allocation7 + $0x38] sm:$0xff]
          %v694 = vld [vmem:[#allocation7 + $0x40] sm:$0xff]
          %v695 = vld [vmem:[#allocation7 + $0x48] sm:$0xff]
          %v696 = vld [vmem:[#allocation7 + $0x50] sm:$0xff]
          %v697 = vld [vmem:[#allocation7 + $0x58] sm:$0xff]
          %v698 = vld [vmem:[#allocation7 + $0x60] sm:$0xff]
          %v699 = vld [vmem:[#allocation7 + $0x68] sm:$0xff]
          %v700 = vld [vmem:[#allocation7 + $0x70] sm:$0xff]
          %v701 = vld [vmem:[#allocation7 + $0x78] sm:$0xff]
          %702 = vmatprep.subr.mxu0 0.0
          %703 = vmatpush1.msra.mxu0 %v701
          %704 = vmatprep.subr.mxu0 0.0
          %705 = vmatpush1.msra.mxu0 %v700
          %706 = vmatprep.subr.mxu0 0.0
          %707 = vmatpush1.msra.mxu0 %v699
          %708 = vmatprep.subr.mxu0 0.0
          %709 = vmatpush1.msra.mxu0 %v698
          %710 = vmatprep.subr.mxu0 0.0
          %711 = vmatpush1.msra.mxu0 %v697
          %712 = vmatprep.subr.mxu0 0.0
          %713 = vmatpush1.msra.mxu0 %v696
          %714 = vmatprep.subr.mxu0 0.0
          %715 = vmatpush1.msra.mxu0 %v695
          %716 = vmatprep.subr.mxu0 0.0
          %717 = vmatpush1.msra.mxu0 %v694
          %718 = vmatprep.subr.mxu0 0.0
          %719 = vmatpush1.msra.mxu0 %v693
          %720 = vmatprep.subr.mxu0 0.0
          %721 = vmatpush1.msra.mxu0 %v692
          %722 = vmatprep.subr.mxu0 0.0
          %723 = vmatpush1.msra.mxu0 %v691
          %724 = vmatprep.subr.mxu0 0.0
          %725 = vmatpush1.msra.mxu0 %v690
          %726 = vmatprep.subr.mxu0 0.0
          %727 = vmatpush1.msra.mxu0 %v689
          %728 = vmatprep.subr.mxu0 0.0
          %729 = vmatpush1.msra.mxu0 %v688
          %730 = vmatprep.subr.mxu0 0.0
          %731 = vmatpush1.msra.mxu0 %v687
          %732 = vmatprep.subr.mxu0 0.0
          %733 = vmatpush1.msra.mxu0 %v686
          %734 = vmatprep.subr.mxu0 0.0
          %735 = vmatpush2.msra.mxu0 0.0
          %736 = vmatprep.subr.mxu0 0.0
          %737 = vmatpush2.msra.mxu0 0.0
          %738 = vmatprep.subr.mxu0 0.0
          %739 = vmatpush2.msra.mxu0 0.0
          %740 = vmatprep.subr.mxu0 0.0
          %741 = vmatpush2.msra.mxu0 0.0
          %742 = vmatprep.subr.mxu0 0.0
          %743 = vmatpush2.msra.mxu0 0.0
          %744 = vmatprep.subr.mxu0 0.0
          %745 = vmatpush2.msra.mxu0 0.0
          %746 = vmatprep.subr.mxu0 0.0
          %747 = vmatpush2.msra.mxu0 0.0
          %748 = vmatprep.subr.mxu0 0.0
          %749 = vmatpush2.msra.mxu0 0.0
          %750 = vmatprep.subr.mxu0 0.0
          %751 = vmatpush2.msra.mxu0 0.0
          %752 = vmatprep.subr.mxu0 0.0
          %753 = vmatpush2.msra.mxu0 0.0
          %754 = vmatprep.subr.mxu0 0.0
          %755 = vmatpush2.msra.mxu0 0.0
          %756 = vmatprep.subr.mxu0 0.0
          %757 = vmatpush2.msra.mxu0 0.0
          %758 = vmatprep.subr.mxu0 0.0
          %759 = vmatpush2.msra.mxu0 0.0
          %760 = vmatprep.subr.mxu0 0.0
          %761 = vmatpush2.msra.mxu0 0.0
          %762 = vmatprep.subr.mxu0 0.0
          %763 = vmatpush2.msra.mxu0 0.0
          %764 = vmatprep.subr.mxu0 0.0
          %765 = vmatpush2.msra.mxu0 0.0
          %766 = vmatprep.mubr.f32.mxu0 0.0
          %767 = vmatmul.mubr.f32.gmra.mxu0 %v669
          %v768 = vpop.f32.mrf.mxu0
          %v769 = vadd.f32 0.0, %v768
          %v770 = vpop.f32.mrf.mxu0
          %771 = vdwg.mxu0
          %v772 = vld [vmem:[#allocation9] sm:$0xff]
          %v773 = vld [vmem:[#allocation9 + $0x8] sm:$0xff]
          %v774 = vld [vmem:[#allocation9 + $0x10] sm:$0xff]
          %v775 = vld [vmem:[#allocation9 + $0x18] sm:$0xff]
          %v776 = vld [vmem:[#allocation9 + $0x20] sm:$0xff]
          %v777 = vld [vmem:[#allocation9 + $0x28] sm:$0xff]
          %v778 = vld [vmem:[#allocation9 + $0x30] sm:$0xff]
          %v779 = vld [vmem:[#allocation9 + $0x38] sm:$0xff]
          %v780 = vld [vmem:[#allocation9 + $0x40] sm:$0xff]
          %v781 = vld [vmem:[#allocation9 + $0x48] sm:$0xff]
          %v782 = vld [vmem:[#allocation9 + $0x50] sm:$0xff]
          %v783 = vld [vmem:[#allocation9 + $0x58] sm:$0xff]
          %v784 = vld [vmem:[#allocation9 + $0x60] sm:$0xff]
          %v785 = vld [vmem:[#allocation9 + $0x68] sm:$0xff]
          %v786 = vld [vmem:[#allocation9 + $0x70] sm:$0xff]
          %v787 = vld [vmem:[#allocation9 + $0x78] sm:$0xff]
          %788 = vmatprep.subr.mxu0 0.0
          %789 = vmatpush1.msra.mxu0 %v787
          %790 = vmatprep.subr.mxu0 0.0
          %791 = vmatpush1.msra.mxu0 %v786
          %792 = vmatprep.subr.mxu0 0.0
          %793 = vmatpush1.msra.mxu0 %v785
          %794 = vmatprep.subr.mxu0 0.0
          %795 = vmatpush1.msra.mxu0 %v784
          %796 = vmatprep.subr.mxu0 0.0
          %797 = vmatpush1.msra.mxu0 %v783
          %798 = vmatprep.subr.mxu0 0.0
          %799 = vmatpush1.msra.mxu0 %v782
          %800 = vmatprep.subr.mxu0 0.0
          %801 = vmatpush1.msra.mxu0 %v781
          %802 = vmatprep.subr.mxu0 0.0
          %803 = vmatpush1.msra.mxu0 %v780
          %804 = vmatprep.subr.mxu0 0.0
          %805 = vmatpush1.msra.mxu0 %v779
          %806 = vmatprep.subr.mxu0 0.0
          %807 = vmatpush1.msra.mxu0 %v778
          %808 = vmatprep.subr.mxu0 0.0
          %809 = vmatpush1.msra.mxu0 %v777
          %810 = vmatprep.subr.mxu0 0.0
          %811 = vmatpush1.msra.mxu0 %v776
          %812 = vmatprep.subr.mxu0 0.0
          %813 = vmatpush1.msra.mxu0 %v775
          %814 = vmatprep.subr.mxu0 0.0
          %815 = vmatpush1.msra.mxu0 %v774
          %816 = vmatprep.subr.mxu0 0.0
          %817 = vmatpush1.msra.mxu0 %v773
          %818 = vmatprep.subr.mxu0 0.0
          %819 = vmatpush1.msra.mxu0 %v772
          %820 = vmatprep.subr.mxu0 0.0
          %821 = vmatpush2.msra.mxu0 0.0
          %822 = vmatprep.subr.mxu0 0.0
          %823 = vmatpush2.msra.mxu0 0.0
          %824 = vmatprep.subr.mxu0 0.0
          %825 = vmatpush2.msra.mxu0 0.0
          %826 = vmatprep.subr.mxu0 0.0
          %827 = vmatpush2.msra.mxu0 0.0
          %828 = vmatprep.subr.mxu0 0.0
          %829 = vmatpush2.msra.mxu0 0.0
          %830 = vmatprep.subr.mxu0 0.0
          %831 = vmatpush2.msra.mxu0 0.0
          %832 = vmatprep.subr.mxu0 0.0
          %833 = vmatpush2.msra.mxu0 0.0
          %834 = vmatprep.subr.mxu0 0.0
          %835 = vmatpush2.msra.mxu0 0.0
          %836 = vmatprep.subr.mxu0 0.0
          %837 = vmatpush2.msra.mxu0 0.0
          %838 = vmatprep.subr.mxu0 0.0
          %839 = vmatpush2.msra.mxu0 0.0
          %840 = vmatprep.subr.mxu0 0.0
          %841 = vmatpush2.msra.mxu0 0.0
          %842 = vmatprep.subr.mxu0 0.0
          %843 = vmatpush2.msra.mxu0 0.0
          %844 = vmatprep.subr.mxu0 0.0
          %845 = vmatpush2.msra.mxu0 0.0
          %846 = vmatprep.subr.mxu0 0.0
          %847 = vmatpush2.msra.mxu0 0.0
          %848 = vmatprep.subr.mxu0 0.0
          %849 = vmatpush2.msra.mxu0 0.0
          %850 = vmatprep.subr.mxu0 0.0
          %851 = vmatpush2.msra.mxu0 0.0
          %852 = vmatprep.mubr.f32.mxu0 0.0
          %853 = vmatmul.mubr.f32.gmra.mxu0 %v670
          %v854 = vpop.f32.mrf.mxu0
          %v855 = vadd.f32 0.0, %v854
          %v856 = vpop.f32.mrf.mxu0
          %857 = vmatprep.mubr.f32.mxu0 0.0
          %858 = vmatmul.mubr.f32.gmra.mxu0 %v671
          %v859 = vpop.f32.mrf.mxu0
          %v860 = vadd.f32 0.0, %v859
          %v861 = vpop.f32.mrf.mxu0
          %862 = vmatprep.mubr.f32.mxu0 0.0
          %863 = vmatmul.mubr.f32.gmra.mxu0 %v672
          %v864 = vpop.f32.mrf.mxu0
          %v865 = vadd.f32 0.0, %v864
          %v866 = vpop.f32.mrf.mxu0
          %867 = vmatprep.mubr.f32.mxu0 0.0
          %868 = vmatmul.mubr.f32.gmra.mxu0 %v673
          %v869 = vpop.f32.mrf.mxu0
          %v870 = vadd.f32 0.0, %v869
          %v871 = vpop.f32.mrf.mxu0
          %872 = vmatprep.mubr.f32.mxu0 0.0
          %873 = vmatmul.mubr.f32.gmra.mxu0 %v674
          %v874 = vpop.f32.mrf.mxu0
          %v875 = vadd.f32 0.0, %v874
          %v876 = vpop.f32.mrf.mxu0
          %877 = vmatprep.mubr.f32.mxu0 0.0
          %878 = vmatmul.mubr.f32.gmra.mxu0 %v675
          %v879 = vpop.f32.mrf.mxu0
          %v880 = vadd.f32 0.0, %v879
          %v881 = vpop.f32.mrf.mxu0
          %882 = vmatprep.mubr.f32.mxu0 0.0
          %883 = vmatmul.mubr.f32.gmra.mxu0 %v676
          %v884 = vpop.f32.mrf.mxu0
          %v885 = vadd.f32 0.0, %v884
          %v886 = vpop.f32.mrf.mxu0
          %887 = vmatprep.mubr.f32.mxu0 0.0
          %888 = vmatmul.mubr.f32.gmra.mxu0 %v677
          %v889 = vpop.f32.mrf.mxu0
          %v890 = vadd.f32 0.0, %v889
          %v891 = vpop.f32.mrf.mxu0
          %892 = vmatprep.mubr.f32.mxu0 0.0
          %893 = vmatmul.mubr.f32.gmra.mxu0 %v678
          %v894 = vpop.f32.mrf.mxu0
          %v895 = vadd.f32 0.0, %v894
          %v896 = vpop.f32.mrf.mxu0
          %897 = vmatprep.mubr.f32.mxu0 0.0
          %898 = vmatmul.mubr.f32.gmra.mxu0 %v679
          %v899 = vpop.f32.mrf.mxu0
          %v900 = vadd.f32 0.0, %v899
          %v901 = vpop.f32.mrf.mxu0
          %902 = vmatprep.mubr.f32.mxu0 0.0
          %903 = vmatmul.mubr.f32.gmra.mxu0 %v680
          %v904 = vpop.f32.mrf.mxu0
          %v905 = vadd.f32 0.0, %v904
          %v906 = vpop.f32.mrf.mxu0
          %907 = vmatprep.mubr.f32.mxu0 0.0
          %908 = vmatmul.mubr.f32.gmra.mxu0 %v681
          %v909 = vpop.f32.mrf.mxu0
          %v910 = vadd.f32 0.0, %v909
          %v911 = vpop.f32.mrf.mxu0
          %912 = vmatprep.mubr.f32.mxu0 0.0
          %913 = vmatmul.mubr.f32.gmra.mxu0 %v682
          %v914 = vpop.f32.mrf.mxu0
          %v915 = vadd.f32 0.0, %v914
          %v916 = vpop.f32.mrf.mxu0
          %917 = vmatprep.mubr.f32.mxu0 0.0
          %918 = vmatmul.mubr.f32.gmra.mxu0 %v683
          %v919 = vpop.f32.mrf.mxu0
          %v920 = vadd.f32 0.0, %v919
          %v921 = vpop.f32.mrf.mxu0
          %922 = vmatprep.mubr.f32.mxu0 0.0
          %923 = vmatmul.mubr.f32.gmra.mxu0 %v684
          %v924 = vpop.f32.mrf.mxu0
          %v925 = vadd.f32 0.0, %v924
          %v926 = vpop.f32.mrf.mxu0
          %927 = vmatprep.mubr.f32.mxu0 0.0
          %928 = vmatmul.mubr.f32.gmra.mxu0 %v685
          %v929 = vpop.f32.mrf.mxu0
          %v930 = vadd.f32 0.0, %v929
          %v931 = vpop.f32.mrf.mxu0
          %932 = vdwg.mxu0
          %v934 = vcombine.high %v769, %v769
          %v936 = vunpack.c.l.s4 1966171168
          %v937 = vunpack.c.0.s8 %v936
          %v938 = vlaneseq
          %v939 = vshrl.u32 %v938, 7
          %v940 = vsub.s32 %v937, %v939
          %v941 = vrot.slane %v769, %v940
          %v943 = vunpack.c.l.s4 1966171168
          %v944 = vunpack.c.0.s8 %v943
          %v945 = vlaneseq
          %v946 = vshrl.u32 %v945, 7
          %v947 = vsub.s32 %v944, %v946
          %v948 = vrot.slane %v934, %v947
          %v949 = vcombine.high %v941, %v941
          %v950 = vcombine.high %v948, %v948
          %v952 = vunpack.c.l.s4 1966171168
          %v953 = vunpack.c.0.s8 %v952
          %v954 = vlaneseq
          %v955 = vshrl.u32 %v954, 7
          %v956 = vsub.s32 %v953, %v955
          %v957 = vrot.slane %v941, %v956
          %v959 = vunpack.c.l.s4 1966171168
          %v960 = vunpack.c.0.s8 %v959
          %v961 = vlaneseq
          %v962 = vshrl.u32 %v961, 7
          %v963 = vsub.s32 %v960, %v962
          %v964 = vrot.slane %v948, %v963
          %v966 = vunpack.c.l.s4 1966171168
          %v967 = vunpack.c.0.s8 %v966
          %v968 = vlaneseq
          %v969 = vshrl.u32 %v968, 7
          %v970 = vsub.s32 %v967, %v969
          %v971 = vrot.slane %v949, %v970
          %v973 = vunpack.c.l.s4 1966171168
          %v974 = vunpack.c.0.s8 %v973
          %v975 = vlaneseq
          %v976 = vshrl.u32 %v975, 7
          %v977 = vsub.s32 %v974, %v976
          %v978 = vrot.slane %v950, %v977
          %v979 = vcombine.high %v957, %v957
          %v980 = vcombine.high %v964, %v964
          %v981 = vcombine.high %v971, %v971
          %v982 = vcombine.high %v978, %v978
          %v983 = vlaneseq
          %v984 = vshrl.u32 %v983, 7
          %v985 = vsub.s32 0, %v984
          %v986 = vrot.slane %v957, %v985
          %v987 = vlaneseq
          %v988 = vshrl.u32 %v987, 7
          %v989 = vsub.s32 0, %v988
          %v990 = vrot.slane %v971, %v989
          %v991 = vlaneseq
          %v992 = vshrl.u32 %v991, 7
          %v993 = vsub.s32 0, %v992
          %v994 = vrot.slane %v979, %v993
          %v995 = vlaneseq
          %v996 = vshrl.u32 %v995, 7
          %v997 = vsub.s32 0, %v996
          %v998 = vrot.slane %v981, %v997
          %v999 = vlaneseq
          %v1000 = vshrl.u32 %v999, 7
          %v1001 = vsub.s32 0, %v1000
          %v1002 = vrot.slane %v964, %v1001
          %v1003 = vlaneseq
          %v1004 = vshrl.u32 %v1003, 7
          %v1005 = vsub.s32 0, %v1004
          %v1006 = vrot.slane %v978, %v1005
          %v1007 = vlaneseq
          %v1008 = vshrl.u32 %v1007, 7
          %v1009 = vsub.s32 0, %v1008
          %v1010 = vrot.slane %v980, %v1009
          %v1011 = vlaneseq
          %v1012 = vshrl.u32 %v1011, 7
          %v1013 = vsub.s32 0, %v1012
          %v1014 = vrot.slane %v982, %v1013
          %v1023 = vadd.f32 %v855, %v986
          %v1024 = vadd.f32 %v860, %v986
          %v1025 = vadd.f32 %v865, %v990
          %v1026 = vadd.f32 %v870, %v990
          %v1027 = vadd.f32 %v875, %v994
          %v1028 = vadd.f32 %v880, %v994
          %v1029 = vadd.f32 %v885, %v998
          %v1030 = vadd.f32 %v890, %v998
          %v1031 = vadd.f32 %v895, %v1002
          %v1032 = vadd.f32 %v900, %v1002
          %v1033 = vadd.f32 %v905, %v1006
          %v1034 = vadd.f32 %v910, %v1006
          %v1035 = vadd.f32 %v915, %v1010
          %v1036 = vadd.f32 %v920, %v1010
          %v1037 = vadd.f32 %v925, %v1014
          %v1038 = vadd.f32 %v930, %v1014
          %v1039 = vld [vmem:[#allocation10] sm:$0x1]
          %v1041 = vlaneseq
          %v1042 = vshrl.u32 %v1041, 7
          %v1043 = vsub.s32 0, %v1042
          %v1044 = vrot.slane %v1039, %v1043
          %v1046 = vadd.f32 %v1023, %v1044
          %v1047 = vadd.f32 %v1024, %v1044
          %v1048 = vadd.f32 %v1025, %v1044
          %v1049 = vadd.f32 %v1026, %v1044
          %v1050 = vadd.f32 %v1027, %v1044
          %v1051 = vadd.f32 %v1028, %v1044
          %v1052 = vadd.f32 %v1029, %v1044
          %v1053 = vadd.f32 %v1030, %v1044
          %v1054 = vadd.f32 %v1031, %v1044
          %v1055 = vadd.f32 %v1032, %v1044
          %v1056 = vadd.f32 %v1033, %v1044
          %v1057 = vadd.f32 %v1034, %v1044
          %v1058 = vadd.f32 %v1035, %v1044
          %v1059 = vadd.f32 %v1036, %v1044
          %v1060 = vadd.f32 %v1037, %v1044
          %v1061 = vadd.f32 %v1038, %v1044
          %v1062 = vmax.f32 %v1046, 0.0
          %v1063 = vmax.f32 %v1047, 0.0
          %v1064 = vmax.f32 %v1048, 0.0
          %v1065 = vmax.f32 %v1049, 0.0
          %v1066 = vmax.f32 %v1050, 0.0
          %v1067 = vmax.f32 %v1051, 0.0
          %v1068 = vmax.f32 %v1052, 0.0
          %v1069 = vmax.f32 %v1053, 0.0
          %v1070 = vmax.f32 %v1054, 0.0
          %v1071 = vmax.f32 %v1055, 0.0
          %v1072 = vmax.f32 %v1056, 0.0
          %v1073 = vmax.f32 %v1057, 0.0
          %v1074 = vmax.f32 %v1058, 0.0
          %v1075 = vmax.f32 %v1059, 0.0
          %v1076 = vmax.f32 %v1060, 0.0
          %v1077 = vmax.f32 %v1061, 0.0
          %v1078 = vld [vmem:[#allocation12] sm:$0x1]
          %v1080 = vlaneseq
          %v1081 = vshrl.u32 %v1080, 7
          %v1082 = vsub.s32 0, %v1081
          %v1083 = vrot.slane %v1078, %v1082
          %v1085 = vmul.f32 %v1062, %v1083
          %v1086 = vmul.f32 %v1063, %v1083
          %v1087 = vmul.f32 %v1064, %v1083
          %v1088 = vmul.f32 %v1065, %v1083
          %v1089 = vmul.f32 %v1066, %v1083
          %v1090 = vmul.f32 %v1067, %v1083
          %v1091 = vmul.f32 %v1068, %v1083
          %v1092 = vmul.f32 %v1069, %v1083
          %v1093 = vmul.f32 %v1070, %v1083
          %v1094 = vmul.f32 %v1071, %v1083
          %v1095 = vmul.f32 %v1072, %v1083
          %v1096 = vmul.f32 %v1073, %v1083
          %v1097 = vmul.f32 %v1074, %v1083
          %v1098 = vmul.f32 %v1075, %v1083
          %v1099 = vmul.f32 %v1076, %v1083
          %v1100 = vmul.f32 %v1077, %v1083
          %1101 = vadd.xlane.f32.xlu0 %v1085
          %v1102 = vpop.xlane.xlu0 %1101
          %1103 = vadd.xlane.f32.xlu0 %v1086
          %v1104 = vpop.xlane.xlu0 %1103
          %1105 = vadd.xlane.f32.xlu0 %v1087
          %v1106 = vpop.xlane.xlu0 %1105
          %1107 = vadd.xlane.f32.xlu0 %v1088
          %v1108 = vpop.xlane.xlu0 %1107
          %1109 = vadd.xlane.f32.xlu0 %v1089
          %v1110 = vpop.xlane.xlu0 %1109
          %1111 = vadd.xlane.f32.xlu0 %v1090
          %v1112 = vpop.xlane.xlu0 %1111
          %1113 = vadd.xlane.f32.xlu0 %v1091
          %v1114 = vpop.xlane.xlu0 %1113
          %1115 = vadd.xlane.f32.xlu0 %v1092
          %v1116 = vpop.xlane.xlu0 %1115
          %1117 = vadd.xlane.f32.xlu0 %v1093
          %v1118 = vpop.xlane.xlu0 %1117
          %1119 = vadd.xlane.f32.xlu0 %v1094
          %v1120 = vpop.xlane.xlu0 %1119
          %1121 = vadd.xlane.f32.xlu0 %v1095
          %v1122 = vpop.xlane.xlu0 %1121
          %1123 = vadd.xlane.f32.xlu0 %v1096
          %v1124 = vpop.xlane.xlu0 %1123
          %1125 = vadd.xlane.f32.xlu0 %v1097
          %v1126 = vpop.xlane.xlu0 %1125
          %1127 = vadd.xlane.f32.xlu0 %v1098
          %v1128 = vpop.xlane.xlu0 %1127
          %1129 = vadd.xlane.f32.xlu0 %v1099
          %v1130 = vpop.xlane.xlu0 %1129
          %1131 = vadd.xlane.f32.xlu0 %v1100
          %v1132 = vpop.xlane.xlu0 %1131
          %v1133 = vlaneseq
          %v1134 = vand.u32 %v1133, 127
          %vm1135 = vcmp.lt.s32.totalorder %v1134, 10
          %v1152 = vlaneseq
          %v1153 = vshrl.u32 %v1152, 7
          %v1154 = vsub.s32 %v1134, %v1153
          %v1155 = vrot.slane %v1102, %v1154
          %v1156 = vadd.s32 %v1134, 4294967288
          %v1157 = vlaneseq
          %v1158 = vshrl.u32 %v1157, 7
          %v1159 = vsub.s32 %v1156, %v1158
          %v1160 = vrot.slane %v1104, %v1159
          %vm1161 = vcmask 130112
          %v1162 = vsel %vm1161, %v1160, %v1155
          %v1163 = vlaneseq
          %v1164 = vshrl.u32 %v1163, 7
          %v1165 = vsub.s32 %v1134, %v1164
          %v1166 = vrot.slane %v1106, %v1165
          %v1167 = vlaneseq
          %v1168 = vshrl.u32 %v1167, 7
          %v1169 = vsub.s32 %v1156, %v1168
          %v1170 = vrot.slane %v1108, %v1169
          %v1171 = vsel %vm1161, %v1170, %v1166
          %v1172 = vlaneseq
          %v1173 = vshrl.u32 %v1172, 7
          %v1174 = vsub.s32 %v1134, %v1173
          %v1175 = vrot.slane %v1110, %v1174
          %v1176 = vlaneseq
          %v1177 = vshrl.u32 %v1176, 7
          %v1178 = vsub.s32 %v1156, %v1177
          %v1179 = vrot.slane %v1112, %v1178
          %v1180 = vsel %vm1161, %v1179, %v1175
          %v1181 = vlaneseq
          %v1182 = vshrl.u32 %v1181, 7
          %v1183 = vsub.s32 %v1134, %v1182
          %v1184 = vrot.slane %v1114, %v1183
          %v1185 = vlaneseq
          %v1186 = vshrl.u32 %v1185, 7
          %v1187 = vsub.s32 %v1156, %v1186
          %v1188 = vrot.slane %v1116, %v1187
          %v1189 = vsel %vm1161, %v1188, %v1184
          %v1190 = vlaneseq
          %v1191 = vshrl.u32 %v1190, 7
          %v1192 = vsub.s32 %v1134, %v1191
          %v1193 = vrot.slane %v1118, %v1192
          %v1194 = vlaneseq
          %v1195 = vshrl.u32 %v1194, 7
          %v1196 = vsub.s32 %v1156, %v1195
          %v1197 = vrot.slane %v1120, %v1196
          %v1198 = vsel %vm1161, %v1197, %v1193
          %v1199 = vlaneseq
          %v1200 = vshrl.u32 %v1199, 7
          %v1201 = vsub.s32 %v1134, %v1200
          %v1202 = vrot.slane %v1122, %v1201
          %v1203 = vlaneseq
          %v1204 = vshrl.u32 %v1203, 7
          %v1205 = vsub.s32 %v1156, %v1204
          %v1206 = vrot.slane %v1124, %v1205
          %v1207 = vsel %vm1161, %v1206, %v1202
          %v1208 = vlaneseq
          %v1209 = vshrl.u32 %v1208, 7
          %v1210 = vsub.s32 %v1134, %v1209
          %v1211 = vrot.slane %v1126, %v1210
          %v1212 = vlaneseq
          %v1213 = vshrl.u32 %v1212, 7
          %v1214 = vsub.s32 %v1156, %v1213
          %v1215 = vrot.slane %v1128, %v1214
          %v1216 = vsel %vm1161, %v1215, %v1211
          %v1217 = vlaneseq
          %v1218 = vshrl.u32 %v1217, 7
          %v1219 = vsub.s32 %v1134, %v1218
          %v1220 = vrot.slane %v1130, %v1219
          %v1221 = vlaneseq
          %v1222 = vshrl.u32 %v1221, 7
          %v1223 = vsub.s32 %v1156, %v1222
          %v1224 = vrot.slane %v1132, %v1223
          %v1225 = vsel %vm1161, %v1224, %v1220
          %vm1226 = vcmask 1041409
          %v1227 = vsel %vm1226, %v1171, %v1162
          %vm1228 = vcmask 1042434
          %v1229 = vsel %vm1228, %v1180, %v1227
          %vm1230 = vcmask 1043459
          %v1231 = vsel %vm1230, %v1189, %v1229
          %vm1232 = vcmask 1044484
          %v1233 = vsel %vm1232, %v1198, %v1231
          %vm1234 = vcmask 1045509
          %v1235 = vsel %vm1234, %v1207, %v1233
          %vm1236 = vcmask 1046534
          %v1237 = vsel %vm1236, %v1216, %v1235
          %vm1238 = vcmask 1047559
          %v1239 = vsel %vm1238, %v1225, %v1237
          %v1241 = vsel %vm1135, %v1239, -1e+30
          %vm1242 = vcmask 130048
          %v1243 = vsel %vm1242, %v1241, -inf
          %1244 = vmax.xlane.f32.xlu0 %v1243
          %v1245 = vpop.xlane.xlu0 %1244
          %v1246 = vsub.f32 %v1241, %v1245
          %v1247 = vmul.f32 %v1246, 1.442695
          %v1248 = vpow.pop %v1247
          %v1249 = vsel %vm1242, %v1248, 0.0
          %1250 = vadd.xlane.f32.xlu0 %v1249
          %v1251 = vpop.xlane.xlu0 %1250
          %v1252 = vrcp.pop %v1251
          %v1253 = vmul.f32 %v1248, %v1252
          %v1254 = vlaneseq
          %v1255 = vshrl.u32 %v1254, 7
          %v1256 = vsub.s32 0, %v1255
          %v1257 = vrot.slane %v1253, %v1256
          %1259 = vbcast.lane.b32.xlu0 %v1257, 256
          %v1260 = vpop.permute.xlu0 %1259
          %s1262 = sor.u32 256, 8
          %1263 = vbcast.lane.b32.xlu0 %v1257, %s1262
          %v1264 = vpop.permute.xlu0 %1263
          %v1265 = vlaneseq
          %v1266 = vshrl.u32 %v1265, 7
          %v1267 = vsub.s32 1, %v1266
          %v1268 = vrot.slane %v1253, %v1267
          %1270 = vbcast.lane.b32.xlu0 %v1268, 256
          %v1271 = vpop.permute.xlu0 %1270
          %s1273 = sor.u32 256, 8
          %1274 = vbcast.lane.b32.xlu0 %v1268, %s1273
          %v1275 = vpop.permute.xlu0 %1274
          %v1276 = vlaneseq
          %v1277 = vshrl.u32 %v1276, 7
          %v1278 = vsub.s32 2, %v1277
          %v1279 = vrot.slane %v1253, %v1278
          %1281 = vbcast.lane.b32.xlu0 %v1279, 256
          %v1282 = vpop.permute.xlu0 %1281
          %s1284 = sor.u32 256, 8
          %1285 = vbcast.lane.b32.xlu0 %v1279, %s1284
          %v1286 = vpop.permute.xlu0 %1285
          %v1287 = vlaneseq
          %v1288 = vshrl.u32 %v1287, 7
          %v1289 = vsub.s32 3, %v1288
          %v1290 = vrot.slane %v1253, %v1289
          %1292 = vbcast.lane.b32.xlu0 %v1290, 256
          %v1293 = vpop.permute.xlu0 %1292
          %s1295 = sor.u32 256, 8
          %1296 = vbcast.lane.b32.xlu0 %v1290, %s1295
          %v1297 = vpop.permute.xlu0 %1296
          %v1298 = vlaneseq
          %v1299 = vshrl.u32 %v1298, 7
          %v1300 = vsub.s32 4, %v1299
          %v1301 = vrot.slane %v1253, %v1300
          %1303 = vbcast.lane.b32.xlu0 %v1301, 256
          %v1304 = vpop.permute.xlu0 %1303
          %s1306 = sor.u32 256, 8
          %1307 = vbcast.lane.b32.xlu0 %v1301, %s1306
          %v1308 = vpop.permute.xlu0 %1307
          %v1309 = vlaneseq
          %v1310 = vshrl.u32 %v1309, 7
          %v1311 = vsub.s32 5, %v1310
          %v1312 = vrot.slane %v1253, %v1311
          %1314 = vbcast.lane.b32.xlu0 %v1312, 256
          %v1315 = vpop.permute.xlu0 %1314
          %s1317 = sor.u32 256, 8
          %1318 = vbcast.lane.b32.xlu0 %v1312, %s1317
          %v1319 = vpop.permute.xlu0 %1318
          %v1320 = vlaneseq
          %v1321 = vshrl.u32 %v1320, 7
          %v1322 = vsub.s32 6, %v1321
          %v1323 = vrot.slane %v1253, %v1322
          %1325 = vbcast.lane.b32.xlu0 %v1323, 256
          %v1326 = vpop.permute.xlu0 %1325
          %s1328 = sor.u32 256, 8
          %1329 = vbcast.lane.b32.xlu0 %v1323, %s1328
          %v1330 = vpop.permute.xlu0 %1329
          %v1331 = vlaneseq
          %v1332 = vshrl.u32 %v1331, 7
          %v1333 = vsub.s32 7, %v1332
          %v1334 = vrot.slane %v1253, %v1333
          %1336 = vbcast.lane.b32.xlu0 %v1334, 256
          %v1337 = vpop.permute.xlu0 %1336
          %s1339 = sor.u32 256, 8
          %1340 = vbcast.lane.b32.xlu0 %v1334, %s1339
          %v1341 = vpop.permute.xlu0 %1340
          %v1342 = vmul.f32 %v1260, %v670
          %v1343 = vmul.f32 %v1264, %v671
          %v1344 = vmul.f32 %v1271, %v672
          %v1345 = vmul.f32 %v1275, %v673
          %v1346 = vmul.f32 %v1282, %v674
          %v1347 = vmul.f32 %v1286, %v675
          %v1348 = vmul.f32 %v1293, %v676
          %v1349 = vmul.f32 %v1297, %v677
          %v1350 = vmul.f32 %v1304, %v678
          %v1351 = vmul.f32 %v1308, %v679
          %v1352 = vmul.f32 %v1315, %v680
          %v1353 = vmul.f32 %v1319, %v681
          %v1354 = vmul.f32 %v1326, %v682
          %v1355 = vmul.f32 %v1330, %v683
          %v1356 = vmul.f32 %v1337, %v684
          %v1357 = vmul.f32 %v1341, %v685
          %v1358 = vadd.f32 %v1342, %v1343
          %v1359 = vrot.slane %v1358, 4
          %v1360 = vadd.f32 %v1358, %v1359
          %v1361 = vrot.slane %v1360, 2
          %v1362 = vadd.f32 %v1360, %v1361
          %v1363 = vrot.slane %v1362, 1
          %v1364 = vadd.f32 %v1362, %v1363
          %v1365 = vadd.f32 %v1344, %v1345
          %v1366 = vrot.slane %v1365, 4
          %v1367 = vadd.f32 %v1365, %v1366
          %v1368 = vrot.slane %v1367, 2
          %v1369 = vadd.f32 %v1367, %v1368
          %v1370 = vrot.slane %v1369, 1
          %v1371 = vadd.f32 %v1369, %v1370
          %v1372 = vadd.f32 %v1346, %v1347
          %v1373 = vrot.slane %v1372, 4
          %v1374 = vadd.f32 %v1372, %v1373
          %v1375 = vrot.slane %v1374, 2
          %v1376 = vadd.f32 %v1374, %v1375
          %v1377 = vrot.slane %v1376, 1
          %v1378 = vadd.f32 %v1376, %v1377
          %v1379 = vadd.f32 %v1348, %v1349
          %v1380 = vrot.slane %v1379, 4
          %v1381 = vadd.f32 %v1379, %v1380
          %v1382 = vrot.slane %v1381, 2
          %v1383 = vadd.f32 %v1381, %v1382
          %v1384 = vrot.slane %v1383, 1
          %v1385 = vadd.f32 %v1383, %v1384
          %v1386 = vadd.f32 %v1350, %v1351
          %v1387 = vrot.slane %v1386, 4
          %v1388 = vadd.f32 %v1386, %v1387
          %v1389 = vrot.slane %v1388, 2
          %v1390 = vadd.f32 %v1388, %v1389
          %v1391 = vrot.slane %v1390, 1
          %v1392 = vadd.f32 %v1390, %v1391
          %v1393 = vadd.f32 %v1352, %v1353
          %v1394 = vrot.slane %v1393, 4
          %v1395 = vadd.f32 %v1393, %v1394
          %v1396 = vrot.slane %v1395, 2
          %v1397 = vadd.f32 %v1395, %v1396
          %v1398 = vrot.slane %v1397, 1
          %v1399 = vadd.f32 %v1397, %v1398
          %v1400 = vadd.f32 %v1354, %v1355
          %v1401 = vrot.slane %v1400, 4
          %v1402 = vadd.f32 %v1400, %v1401
          %v1403 = vrot.slane %v1402, 2
          %v1404 = vadd.f32 %v1402, %v1403
          %v1405 = vrot.slane %v1404, 1
          %v1406 = vadd.f32 %v1404, %v1405
          %v1407 = vadd.f32 %v1356, %v1357
          %v1408 = vrot.slane %v1407, 4
          %v1409 = vadd.f32 %v1407, %v1408
          %v1410 = vrot.slane %v1409, 2
          %v1411 = vadd.f32 %v1409, %v1410
          %v1412 = vrot.slane %v1411, 1
          %v1413 = vadd.f32 %v1411, %v1412
          %v1414 = vld [vmem:[%s0] sm:$0xff]
          %v1423 = vsel %vm1226, %v1371, %v1364
          %v1424 = vsel %vm1228, %v1378, %v1423
          %v1425 = vsel %vm1230, %v1385, %v1424
          %v1426 = vsel %vm1232, %v1392, %v1425
          %v1427 = vsel %vm1234, %v1399, %v1426
          %v1428 = vsel %vm1236, %v1406, %v1427
          %v1429 = vsel %vm1238, %v1413, %v1428
          %v1431 = vld [vmem:[#allocation13] sm:$0xff]
          %v1432 = vld [vmem:[#allocation13 + $0x8] sm:$0xff]
          %v1433 = vld [vmem:[#allocation13 + $0x10] sm:$0xff]
          %v1434 = vld [vmem:[#allocation13 + $0x18] sm:$0xff]
          %v1435 = vld [vmem:[#allocation13 + $0x20] sm:$0xff]
          %v1436 = vld [vmem:[#allocation13 + $0x28] sm:$0xff]
          %v1437 = vld [vmem:[#allocation13 + $0x30] sm:$0xff]
          %v1438 = vld [vmem:[#allocation13 + $0x38] sm:$0xff]
          %v1439 = vld [vmem:[#allocation13 + $0x40] sm:$0xff]
          %v1440 = vld [vmem:[#allocation13 + $0x48] sm:$0xff]
          %v1441 = vld [vmem:[#allocation13 + $0x50] sm:$0xff]
          %v1442 = vld [vmem:[#allocation13 + $0x58] sm:$0xff]
          %v1443 = vld [vmem:[#allocation13 + $0x60] sm:$0xff]
          %v1444 = vld [vmem:[#allocation13 + $0x68] sm:$0xff]
          %v1445 = vld [vmem:[#allocation13 + $0x70] sm:$0xff]
          %v1446 = vld [vmem:[#allocation13 + $0x78] sm:$0xff]
          %v1447 = vld [vmem:[#allocation13 + $0x80] sm:$0xff]
          %v1448 = vld [vmem:[#allocation13 + $0x88] sm:$0xff]
          %v1449 = vld [vmem:[#allocation13 + $0x90] sm:$0xff]
          %v1450 = vld [vmem:[#allocation13 + $0x98] sm:$0xff]
          %v1451 = vld [vmem:[#allocation13 + $0xa0] sm:$0xff]
          %v1452 = vld [vmem:[#allocation13 + $0xa8] sm:$0xff]
          %v1453 = vld [vmem:[#allocation13 + $0xb0] sm:$0xff]
          %v1454 = vld [vmem:[#allocation13 + $0xb8] sm:$0xff]
          %v1455 = vld [vmem:[#allocation13 + $0xc0] sm:$0xff]
          %v1456 = vld [vmem:[#allocation13 + $0xc8] sm:$0xff]
          %v1457 = vld [vmem:[#allocation13 + $0xd0] sm:$0xff]
          %v1458 = vld [vmem:[#allocation13 + $0xd8] sm:$0xff]
          %v1459 = vld [vmem:[#allocation13 + $0xe0] sm:$0xff]
          %v1460 = vld [vmem:[#allocation13 + $0xe8] sm:$0xff]
          %v1461 = vld [vmem:[#allocation13 + $0xf0] sm:$0xff]
          %v1462 = vld [vmem:[#allocation13 + $0xf8] sm:$0xff]
          %v1463 = vld [vmem:[#allocation13 + $0x100] sm:$0xff]
          %v1464 = vld [vmem:[#allocation13 + $0x108] sm:$0xff]
          %v1465 = vld [vmem:[#allocation13 + $0x110] sm:$0xff]
          %v1466 = vld [vmem:[#allocation13 + $0x118] sm:$0xff]
          %v1467 = vld [vmem:[#allocation13 + $0x120] sm:$0xff]
          %v1468 = vld [vmem:[#allocation13 + $0x128] sm:$0xff]
          %v1469 = vld [vmem:[#allocation13 + $0x130] sm:$0xff]
          %v1470 = vld [vmem:[#allocation13 + $0x138] sm:$0xff]
          %v1471 = vld [vmem:[#allocation13 + $0x140] sm:$0xff]
          %v1472 = vld [vmem:[#allocation13 + $0x148] sm:$0xff]
          %v1473 = vld [vmem:[#allocation13 + $0x150] sm:$0xff]
          %v1474 = vld [vmem:[#allocation13 + $0x158] sm:$0xff]
          %v1475 = vld [vmem:[#allocation13 + $0x160] sm:$0xff]
          %v1476 = vld [vmem:[#allocation13 + $0x168] sm:$0xff]
          %v1477 = vld [vmem:[#allocation13 + $0x170] sm:$0xff]
          %v1478 = vld [vmem:[#allocation13 + $0x178] sm:$0xff]
          %v1479 = vld [vmem:[#allocation13 + $0x180] sm:$0xff]
          %v1480 = vld [vmem:[#allocation13 + $0x188] sm:$0xff]
          %v1481 = vld [vmem:[#allocation13 + $0x190] sm:$0xff]
          %v1482 = vld [vmem:[#allocation13 + $0x198] sm:$0xff]
          %v1483 = vld [vmem:[#allocation13 + $0x1a0] sm:$0xff]
          %v1484 = vld [vmem:[#allocation13 + $0x1a8] sm:$0xff]
          %v1485 = vld [vmem:[#allocation13 + $0x1b0] sm:$0xff]
          %v1486 = vld [vmem:[#allocation13 + $0x1b8] sm:$0xff]
          %v1487 = vld [vmem:[#allocation13 + $0x1c0] sm:$0xff]
          %v1488 = vld [vmem:[#allocation13 + $0x1c8] sm:$0xff]
          %v1489 = vld [vmem:[#allocation13 + $0x1d0] sm:$0xff]
          %v1490 = vld [vmem:[#allocation13 + $0x1d8] sm:$0xff]
          %v1491 = vld [vmem:[#allocation13 + $0x1e0] sm:$0xff]
          %v1492 = vld [vmem:[#allocation13 + $0x1e8] sm:$0xff]
          %v1493 = vld [vmem:[#allocation13 + $0x1f0] sm:$0xff]
          %v1494 = vld [vmem:[#allocation13 + $0x1f8] sm:$0xff]
          %v1495 = vld [vmem:[#allocation13 + $0x200] sm:$0xff]
          %v1496 = vld [vmem:[#allocation13 + $0x208] sm:$0xff]
          %v1497 = vld [vmem:[#allocation13 + $0x210] sm:$0xff]
          %v1498 = vld [vmem:[#allocation13 + $0x218] sm:$0xff]
          %v1499 = vld [vmem:[#allocation13 + $0x220] sm:$0xff]
          %v1500 = vld [vmem:[#allocation13 + $0x228] sm:$0xff]
          %v1501 = vld [vmem:[#allocation13 + $0x230] sm:$0xff]
          %v1502 = vld [vmem:[#allocation13 + $0x238] sm:$0xff]
          %v1503 = vld [vmem:[#allocation13 + $0x240] sm:$0xff]
          %v1504 = vld [vmem:[#allocation13 + $0x248] sm:$0xff]
          %v1505 = vld [vmem:[#allocation13 + $0x250] sm:$0xff]
          %v1506 = vld [vmem:[#allocation13 + $0x258] sm:$0xff]
          %v1507 = vld [vmem:[#allocation13 + $0x260] sm:$0xff]
          %v1508 = vld [vmem:[#allocation13 + $0x268] sm:$0xff]
          %v1509 = vld [vmem:[#allocation13 + $0x270] sm:$0xff]
          %v1510 = vld [vmem:[#allocation13 + $0x278] sm:$0xff]
          %v1511 = vld [vmem:[#allocation13 + $0x280] sm:$0xff]
          %v1512 = vld [vmem:[#allocation13 + $0x288] sm:$0xff]
          %v1513 = vld [vmem:[#allocation13 + $0x290] sm:$0xff]
          %v1514 = vld [vmem:[#allocation13 + $0x298] sm:$0xff]
          %v1515 = vld [vmem:[#allocation13 + $0x2a0] sm:$0xff]
          %v1516 = vld [vmem:[#allocation13 + $0x2a8] sm:$0xff]
          %v1517 = vld [vmem:[#allocation13 + $0x2b0] sm:$0xff]
          %v1518 = vld [vmem:[#allocation13 + $0x2b8] sm:$0xff]
          %v1519 = vld [vmem:[#allocation13 + $0x2c0] sm:$0xff]
          %v1520 = vld [vmem:[#allocation13 + $0x2c8] sm:$0xff]
          %v1521 = vld [vmem:[#allocation13 + $0x2d0] sm:$0xff]
          %v1522 = vld [vmem:[#allocation13 + $0x2d8] sm:$0xff]
          %v1523 = vld [vmem:[#allocation13 + $0x2e0] sm:$0xff]
          %v1524 = vld [vmem:[#allocation13 + $0x2e8] sm:$0xff]
          %v1525 = vld [vmem:[#allocation13 + $0x2f0] sm:$0xff]
          %v1526 = vld [vmem:[#allocation13 + $0x2f8] sm:$0xff]
          %v1527 = vld [vmem:[#allocation16] sm:$0x7]
          %v1529 = vlaneseq
          %v1530 = vshrl.u32 %v1529, 7
          %v1531 = vsub.s32 0, %v1530
          %v1532 = vrot.slane %v1527, %v1531
          %v1533 = vlaneseq
          %v1534 = vshrl.u32 %v1533, 7
          %v1535 = vsub.s32 1, %v1534
          %v1536 = vrot.slane %v1527, %v1535
          %v1537 = vlaneseq
          %v1538 = vshrl.u32 %v1537, 7
          %v1539 = vsub.s32 2, %v1538
          %v1540 = vrot.slane %v1527, %v1539
          %1544 = vmatprep.subr.mxu0 %v1477
          %1545 = vmatpush1.msra.mxu0 %v1476
          %1546 = vmatprep.subr.mxu0 %v1474
          %1547 = vmatpush1.msra.mxu0 %v1473
          %1548 = vmatprep.subr.mxu0 %v1471
          %1549 = vmatpush1.msra.mxu0 %v1470
          %1550 = vmatprep.subr.mxu0 %v1468
          %1551 = vmatpush1.msra.mxu0 %v1467
          %1552 = vmatprep.subr.mxu0 %v1465
          %1553 = vmatpush1.msra.mxu0 %v1464
          %1554 = vmatprep.subr.mxu0 %v1462
          %1555 = vmatpush1.msra.mxu0 %v1461
          %1556 = vmatprep.subr.mxu0 %v1459
          %1557 = vmatpush1.msra.mxu0 %v1458
          %1558 = vmatprep.subr.mxu0 %v1456
          %1559 = vmatpush1.msra.mxu0 %v1455
          %1560 = vmatprep.subr.mxu0 %v1453
          %1561 = vmatpush1.msra.mxu0 %v1452
          %1562 = vmatprep.subr.mxu0 %v1450
          %1563 = vmatpush1.msra.mxu0 %v1449
          %1564 = vmatprep.subr.mxu0 %v1447
          %1565 = vmatpush1.msra.mxu0 %v1446
          %1566 = vmatprep.subr.mxu0 %v1444
          %1567 = vmatpush1.msra.mxu0 %v1443
          %1568 = vmatprep.subr.mxu0 %v1441
          %1569 = vmatpush1.msra.mxu0 %v1440
          %1570 = vmatprep.subr.mxu0 %v1438
          %1571 = vmatpush1.msra.mxu0 %v1437
          %1572 = vmatprep.subr.mxu0 %v1435
          %1573 = vmatpush1.msra.mxu0 %v1434
          %1574 = vmatprep.subr.mxu0 %v1432
          %1575 = vmatpush1.msra.mxu0 %v1431
          %1576 = vmatprep.subr.mxu0 %v1525
          %1577 = vmatpush2.msra.mxu0 %v1524
          %1578 = vmatprep.subr.mxu0 %v1522
          %1579 = vmatpush2.msra.mxu0 %v1521
          %1580 = vmatprep.subr.mxu0 %v1519
          %1581 = vmatpush2.msra.mxu0 %v1518
          %1582 = vmatprep.subr.mxu0 %v1516
          %1583 = vmatpush2.msra.mxu0 %v1515
          %1584 = vmatprep.subr.mxu0 %v1513
          %1585 = vmatpush2.msra.mxu0 %v1512
          %1586 = vmatprep.subr.mxu0 %v1510
          %1587 = vmatpush2.msra.mxu0 %v1509
          %1588 = vmatprep.subr.mxu0 %v1507
          %1589 = vmatpush2.msra.mxu0 %v1506
          %1590 = vmatprep.subr.mxu0 %v1504
          %1591 = vmatpush2.msra.mxu0 %v1503
          %1592 = vmatprep.subr.mxu0 %v1501
          %1593 = vmatpush2.msra.mxu0 %v1500
          %1594 = vmatprep.subr.mxu0 %v1498
          %1595 = vmatpush2.msra.mxu0 %v1497
          %1596 = vmatprep.subr.mxu0 %v1495
          %1597 = vmatpush2.msra.mxu0 %v1494
          %1598 = vmatprep.subr.mxu0 %v1492
          %1599 = vmatpush2.msra.mxu0 %v1491
          %1600 = vmatprep.subr.mxu0 %v1489
          %1601 = vmatpush2.msra.mxu0 %v1488
          %1602 = vmatprep.subr.mxu0 %v1486
          %1603 = vmatpush2.msra.mxu0 %v1485
          %1604 = vmatprep.subr.mxu0 %v1483
          %1605 = vmatpush2.msra.mxu0 %v1482
          %1606 = vmatprep.subr.mxu0 %v1480
          %1607 = vmatpush2.msra.mxu0 %v1479
          %1608 = vmatprep.mubr.f32.mxu0 %v1429
          %1609 = vmatmul.mubr.f32.gmra.mxu0 %v1414
          %v1610 = vpop.f32.mrf.mxu0
          %v1611 = vadd.f32 %v1532, %v1610
          %v1612 = vpop.f32.mrf.mxu0
          %v1613 = vadd.f32 %v1536, %v1612
          %1614 = vdwg.mxu0
          %1615 = vmatprep.subr.mxu0 0.0
          %1616 = vmatpush1.msra.mxu0 %v1478
          %1617 = vmatprep.subr.mxu0 0.0
          %1618 = vmatpush1.msra.mxu0 %v1475
          %1619 = vmatprep.subr.mxu0 0.0
          %1620 = vmatpush1.msra.mxu0 %v1472
          %1621 = vmatprep.subr.mxu0 0.0
          %1622 = vmatpush1.msra.mxu0 %v1469
          %1623 = vmatprep.subr.mxu0 0.0
          %1624 = vmatpush1.msra.mxu0 %v1466
          %1625 = vmatprep.subr.mxu0 0.0
          %1626 = vmatpush1.msra.mxu0 %v1463
          %1627 = vmatprep.subr.mxu0 0.0
          %1628 = vmatpush1.msra.mxu0 %v1460
          %1629 = vmatprep.subr.mxu0 0.0
          %1630 = vmatpush1.msra.mxu0 %v1457
          %1631 = vmatprep.subr.mxu0 0.0
          %1632 = vmatpush1.msra.mxu0 %v1454
          %1633 = vmatprep.subr.mxu0 0.0
          %1634 = vmatpush1.msra.mxu0 %v1451
          %1635 = vmatprep.subr.mxu0 0.0
          %1636 = vmatpush1.msra.mxu0 %v1448
          %1637 = vmatprep.subr.mxu0 0.0
          %1638 = vmatpush1.msra.mxu0 %v1445
          %1639 = vmatprep.subr.mxu0 0.0
          %1640 = vmatpush1.msra.mxu0 %v1442
          %1641 = vmatprep.subr.mxu0 0.0
          %1642 = vmatpush1.msra.mxu0 %v1439
          %1643 = vmatprep.subr.mxu0 0.0
          %1644 = vmatpush1.msra.mxu0 %v1436
          %1645 = vmatprep.subr.mxu0 0.0
          %1646 = vmatpush1.msra.mxu0 %v1433
          %1647 = vmatprep.subr.mxu0 0.0
          %1648 = vmatpush2.msra.mxu0 %v1526
          %1649 = vmatprep.subr.mxu0 0.0
          %1650 = vmatpush2.msra.mxu0 %v1523
          %1651 = vmatprep.subr.mxu0 0.0
          %1652 = vmatpush2.msra.mxu0 %v1520
          %1653 = vmatprep.subr.mxu0 0.0
          %1654 = vmatpush2.msra.mxu0 %v1517
          %1655 = vmatprep.subr.mxu0 0.0
          %1656 = vmatpush2.msra.mxu0 %v1514
          %1657 = vmatprep.subr.mxu0 0.0
          %1658 = vmatpush2.msra.mxu0 %v1511
          %1659 = vmatprep.subr.mxu0 0.0
          %1660 = vmatpush2.msra.mxu0 %v1508
          %1661 = vmatprep.subr.mxu0 0.0
          %1662 = vmatpush2.msra.mxu0 %v1505
          %1663 = vmatprep.subr.mxu0 0.0
          %1664 = vmatpush2.msra.mxu0 %v1502
          %1665 = vmatprep.subr.mxu0 0.0
          %1666 = vmatpush2.msra.mxu0 %v1499
          %1667 = vmatprep.subr.mxu0 0.0
          %1668 = vmatpush2.msra.mxu0 %v1496
          %1669 = vmatprep.subr.mxu0 0.0
          %1670 = vmatpush2.msra.mxu0 %v1493
          %1671 = vmatprep.subr.mxu0 0.0
          %1672 = vmatpush2.msra.mxu0 %v1490
          %1673 = vmatprep.subr.mxu0 0.0
          %1674 = vmatpush2.msra.mxu0 %v1487
          %1675 = vmatprep.subr.mxu0 0.0
          %1676 = vmatpush2.msra.mxu0 %v1484
          %1677 = vmatprep.subr.mxu0 0.0
          %1678 = vmatpush2.msra.mxu0 %v1481
          %1679 = vmatprep.mubr.f32.mxu0 %v1429
          %1680 = vmatmul.mubr.f32.gmra.mxu0 %v1414
          %v1681 = vpop.f32.mrf.mxu0
          %v1682 = vadd.f32 %v1540, %v1681
          %v1683 = vpop.f32.mrf.mxu0
          %1684 = vdwg.mxu0
          %v1685 = vld [vmem:[#allocation15] sm:$0xff]
          %v1686 = vld [vmem:[#allocation15 + $0x8] sm:$0xff]
          %v1687 = vld [vmem:[#allocation15 + $0x10] sm:$0xff]
          %v1688 = vld [vmem:[#allocation15 + $0x18] sm:$0xff]
          %v1689 = vld [vmem:[#allocation15 + $0x20] sm:$0xff]
          %v1690 = vld [vmem:[#allocation15 + $0x28] sm:$0xff]
          %v1691 = vld [vmem:[#allocation15 + $0x30] sm:$0xff]
          %v1692 = vld [vmem:[#allocation15 + $0x38] sm:$0xff]
          %v1693 = vld [vmem:[#allocation15 + $0x40] sm:$0xff]
          %v1694 = vld [vmem:[#allocation15 + $0x48] sm:$0xff]
          %v1695 = vld [vmem:[#allocation15 + $0x50] sm:$0xff]
          %v1696 = vld [vmem:[#allocation15 + $0x58] sm:$0xff]
          %v1697 = vld [vmem:[#allocation15 + $0x60] sm:$0xff]
          %v1698 = vld [vmem:[#allocation15 + $0x68] sm:$0xff]
          %v1699 = vld [vmem:[#allocation15 + $0x70] sm:$0xff]
          %v1700 = vld [vmem:[#allocation15 + $0x78] sm:$0xff]
          %v1701 = vld [vmem:[#allocation15 + $0x80] sm:$0xff]
          %v1702 = vld [vmem:[#allocation15 + $0x88] sm:$0xff]
          %v1703 = vld [vmem:[#allocation15 + $0x90] sm:$0xff]
          %v1704 = vld [vmem:[#allocation15 + $0x98] sm:$0xff]
          %v1705 = vld [vmem:[#allocation15 + $0xa0] sm:$0xff]
          %v1706 = vld [vmem:[#allocation15 + $0xa8] sm:$0xff]
          %v1707 = vld [vmem:[#allocation15 + $0xb0] sm:$0xff]
          %v1708 = vld [vmem:[#allocation15 + $0xb8] sm:$0xff]
          %v1709 = vld [vmem:[#allocation15 + $0xc0] sm:$0xff]
          %v1710 = vld [vmem:[#allocation15 + $0xc8] sm:$0xff]
          %v1711 = vld [vmem:[#allocation15 + $0xd0] sm:$0xff]
          %v1712 = vld [vmem:[#allocation15 + $0xd8] sm:$0xff]
          %v1713 = vld [vmem:[#allocation15 + $0xe0] sm:$0xff]
          %v1714 = vld [vmem:[#allocation15 + $0xe8] sm:$0xff]
          %v1715 = vld [vmem:[#allocation15 + $0xf0] sm:$0xff]
          %v1716 = vld [vmem:[#allocation15 + $0xf8] sm:$0xff]
          %v1717 = vld [vmem:[#allocation15 + $0x100] sm:$0xff]
          %v1718 = vld [vmem:[#allocation15 + $0x108] sm:$0xff]
          %v1719 = vld [vmem:[#allocation15 + $0x110] sm:$0xff]
          %v1720 = vld [vmem:[#allocation15 + $0x118] sm:$0xff]
          %v1721 = vld [vmem:[#allocation15 + $0x120] sm:$0xff]
          %v1722 = vld [vmem:[#allocation15 + $0x128] sm:$0xff]
          %v1723 = vld [vmem:[#allocation15 + $0x130] sm:$0xff]
          %v1724 = vld [vmem:[#allocation15 + $0x138] sm:$0xff]
          %v1725 = vld [vmem:[#allocation15 + $0x140] sm:$0xff]
          %v1726 = vld [vmem:[#allocation15 + $0x148] sm:$0xff]
          %v1727 = vld [vmem:[#allocation15 + $0x150] sm:$0xff]
          %v1728 = vld [vmem:[#allocation15 + $0x158] sm:$0xff]
          %v1729 = vld [vmem:[#allocation15 + $0x160] sm:$0xff]
          %v1730 = vld [vmem:[#allocation15 + $0x168] sm:$0xff]
          %v1731 = vld [vmem:[#allocation15 + $0x170] sm:$0xff]
          %v1732 = vld [vmem:[#allocation15 + $0x178] sm:$0xff]
          %v1733 = vld [vmem:[#allocation18] sm:$0x7]
          %v1735 = vlaneseq
          %v1736 = vshrl.u32 %v1735, 7
          %v1737 = vsub.s32 0, %v1736
          %v1738 = vrot.slane %v1733, %v1737
          %v1739 = vlaneseq
          %v1740 = vshrl.u32 %v1739, 7
          %v1741 = vsub.s32 1, %v1740
          %v1742 = vrot.slane %v1733, %v1741
          %v1743 = vlaneseq
          %v1744 = vshrl.u32 %v1743, 7
          %v1745 = vsub.s32 2, %v1744
          %v1746 = vrot.slane %v1733, %v1745
          %1750 = vmatprep.subr.mxu0 %v1731
          %1751 = vmatpush1.msra.mxu0 %v1730
          %1752 = vmatprep.subr.mxu0 %v1728
          %1753 = vmatpush1.msra.mxu0 %v1727
          %1754 = vmatprep.subr.mxu0 %v1725
          %1755 = vmatpush1.msra.mxu0 %v1724
          %1756 = vmatprep.subr.mxu0 %v1722
          %1757 = vmatpush1.msra.mxu0 %v1721
          %1758 = vmatprep.subr.mxu0 %v1719
          %1759 = vmatpush1.msra.mxu0 %v1718
          %1760 = vmatprep.subr.mxu0 %v1716
          %1761 = vmatpush1.msra.mxu0 %v1715
          %1762 = vmatprep.subr.mxu0 %v1713
          %1763 = vmatpush1.msra.mxu0 %v1712
          %1764 = vmatprep.subr.mxu0 %v1710
          %1765 = vmatpush1.msra.mxu0 %v1709
          %1766 = vmatprep.subr.mxu0 %v1707
          %1767 = vmatpush1.msra.mxu0 %v1706
          %1768 = vmatprep.subr.mxu0 %v1704
          %1769 = vmatpush1.msra.mxu0 %v1703
          %1770 = vmatprep.subr.mxu0 %v1701
          %1771 = vmatpush1.msra.mxu0 %v1700
          %1772 = vmatprep.subr.mxu0 %v1698
          %1773 = vmatpush1.msra.mxu0 %v1697
          %1774 = vmatprep.subr.mxu0 %v1695
          %1775 = vmatpush1.msra.mxu0 %v1694
          %1776 = vmatprep.subr.mxu0 %v1692
          %1777 = vmatpush1.msra.mxu0 %v1691
          %1778 = vmatprep.subr.mxu0 %v1689
          %1779 = vmatpush1.msra.mxu0 %v1688
          %1780 = vmatprep.subr.mxu0 %v1686
          %1781 = vmatpush1.msra.mxu0 %v1685
          %1782 = vmatprep.subr.mxu0 0.0
          %1783 = vmatpush2.msra.mxu0 0.0
          %1784 = vmatprep.subr.mxu0 0.0
          %1785 = vmatpush2.msra.mxu0 0.0
          %1786 = vmatprep.subr.mxu0 0.0
          %1787 = vmatpush2.msra.mxu0 0.0
          %1788 = vmatprep.subr.mxu0 0.0
          %1789 = vmatpush2.msra.mxu0 0.0
          %1790 = vmatprep.subr.mxu0 0.0
          %1791 = vmatpush2.msra.mxu0 0.0
          %1792 = vmatprep.subr.mxu0 0.0
          %1793 = vmatpush2.msra.mxu0 0.0
          %1794 = vmatprep.subr.mxu0 0.0
          %1795 = vmatpush2.msra.mxu0 0.0
          %1796 = vmatprep.subr.mxu0 0.0
          %1797 = vmatpush2.msra.mxu0 0.0
          %1798 = vmatprep.subr.mxu0 0.0
          %1799 = vmatpush2.msra.mxu0 0.0
          %1800 = vmatprep.subr.mxu0 0.0
          %1801 = vmatpush2.msra.mxu0 0.0
          %1802 = vmatprep.subr.mxu0 0.0
          %1803 = vmatpush2.msra.mxu0 0.0
          %1804 = vmatprep.subr.mxu0 0.0
          %1805 = vmatpush2.msra.mxu0 0.0
          %1806 = vmatprep.subr.mxu0 0.0
          %1807 = vmatpush2.msra.mxu0 0.0
          %1808 = vmatprep.subr.mxu0 0.0
          %1809 = vmatpush2.msra.mxu0 0.0
          %1810 = vmatprep.subr.mxu0 0.0
          %1811 = vmatpush2.msra.mxu0 0.0
          %1812 = vmatprep.subr.mxu0 0.0
          %1813 = vmatpush2.msra.mxu0 0.0
          %1814 = vmatprep.mubr.f32.mxu0 0.0
          %1815 = vmatmul.mubr.f32.gmra.mxu0 %v669
          %v1816 = vpop.f32.mrf.mxu0
          %v1817 = vadd.f32 %v1738, %v1816
          %v1818 = vpop.f32.mrf.mxu0
          %v1819 = vadd.f32 %v1742, %v1818
          %1820 = vdwg.mxu0
          %1821 = vmatprep.subr.mxu0 0.0
          %1822 = vmatpush1.msra.mxu0 %v1732
          %1823 = vmatprep.subr.mxu0 0.0
          %1824 = vmatpush1.msra.mxu0 %v1729
          %1825 = vmatprep.subr.mxu0 0.0
          %1826 = vmatpush1.msra.mxu0 %v1726
          %1827 = vmatprep.subr.mxu0 0.0
          %1828 = vmatpush1.msra.mxu0 %v1723
          %1829 = vmatprep.subr.mxu0 0.0
          %1830 = vmatpush1.msra.mxu0 %v1720
          %1831 = vmatprep.subr.mxu0 0.0
          %1832 = vmatpush1.msra.mxu0 %v1717
          %1833 = vmatprep.subr.mxu0 0.0
          %1834 = vmatpush1.msra.mxu0 %v1714
          %1835 = vmatprep.subr.mxu0 0.0
          %1836 = vmatpush1.msra.mxu0 %v1711
          %1837 = vmatprep.subr.mxu0 0.0
          %1838 = vmatpush1.msra.mxu0 %v1708
          %1839 = vmatprep.subr.mxu0 0.0
          %1840 = vmatpush1.msra.mxu0 %v1705
          %1841 = vmatprep.subr.mxu0 0.0
          %1842 = vmatpush1.msra.mxu0 %v1702
          %1843 = vmatprep.subr.mxu0 0.0
          %1844 = vmatpush1.msra.mxu0 %v1699
          %1845 = vmatprep.subr.mxu0 0.0
          %1846 = vmatpush1.msra.mxu0 %v1696
          %1847 = vmatprep.subr.mxu0 0.0
          %1848 = vmatpush1.msra.mxu0 %v1693
          %1849 = vmatprep.subr.mxu0 0.0
          %1850 = vmatpush1.msra.mxu0 %v1690
          %1851 = vmatprep.subr.mxu0 0.0
          %1852 = vmatpush1.msra.mxu0 %v1687
          %1853 = vmatprep.subr.mxu0 0.0
          %1854 = vmatpush2.msra.mxu0 0.0
          %1855 = vmatprep.subr.mxu0 0.0
          %1856 = vmatpush2.msra.mxu0 0.0
          %1857 = vmatprep.subr.mxu0 0.0
          %1858 = vmatpush2.msra.mxu0 0.0
          %1859 = vmatprep.subr.mxu0 0.0
          %1860 = vmatpush2.msra.mxu0 0.0
          %1861 = vmatprep.subr.mxu0 0.0
          %1862 = vmatpush2.msra.mxu0 0.0
          %1863 = vmatprep.subr.mxu0 0.0
          %1864 = vmatpush2.msra.mxu0 0.0
          %1865 = vmatprep.subr.mxu0 0.0
          %1866 = vmatpush2.msra.mxu0 0.0
          %1867 = vmatprep.subr.mxu0 0.0
          %1868 = vmatpush2.msra.mxu0 0.0
          %1869 = vmatprep.subr.mxu0 0.0
          %1870 = vmatpush2.msra.mxu0 0.0
          %1871 = vmatprep.subr.mxu0 0.0
          %1872 = vmatpush2.msra.mxu0 0.0
          %1873 = vmatprep.subr.mxu0 0.0
          %1874 = vmatpush2.msra.mxu0 0.0
          %1875 = vmatprep.subr.mxu0 0.0
          %1876 = vmatpush2.msra.mxu0 0.0
          %1877 = vmatprep.subr.mxu0 0.0
          %1878 = vmatpush2.msra.mxu0 0.0
          %1879 = vmatprep.subr.mxu0 0.0
          %1880 = vmatpush2.msra.mxu0 0.0
          %1881 = vmatprep.subr.mxu0 0.0
          %1882 = vmatpush2.msra.mxu0 0.0
          %1883 = vmatprep.subr.mxu0 0.0
          %1884 = vmatpush2.msra.mxu0 0.0
          %1885 = vmatprep.mubr.f32.mxu0 0.0
          %1886 = vmatmul.mubr.f32.gmra.mxu0 %v669
          %v1887 = vpop.f32.mrf.mxu0
          %v1888 = vadd.f32 %v1746, %v1887
          %v1889 = vpop.f32.mrf.mxu0
          %1890 = vdwg.mxu0
          %v1891 = vadd.f32 %v1611, %v1817
          %v1892 = vxor.u32 %v1891, 2147483648
          %v1893 = vmul.f32 %v1892, 1.442695
          %v1894 = vpow.pop %v1893
          %v1895 = vadd.f32 %v1894, 1.0
          %v1896 = vrcp.pop %v1895
          %v1897 = vmul.f32 1.0, %v1896
          %v1898 = vadd.f32 %v1613, %v1819
          %v1899 = vxor.u32 %v1898, 2147483648
          %v1900 = vmul.f32 %v1899, 1.442695
          %v1901 = vpow.pop %v1900
          %v1902 = vadd.f32 %v1901, 1.0
          %v1903 = vrcp.pop %v1902
          %v1904 = vmul.f32 1.0, %v1903
          %v1905 = vmul.f32 %v1897, %v1888
          %v1906 = vadd.f32 %v1682, %v1905
          %v1907 = vtanh.pop %v1906
          %v1908 = vsub.f32 1.0, %v1904
          %v1909 = vmul.f32 %v1908, %v1907
          %v1910 = vmul.f32 %v1904, %v669
          %v1911 = vadd.f32 %v1909, %v1910
          %v1912 = vpack.c.bf16 %v1911, %v1911
          %1913 = vst [vmem:[#allocation2] sm:$0xf] %v1912
          %v1914 = vpack.c.bf16 %v1364, %v1364
          %v1915 = vpack.c.bf16 %v1371, %v1371
          %v1916 = vpack.c.bf16 %v1378, %v1378
          %v1917 = vpack.c.bf16 %v1385, %v1385
          %v1918 = vpack.c.bf16 %v1392, %v1392
          %v1919 = vpack.c.bf16 %v1399, %v1399
          %v1920 = vpack.c.bf16 %v1406, %v1406
          %v1921 = vpack.c.bf16 %v1413, %v1413
          %v1930 = vunpack.c.l.b16 %v1914
          %v1931 = vunpack.c.l.b16 %v1915
          %v1932 = vunpack.c.l.b16 %v1916
          %v1933 = vunpack.c.l.b16 %v1917
          %v1934 = vunpack.c.l.b16 %v1918
          %v1935 = vunpack.c.l.b16 %v1919
          %v1936 = vunpack.c.l.b16 %v1920
          %v1937 = vunpack.c.l.b16 %v1921
          %v1938 = vpack.c.b16 %v1930, %v1930
          %v1939 = vpack.c.b16 %v1931, %v1931
          %v1940 = vpack.c.b16 %v1932, %v1932
          %v1941 = vpack.c.b16 %v1933, %v1933
          %v1942 = vpack.c.b16 %v1934, %v1934
          %v1943 = vpack.c.b16 %v1935, %v1935
          %v1944 = vpack.c.b16 %v1936, %v1936
          %v1945 = vpack.c.b16 %v1937, %v1937
          %v1946 = vunpack.c.l.b16 %v1938
          %v1947 = vunpack.c.l.b16 %v1939
          %v1948 = vunpack.c.l.b16 %v1940
          %v1949 = vunpack.c.l.b16 %v1941
          %v1950 = vunpack.c.l.b16 %v1942
          %v1951 = vunpack.c.l.b16 %v1943
          %v1952 = vunpack.c.l.b16 %v1944
          %v1953 = vunpack.c.l.b16 %v1945
          %v1954 = vsel %vm1226, %v1947, %v1946
          %v1955 = vsel %vm1228, %v1948, %v1954
          %v1956 = vsel %vm1230, %v1949, %v1955
          %v1957 = vsel %vm1232, %v1950, %v1956
          %v1958 = vsel %vm1234, %v1951, %v1957
          %v1959 = vsel %vm1236, %v1952, %v1958
          %v1960 = vsel %vm1238, %v1953, %v1959
          %v1961 = vpack.c.b16 %v1960, %v1960
          %1963 = vst [vmem:[#allocation2 + $0x4] sm:$0xf] %v1961
          %vm1964 = vcmp.eq.s32.totalorder %v1134, 0
          %v1965 = vsel %vm1964, 1.0, 0.0
          %v1966 = vpack.c.bf16 %v1965, %v1965
          %vm1967 = vcmask 125952
          %1968 = vst.msk [vmem:[#allocation2 + $0x8] sm:$0xf] %vm1967, %v1966
          %1969 = vst [vmem:[%s663] sm:$0xff] %v1911
          %1970 = vst [vmem:[#allocation3] sm:$0xff] -1e+30
          %1971 = vst [vmem:[#allocation4] sm:$0xff] 0.0
        $region112: #{decoder_step.1} parent=67 // pred_fallthru
          _
        %v1972 = vld [vmem:[#allocation2] sm:$0xff]
        %v1973 = vld [vmem:[#allocation2 + $0x8] sm:$0xf]
        %v1974 = vld [vmem:[%s588] sm:$0xff]
        %v1975 = vld [vmem:[%s588 + $0x8] sm:$0xff]
        %v1976 = vld [vmem:[%s588 + $0x10] sm:$0xff]
        %v1977 = vld [vmem:[%s588 + $0x18] sm:$0xff]
        %v1978 = vld [vmem:[%s588 + $0x20] sm:$0xff]
        %v1979 = vld [vmem:[%s588 + $0x28] sm:$0xff]
        %v1980 = vld [vmem:[%s588 + $0x30] sm:$0xff]
        %v1981 = vld [vmem:[%s588 + $0x38] sm:$0xff]
        %v1982 = vld [vmem:[%s588 + $0x40] sm:$0xff]
        %v1983 = vld [vmem:[%s588 + $0x48] sm:$0xff]
        %v1984 = vld [vmem:[%s588 + $0x50] sm:$0xff]
        %v1985 = vld [vmem:[%s588 + $0x58] sm:$0xff]
        %v1986 = vld [vmem:[%s588 + $0x60] sm:$0xff]
        %v1987 = vld [vmem:[%s588 + $0x68] sm:$0xff]
        %v1988 = vld [vmem:[%s588 + $0x70] sm:$0xff]
        %v1989 = vld [vmem:[%s588 + $0x78] sm:$0xff]
        %v1990 = vld [vmem:[%s588 + $0x80] sm:$0xff]
        %v1991 = vld [vmem:[%s588 + $0x88] sm:$0xff]
        %v1992 = vld [vmem:[%s588 + $0x90] sm:$0xff]
        %v1993 = vld [vmem:[%s588 + $0x98] sm:$0xff]
        %v1994 = vld [vmem:[%s588 + $0xa0] sm:$0xff]
        %v1995 = vld [vmem:[%s588 + $0xa8] sm:$0xff]
        %v1996 = vld [vmem:[%s588 + $0xb0] sm:$0xff]
        %v1997 = vld [vmem:[%s588 + $0xb8] sm:$0xff]
        %v1998 = vld [vmem:[%s588 + $0xc0] sm:$0xff]
        %v1999 = vld [vmem:[%s588 + $0xc8] sm:$0xff]
        %v2000 = vld [vmem:[%s588 + $0xd0] sm:$0xff]
        %v2001 = vld [vmem:[%s588 + $0xd8] sm:$0xff]
        %v2002 = vld [vmem:[%s588 + $0xe0] sm:$0xff]
        %v2003 = vld [vmem:[%s588 + $0xe8] sm:$0xff]
        %v2004 = vld [vmem:[%s588 + $0xf0] sm:$0xff]
        %v2005 = vld [vmem:[%s588 + $0xf8] sm:$0xff]
        %v2006 = vld [vmem:[%s588 + $0x100] sm:$0xff]
        %v2007 = vld [vmem:[%s588 + $0x108] sm:$0xff]
        %v2008 = vld [vmem:[%s588 + $0x110] sm:$0xff]
        %v2009 = vld [vmem:[%s588 + $0x118] sm:$0xff]
        %v2010 = vld [vmem:[%s588 + $0x120] sm:$0xff]
        %v2011 = vld [vmem:[%s588 + $0x128] sm:$0xff]
        %v2012 = vld [vmem:[%s588 + $0x130] sm:$0xff]
        %v2013 = vld [vmem:[%s588 + $0x138] sm:$0xff]
        %v2014 = vld [vmem:[%s588 + $0x140] sm:$0xff]
        %v2015 = vld [vmem:[%s588 + $0x148] sm:$0xff]
        %v2016 = vld [vmem:[%s588 + $0x150] sm:$0xff]
        %v2017 = vld [vmem:[%s588 + $0x158] sm:$0xff]
        %v2018 = vld [vmem:[%s588 + $0x160] sm:$0xff]
        %v2019 = vld [vmem:[%s588 + $0x168] sm:$0xff]
        %v2020 = vld [vmem:[%s588 + $0x170] sm:$0xff]
        %v2021 = vld [vmem:[%s588 + $0x178] sm:$0xff]
        %v2022 = vld [vmem:[%s588 + $0x180] sm:$0xff]
        %v2023 = vld [vmem:[%s588 + $0x188] sm:$0xff]
        %v2024 = vld [vmem:[%s588 + $0x190] sm:$0xff]
        %v2025 = vld [vmem:[%s588 + $0x198] sm:$0xff]
        %v2026 = vld [vmem:[%s588 + $0x1a0] sm:$0xff]
        %v2027 = vld [vmem:[%s588 + $0x1a8] sm:$0xff]
        %v2028 = vld [vmem:[%s588 + $0x1b0] sm:$0xff]
        %v2029 = vld [vmem:[%s588 + $0x1b8] sm:$0xff]
        %v2030 = vld [vmem:[%s588 + $0x1c0] sm:$0xff]
        %v2031 = vld [vmem:[%s588 + $0x1c8] sm:$0xff]
        %v2032 = vld [vmem:[%s588 + $0x1d0] sm:$0xff]
        %v2033 = vld [vmem:[%s588 + $0x1d8] sm:$0xff]
        %v2034 = vld [vmem:[%s588 + $0x1e0] sm:$0xff]
        %v2035 = vld [vmem:[%s588 + $0x1e8] sm:$0xff]
        %v2036 = vld [vmem:[%s588 + $0x1f0] sm:$0xff]
        %v2037 = vld [vmem:[%s588 + $0x1f8] sm:$0xff]
        %v2038 = vld [vmem:[%s588 + $0x200] sm:$0xff]
        %v2039 = vld [vmem:[%s588 + $0x208] sm:$0xff]
        %v2040 = vld [vmem:[%s588 + $0x210] sm:$0xff]
        %v2041 = vld [vmem:[%s588 + $0x218] sm:$0xff]
        %v2042 = vld [vmem:[%s588 + $0x220] sm:$0xff]
        %v2043 = vld [vmem:[%s588 + $0x228] sm:$0xff]
        %v2044 = vld [vmem:[%s588 + $0x230] sm:$0xff]
        %v2045 = vld [vmem:[%s588 + $0x238] sm:$0xff]
        %v2046 = vld [vmem:[%s588 + $0x240] sm:$0xff]
        %v2047 = vld [vmem:[%s588 + $0x248] sm:$0xff]
        %v2048 = vld [vmem:[%s588 + $0x250] sm:$0xff]
        %v2049 = vld [vmem:[%s588 + $0x258] sm:$0xff]
        %v2050 = vld [vmem:[%s588 + $0x260] sm:$0xff]
        %v2051 = vld [vmem:[%s588 + $0x268] sm:$0xff]
        %v2052 = vld [vmem:[%s588 + $0x270] sm:$0xff]
        %v2053 = vld [vmem:[%s588 + $0x278] sm:$0xff]
        %v2054 = vld [vmem:[%s588 + $0x280] sm:$0xff]
        %v2055 = vld [vmem:[%s588 + $0x288] sm:$0xff]
        %v2056 = vld [vmem:[%s588 + $0x290] sm:$0xff]
        %v2057 = vld [vmem:[%s588 + $0x298] sm:$0xff]
        %v2058 = vld [vmem:[%s588 + $0x2a0] sm:$0xff]
        %v2059 = vld [vmem:[%s588 + $0x2a8] sm:$0xff]
        %v2060 = vld [vmem:[%s588 + $0x2b0] sm:$0xff]
        %v2061 = vld [vmem:[%s588 + $0x2b8] sm:$0xff]
        %v2062 = vld [vmem:[%s588 + $0x2c0] sm:$0xff]
        %v2063 = vld [vmem:[%s588 + $0x2c8] sm:$0xff]
        %v2064 = vld [vmem:[%s588 + $0x2d0] sm:$0xff]
        %v2065 = vld [vmem:[%s588 + $0x2d8] sm:$0xff]
        %v2066 = vld [vmem:[%s588 + $0x2e0] sm:$0xff]
        %v2067 = vld [vmem:[%s588 + $0x2e8] sm:$0xff]
        %v2068 = vld [vmem:[%s588 + $0x2f0] sm:$0xff]
        %v2069 = vld [vmem:[%s588 + $0x2f8] sm:$0xff]
        %v2070 = vld [vmem:[%s588 + $0x300] sm:$0xff]
        %v2071 = vld [vmem:[%s588 + $0x308] sm:$0xff]
        %v2072 = vld [vmem:[%s588 + $0x310] sm:$0xff]
        %v2073 = vld [vmem:[%s588 + $0x318] sm:$0xff]
        %v2074 = vld [vmem:[%s588 + $0x320] sm:$0xff]
        %v2075 = vld [vmem:[%s588 + $0x328] sm:$0xff]
        %v2076 = vld [vmem:[%s588 + $0x330] sm:$0xff]
        %v2077 = vld [vmem:[%s588 + $0x338] sm:$0xff]
        %v2078 = vld [vmem:[%s588 + $0x340] sm:$0xff]
        %v2079 = vld [vmem:[%s588 + $0x348] sm:$0xff]
        %v2080 = vld [vmem:[%s588 + $0x350] sm:$0xff]
        %v2081 = vld [vmem:[%s588 + $0x358] sm:$0xff]
        %v2082 = vld [vmem:[%s588 + $0x360] sm:$0xff]
        %v2083 = vld [vmem:[%s588 + $0x368] sm:$0xff]
        %v2084 = vld [vmem:[%s588 + $0x370] sm:$0xff]
        %v2085 = vld [vmem:[%s588 + $0x378] sm:$0xff]
        %v2086 = vld [vmem:[%s588 + $0x380] sm:$0xff]
        %v2087 = vld [vmem:[%s588 + $0x388] sm:$0xff]
        %v2088 = vld [vmem:[%s588 + $0x390] sm:$0xff]
        %v2089 = vld [vmem:[%s588 + $0x398] sm:$0xff]
        %v2090 = vld [vmem:[%s588 + $0x3a0] sm:$0xff]
        %v2091 = vld [vmem:[%s588 + $0x3a8] sm:$0xff]
        %v2092 = vld [vmem:[%s588 + $0x3b0] sm:$0xff]
        %v2093 = vld [vmem:[%s588 + $0x3b8] sm:$0xff]
        %v2094 = vld [vmem:[%s588 + $0x3c0] sm:$0xff]
        %v2095 = vld [vmem:[%s588 + $0x3c8] sm:$0xff]
        %v2096 = vld [vmem:[%s588 + $0x3d0] sm:$0xff]
        %v2097 = vld [vmem:[%s588 + $0x3d8] sm:$0xff]
        %v2098 = vld [vmem:[%s588 + $0x3e0] sm:$0xff]
        %v2099 = vld [vmem:[%s588 + $0x3e8] sm:$0xff]
        %v2100 = vld [vmem:[%s588 + $0x3f0] sm:$0xff]
        %v2101 = vld [vmem:[%s588 + $0x3f8] sm:$0xff]
        %v2102 = vld [vmem:[%s588 + $0x400] sm:$0xff]
        %v2103 = vld [vmem:[%s588 + $0x408] sm:$0xff]
        %v2104 = vld [vmem:[%s588 + $0x410] sm:$0xff]
        %v2105 = vld [vmem:[%s588 + $0x418] sm:$0xff]
        %v2106 = vld [vmem:[%s588 + $0x420] sm:$0xff]
        %v2107 = vld [vmem:[%s588 + $0x428] sm:$0xff]
        %v2108 = vld [vmem:[%s588 + $0x430] sm:$0xff]
        %v2109 = vld [vmem:[%s588 + $0x438] sm:$0xff]
        %v2110 = vld [vmem:[%s588 + $0x440] sm:$0xff]
        %v2111 = vld [vmem:[%s588 + $0x448] sm:$0xff]
        %v2112 = vld [vmem:[%s588 + $0x450] sm:$0xff]
        %v2113 = vld [vmem:[%s588 + $0x458] sm:$0xff]
        %v2114 = vld [vmem:[%s588 + $0x460] sm:$0xff]
        %v2115 = vld [vmem:[%s588 + $0x468] sm:$0xff]
        %v2116 = vld [vmem:[%s588 + $0x470] sm:$0xff]
        %v2117 = vld [vmem:[%s588 + $0x478] sm:$0xff]
        %v2118 = vld [vmem:[%s588 + $0x480] sm:$0xff]
        %v2119 = vld [vmem:[%s588 + $0x488] sm:$0xff]
        %v2120 = vld [vmem:[%s588 + $0x490] sm:$0xff]
        %v2121 = vld [vmem:[%s588 + $0x498] sm:$0xff]
        %v2122 = vld [vmem:[%s588 + $0x4a0] sm:$0xff]
        %v2123 = vld [vmem:[%s588 + $0x4a8] sm:$0xff]
        %v2124 = vld [vmem:[%s588 + $0x4b0] sm:$0xff]
        %v2125 = vld [vmem:[%s588 + $0x4b8] sm:$0xff]
        %v2126 = vld [vmem:[%s588 + $0x4c0] sm:$0xff]
        %v2127 = vld [vmem:[%s588 + $0x4c8] sm:$0xff]
        %v2128 = vld [vmem:[%s588 + $0x4d0] sm:$0xff]
        %v2129 = vld [vmem:[%s588 + $0x4d8] sm:$0xff]
        %v2130 = vld [vmem:[%s588 + $0x4e0] sm:$0xff]
        %v2131 = vld [vmem:[%s588 + $0x4e8] sm:$0xff]
        %v2132 = vld [vmem:[%s588 + $0x4f0] sm:$0xff]
        %v2133 = vld [vmem:[%s588 + $0x4f8] sm:$0xff]
        %v2134 = vld [vmem:[%s588 + $0x500] sm:$0xff]
        %v2135 = vld [vmem:[%s588 + $0x508] sm:$0xff]
        %v2136 = vld [vmem:[%s588 + $0x510] sm:$0xff]
        %v2137 = vld [vmem:[%s588 + $0x518] sm:$0xff]
        %v2138 = vld [vmem:[%s588 + $0x520] sm:$0xff]
        %v2139 = vld [vmem:[%s588 + $0x528] sm:$0xff]
        %v2140 = vld [vmem:[%s588 + $0x530] sm:$0xff]
        %v2141 = vld [vmem:[%s588 + $0x538] sm:$0xff]
        %v2142 = vld [vmem:[%s588 + $0x540] sm:$0xff]
        %v2143 = vld [vmem:[%s588 + $0x548] sm:$0xff]
        %v2144 = vld [vmem:[%s588 + $0x550] sm:$0xff]
        %v2145 = vld [vmem:[%s588 + $0x558] sm:$0xff]
        %v2146 = vld [vmem:[%s588 + $0x560] sm:$0xff]
        %v2147 = vld [vmem:[%s588 + $0x568] sm:$0xff]
        %v2148 = vld [vmem:[%s588 + $0x570] sm:$0xff]
        %v2149 = vld [vmem:[%s588 + $0x578] sm:$0xff]
        %v2150 = vld [vmem:[%s588 + $0x580] sm:$0xff]
        %v2151 = vld [vmem:[%s588 + $0x588] sm:$0xff]
        %v2152 = vld [vmem:[%s588 + $0x590] sm:$0xff]
        %v2153 = vld [vmem:[%s588 + $0x598] sm:$0xff]
        %v2154 = vld [vmem:[%s588 + $0x5a0] sm:$0xff]
        %v2155 = vld [vmem:[%s588 + $0x5a8] sm:$0xff]
        %v2156 = vld [vmem:[%s588 + $0x5b0] sm:$0xff]
        %v2157 = vld [vmem:[%s588 + $0x5b8] sm:$0xff]
        %v2158 = vld [vmem:[%s588 + $0x5c0] sm:$0xff]
        %v2159 = vld [vmem:[%s588 + $0x5c8] sm:$0xff]
        %v2160 = vld [vmem:[%s588 + $0x5d0] sm:$0xff]
        %v2161 = vld [vmem:[%s588 + $0x5d8] sm:$0xff]
        %v2162 = vld [vmem:[%s588 + $0x5e0] sm:$0xff]
        %v2163 = vld [vmem:[%s588 + $0x5e8] sm:$0xff]
        %v2164 = vld [vmem:[%s588 + $0x5f0] sm:$0xff]
        %v2165 = vld [vmem:[%s588 + $0x5f8] sm:$0xff]
        %v2166 = vld [vmem:[%s588 + $0x600] sm:$0xff]
        %v2167 = vld [vmem:[%s588 + $0x608] sm:$0xff]
        %v2168 = vld [vmem:[%s588 + $0x610] sm:$0xff]
        %v2169 = vld [vmem:[%s588 + $0x618] sm:$0xff]
        %v2170 = vld [vmem:[%s588 + $0x620] sm:$0xff]
        %v2171 = vld [vmem:[%s588 + $0x628] sm:$0xff]
        %v2172 = vld [vmem:[%s588 + $0x630] sm:$0xff]
        %v2173 = vld [vmem:[%s588 + $0x638] sm:$0xff]
        %v2174 = vld [vmem:[%s588 + $0x640] sm:$0xff]
        %v2175 = vld [vmem:[%s588 + $0x648] sm:$0xff]
        %v2176 = vld [vmem:[%s588 + $0x650] sm:$0xff]
        %v2177 = vld [vmem:[%s588 + $0x658] sm:$0xff]
        %v2178 = vld [vmem:[%s588 + $0x660] sm:$0xff]
        %v2179 = vld [vmem:[%s588 + $0x668] sm:$0xff]
        %v2180 = vld [vmem:[%s588 + $0x670] sm:$0xff]
        %v2181 = vld [vmem:[%s588 + $0x678] sm:$0xff]
        %v2182 = vld [vmem:[%s588 + $0x680] sm:$0xff]
        %v2183 = vld [vmem:[%s588 + $0x688] sm:$0xff]
        %v2184 = vld [vmem:[%s588 + $0x690] sm:$0xff]
        %v2185 = vld [vmem:[%s588 + $0x698] sm:$0xff]
        %v2186 = vld [vmem:[%s588 + $0x6a0] sm:$0xff]
        %v2187 = vld [vmem:[%s588 + $0x6a8] sm:$0xff]
        %v2188 = vld [vmem:[%s588 + $0x6b0] sm:$0xff]
        %v2189 = vld [vmem:[%s588 + $0x6b8] sm:$0xff]
        %v2190 = vld [vmem:[%s588 + $0x6c0] sm:$0xff]
        %v2191 = vld [vmem:[%s588 + $0x6c8] sm:$0xff]
        %v2192 = vld [vmem:[%s588 + $0x6d0] sm:$0xff]
        %v2193 = vld [vmem:[%s588 + $0x6d8] sm:$0xff]
        %v2194 = vld [vmem:[%s588 + $0x6e0] sm:$0xff]
        %v2195 = vld [vmem:[%s588 + $0x6e8] sm:$0xff]
        %v2196 = vld [vmem:[%s588 + $0x6f0] sm:$0xff]
        %v2197 = vld [vmem:[%s588 + $0x6f8] sm:$0xff]
        %v2198 = vld [vmem:[%s588 + $0x700] sm:$0xff]
        %v2199 = vld [vmem:[%s588 + $0x708] sm:$0xff]
        %v2200 = vld [vmem:[%s588 + $0x710] sm:$0xff]
        %v2201 = vld [vmem:[%s588 + $0x718] sm:$0xff]
        %v2202 = vld [vmem:[%s588 + $0x720] sm:$0xff]
        %v2203 = vld [vmem:[%s588 + $0x728] sm:$0xff]
        %v2204 = vld [vmem:[%s588 + $0x730] sm:$0xff]
        %v2205 = vld [vmem:[%s588 + $0x738] sm:$0xff]
        %v2206 = vld [vmem:[%s588 + $0x740] sm:$0xff]
        %v2207 = vld [vmem:[%s588 + $0x748] sm:$0xff]
        %v2208 = vld [vmem:[%s588 + $0x750] sm:$0xff]
        %v2209 = vld [vmem:[%s588 + $0x758] sm:$0xff]
        %v2210 = vld [vmem:[%s588 + $0x760] sm:$0xff]
        %v2211 = vld [vmem:[%s588 + $0x768] sm:$0xff]
        %v2212 = vld [vmem:[%s588 + $0x770] sm:$0xff]
        %v2213 = vld [vmem:[%s588 + $0x778] sm:$0xff]
        %v2214 = vld [vmem:[%s588 + $0x780] sm:$0xff]
        %v2215 = vld [vmem:[%s588 + $0x788] sm:$0xff]
        %v2216 = vld [vmem:[%s588 + $0x790] sm:$0xff]
        %v2217 = vld [vmem:[%s588 + $0x798] sm:$0xff]
        %v2218 = vld [vmem:[%s588 + $0x7a0] sm:$0xff]
        %v2219 = vld [vmem:[%s588 + $0x7a8] sm:$0xff]
        %v2220 = vld [vmem:[%s588 + $0x7b0] sm:$0xff]
        %v2221 = vld [vmem:[%s588 + $0x7b8] sm:$0xff]
        %v2222 = vld [vmem:[%s588 + $0x7c0] sm:$0xff]
        %v2223 = vld [vmem:[%s588 + $0x7c8] sm:$0xff]
        %v2224 = vld [vmem:[%s588 + $0x7d0] sm:$0xff]
        %v2225 = vld [vmem:[%s588 + $0x7d8] sm:$0xff]
        %v2226 = vld [vmem:[%s588 + $0x7e0] sm:$0xff]
        %v2227 = vld [vmem:[%s588 + $0x7e8] sm:$0xff]
        %v2228 = vld [vmem:[%s588 + $0x7f0] sm:$0xff]
        %v2229 = vld [vmem:[%s588 + $0x7f8] sm:$0xff]
        %v2230 = vld [vmem:[%s588 + $0x800] sm:$0xff]
        %v2231 = vld [vmem:[%s588 + $0x808] sm:$0xff]
        %v2232 = vld [vmem:[%s588 + $0x810] sm:$0xff]
        %v2233 = vld [vmem:[%s588 + $0x818] sm:$0xff]
        %v2234 = vld [vmem:[%s588 + $0x820] sm:$0xff]
        %v2235 = vld [vmem:[%s588 + $0x828] sm:$0xff]
        %v2236 = vld [vmem:[%s588 + $0x830] sm:$0xff]
        %v2237 = vld [vmem:[%s588 + $0x838] sm:$0xff]
        %v2238 = vld [vmem:[%s588 + $0x840] sm:$0xff]
        %v2239 = vld [vmem:[%s588 + $0x848] sm:$0xff]
        %v2240 = vld [vmem:[%s588 + $0x850] sm:$0xff]
        %v2241 = vld [vmem:[%s588 + $0x858] sm:$0xff]
        %v2242 = vld [vmem:[%s588 + $0x860] sm:$0xff]
        %v2243 = vld [vmem:[%s588 + $0x868] sm:$0xff]
        %v2244 = vld [vmem:[%s588 + $0x870] sm:$0xff]
        %v2245 = vld [vmem:[%s588 + $0x878] sm:$0xff]
        %v2248 = vunpack.c.l.b16 %v1972
        %v2249 = vunpack.c.h.b16 %v1972
        %v2250 = vunpack.c.l.b16 %v1973
        %v2251 = vpack.c.b16 %v2248, %v2248
        %v2252 = vpack.c.b16 %v2249, %v2249
        %v2253 = vpack.c.b16 %v2250, %v2250
        %v2528 = vunpack.c.l.b16 %v1974
        %v2529 = vunpack.c.h.b16 %v1974
        %v2530 = vunpack.c.l.b16 %v1975
        %v2531 = vunpack.c.h.b16 %v1975
        %v2532 = vunpack.c.l.b16 %v1976
        %v2533 = vunpack.c.h.b16 %v1976
        %v2534 = vunpack.c.l.b16 %v1977
        %v2535 = vunpack.c.h.b16 %v1977
        %v2536 = vunpack.c.l.b16 %v1978
        %v2537 = vunpack.c.h.b16 %v1978
        %v2538 = vunpack.c.l.b16 %v1979
        %v2539 = vunpack.c.h.b16 %v1979
        %v2540 = vunpack.c.l.b16 %v1980
        %v2541 = vunpack.c.h.b16 %v1980
        %v2542 = vunpack.c.l.b16 %v1981
        %v2543 = vunpack.c.h.b16 %v1981
        %v2544 = vunpack.c.l.b16 %v1982
        %v2545 = vunpack.c.h.b16 %v1982
        %v2546 = vunpack.c.l.b16 %v1983
        %v2547 = vunpack.c.h.b16 %v1983
        %v2548 = vunpack.c.l.b16 %v1984
        %v2549 = vunpack.c.h.b16 %v1984
        %v2550 = vunpack.c.l.b16 %v1985
        %v2551 = vunpack.c.h.b16 %v1985
        %v2552 = vunpack.c.l.b16 %v1986
        %v2553 = vunpack.c.h.b16 %v1986
        %v2554 = vunpack.c.l.b16 %v1987
        %v2555 = vunpack.c.h.b16 %v1987
        %v2556 = vunpack.c.l.b16 %v1988
        %v2557 = vunpack.c.h.b16 %v1988
        %v2558 = vunpack.c.l.b16 %v1989
        %v2559 = vunpack.c.h.b16 %v1989
        %v2560 = vunpack.c.l.b16 %v1990
        %v2561 = vunpack.c.h.b16 %v1990
        %v2562 = vunpack.c.l.b16 %v1991
        %v2563 = vunpack.c.h.b16 %v1991
        %v2564 = vunpack.c.l.b16 %v1992
        %v2565 = vunpack.c.h.b16 %v1992
        %v2566 = vunpack.c.l.b16 %v1993
        %v2567 = vunpack.c.h.b16 %v1993
        %v2568 = vunpack.c.l.b16 %v1994
        %v2569 = vunpack.c.h.b16 %v1994
        %v2570 = vunpack.c.l.b16 %v1995
        %v2571 = vunpack.c.h.b16 %v1995
        %v2572 = vunpack.c.l.b16 %v1996
        %v2573 = vunpack.c.h.b16 %v1996
        %v2574 = vunpack.c.l.b16 %v1997
        %v2575 = vunpack.c.h.b16 %v1997
        %v2576 = vunpack.c.l.b16 %v1998
        %v2577 = vunpack.c.h.b16 %v1998
        %v2578 = vunpack.c.l.b16 %v1999
        %v2579 = vunpack.c.h.b16 %v1999
        %v2580 = vunpack.c.l.b16 %v2000
        %v2581 = vunpack.c.h.b16 %v2000
        %v2582 = vunpack.c.l.b16 %v2001
        %v2583 = vunpack.c.h.b16 %v2001
        %v2584 = vunpack.c.l.b16 %v2002
        %v2585 = vunpack.c.h.b16 %v2002
        %v2586 = vunpack.c.l.b16 %v2003
        %v2587 = vunpack.c.h.b16 %v2003
        %v2588 = vunpack.c.l.b16 %v2004
        %v2589 = vunpack.c.h.b16 %v2004
        %v2590 = vunpack.c.l.b16 %v2005
        %v2591 = vunpack.c.h.b16 %v2005
        %v2592 = vunpack.c.l.b16 %v2006
        %v2593 = vunpack.c.h.b16 %v2006
        %v2594 = vunpack.c.l.b16 %v2007
        %v2595 = vunpack.c.h.b16 %v2007
        %v2596 = vunpack.c.l.b16 %v2008
        %v2597 = vunpack.c.h.b16 %v2008
        %v2598 = vunpack.c.l.b16 %v2009
        %v2599 = vunpack.c.h.b16 %v2009
        %v2600 = vunpack.c.l.b16 %v2010
        %v2601 = vunpack.c.h.b16 %v2010
        %v2602 = vunpack.c.l.b16 %v2011
        %v2603 = vunpack.c.h.b16 %v2011
        %v2604 = vunpack.c.l.b16 %v2012
        %v2605 = vunpack.c.h.b16 %v2012
        %v2606 = vunpack.c.l.b16 %v2013
        %v2607 = vunpack.c.h.b16 %v2013
        %v2608 = vunpack.c.l.b16 %v2014
        %v2609 = vunpack.c.h.b16 %v2014
        %v2610 = vunpack.c.l.b16 %v2015
        %v2611 = vunpack.c.h.b16 %v2015
        %v2612 = vunpack.c.l.b16 %v2016
        %v2613 = vunpack.c.h.b16 %v2016
        %v2614 = vunpack.c.l.b16 %v2017
        %v2615 = vunpack.c.h.b16 %v2017
        %v2616 = vunpack.c.l.b16 %v2018
        %v2617 = vunpack.c.h.b16 %v2018
        %v2618 = vunpack.c.l.b16 %v2019
        %v2619 = vunpack.c.h.b16 %v2019
        %v2620 = vunpack.c.l.b16 %v2020
        %v2621 = vunpack.c.h.b16 %v2020
        %v2622 = vunpack.c.l.b16 %v2021
        %v2623 = vunpack.c.h.b16 %v2021
        %v2624 = vunpack.c.l.b16 %v2022
        %v2625 = vunpack.c.h.b16 %v2022
        %v2626 = vunpack.c.l.b16 %v2023
        %v2627 = vunpack.c.h.b16 %v2023
        %v2628 = vunpack.c.l.b16 %v2024
        %v2629 = vunpack.c.h.b16 %v2024
        %v2630 = vunpack.c.l.b16 %v2025
        %v2631 = vunpack.c.h.b16 %v2025
        %v2632 = vunpack.c.l.b16 %v2026
        %v2633 = vunpack.c.h.b16 %v2026
        %v2634 = vunpack.c.l.b16 %v2027
        %v2635 = vunpack.c.h.b16 %v2027
        %v2636 = vunpack.c.l.b16 %v2028
        %v2637 = vunpack.c.h.b16 %v2028
        %v2638 = vunpack.c.l.b16 %v2029
        %v2639 = vunpack.c.h.b16 %v2029
        %v2640 = vunpack.c.l.b16 %v2030
        %v2641 = vunpack.c.h.b16 %v2030
        %v2642 = vunpack.c.l.b16 %v2031
        %v2643 = vunpack.c.h.b16 %v2031
        %v2644 = vunpack.c.l.b16 %v2032
        %v2645 = vunpack.c.h.b16 %v2032
        %v2646 = vunpack.c.l.b16 %v2033
        %v2647 = vunpack.c.h.b16 %v2033
        %v2648 = vunpack.c.l.b16 %v2034
        %v2649 = vunpack.c.h.b16 %v2034
        %v2650 = vunpack.c.l.b16 %v2035
        %v2651 = vunpack.c.h.b16 %v2035
        %v2652 = vunpack.c.l.b16 %v2036
        %v2653 = vunpack.c.h.b16 %v2036
        %v2654 = vunpack.c.l.b16 %v2037
        %v2655 = vunpack.c.h.b16 %v2037
        %v2656 = vunpack.c.l.b16 %v2038
        %v2657 = vunpack.c.h.b16 %v2038
        %v2658 = vunpack.c.l.b16 %v2039
        %v2659 = vunpack.c.h.b16 %v2039
        %v2660 = vunpack.c.l.b16 %v2040
        %v2661 = vunpack.c.h.b16 %v2040
        %v2662 = vunpack.c.l.b16 %v2041
        %v2663 = vunpack.c.h.b16 %v2041
        %v2664 = vunpack.c.l.b16 %v2042
        %v2665 = vunpack.c.h.b16 %v2042
        %v2666 = vunpack.c.l.b16 %v2043
        %v2667 = vunpack.c.h.b16 %v2043
        %v2668 = vunpack.c.l.b16 %v2044
        %v2669 = vunpack.c.h.b16 %v2044
        %v2670 = vunpack.c.l.b16 %v2045
        %v2671 = vunpack.c.h.b16 %v2045
        %v2672 = vunpack.c.l.b16 %v2046
        %v2673 = vunpack.c.h.b16 %v2046
        %v2674 = vunpack.c.l.b16 %v2047
        %v2675 = vunpack.c.h.b16 %v2047
        %v2676 = vunpack.c.l.b16 %v2048
        %v2677 = vunpack.c.h.b16 %v2048
        %v2678 = vunpack.c.l.b16 %v2049
        %v2679 = vunpack.c.h.b16 %v2049
        %v2680 = vunpack.c.l.b16 %v2050
        %v2681 = vunpack.c.h.b16 %v2050
        %v2682 = vunpack.c.l.b16 %v2051
        %v2683 = vunpack.c.h.b16 %v2051
        %v2684 = vunpack.c.l.b16 %v2052
        %v2685 = vunpack.c.h.b16 %v2052
        %v2686 = vunpack.c.l.b16 %v2053
        %v2687 = vunpack.c.h.b16 %v2053
        %v2688 = vunpack.c.l.b16 %v2054
        %v2689 = vunpack.c.h.b16 %v2054
        %v2690 = vunpack.c.l.b16 %v2055
        %v2691 = vunpack.c.h.b16 %v2055
        %v2692 = vunpack.c.l.b16 %v2056
        %v2693 = vunpack.c.h.b16 %v2056
        %v2694 = vunpack.c.l.b16 %v2057
        %v2695 = vunpack.c.h.b16 %v2057
        %v2696 = vunpack.c.l.b16 %v2058
        %v2697 = vunpack.c.h.b16 %v2058
        %v2698 = vunpack.c.l.b16 %v2059
        %v2699 = vunpack.c.h.b16 %v2059
        %v2700 = vunpack.c.l.b16 %v2060
        %v2701 = vunpack.c.h.b16 %v2060
        %v2702 = vunpack.c.l.b16 %v2061
        %v2703 = vunpack.c.h.b16 %v2061
        %v2704 = vunpack.c.l.b16 %v2062
        %v2705 = vunpack.c.h.b16 %v2062
        %v2706 = vunpack.c.l.b16 %v2063
        %v2707 = vunpack.c.h.b16 %v2063
        %v2708 = vunpack.c.l.b16 %v2064
        %v2709 = vunpack.c.h.b16 %v2064
        %v2710 = vunpack.c.l.b16 %v2065
        %v2711 = vunpack.c.h.b16 %v2065
        %v2712 = vunpack.c.l.b16 %v2066
        %v2713 = vunpack.c.h.b16 %v2066
        %v2714 = vunpack.c.l.b16 %v2067
        %v2715 = vunpack.c.h.b16 %v2067
        %v2716 = vunpack.c.l.b16 %v2068
        %v2717 = vunpack.c.h.b16 %v2068
        %v2718 = vunpack.c.l.b16 %v2069
        %v2719 = vunpack.c.h.b16 %v2069
        %v2720 = vunpack.c.l.b16 %v2070
        %v2721 = vunpack.c.h.b16 %v2070
        %v2722 = vunpack.c.l.b16 %v2071
        %v2723 = vunpack.c.h.b16 %v2071
        %v2724 = vunpack.c.l.b16 %v2072
        %v2725 = vunpack.c.h.b16 %v2072
        %v2726 = vunpack.c.l.b16 %v2073
        %v2727 = vunpack.c.h.b16 %v2073
        %v2728 = vunpack.c.l.b16 %v2074
        %v2729 = vunpack.c.h.b16 %v2074
        %v2730 = vunpack.c.l.b16 %v2075
        %v2731 = vunpack.c.h.b16 %v2075
        %v2732 = vunpack.c.l.b16 %v2076
        %v2733 = vunpack.c.h.b16 %v2076
        %v2734 = vunpack.c.l.b16 %v2077
        %v2735 = vunpack.c.h.b16 %v2077
        %v2736 = vunpack.c.l.b16 %v2078
        %v2737 = vunpack.c.h.b16 %v2078
        %v2738 = vunpack.c.l.b16 %v2079
        %v2739 = vunpack.c.h.b16 %v2079
        %v2740 = vunpack.c.l.b16 %v2080
        %v2741 = vunpack.c.h.b16 %v2080
        %v2742 = vunpack.c.l.b16 %v2081
        %v2743 = vunpack.c.h.b16 %v2081
        %v2744 = vunpack.c.l.b16 %v2082
        %v2745 = vunpack.c.h.b16 %v2082
        %v2746 = vunpack.c.l.b16 %v2083
        %v2747 = vunpack.c.h.b16 %v2083
        %v2748 = vunpack.c.l.b16 %v2084
        %v2749 = vunpack.c.h.b16 %v2084
        %v2750 = vunpack.c.l.b16 %v2085
        %v2751 = vunpack.c.h.b16 %v2085
        %v2752 = vunpack.c.l.b16 %v2086
        %v2753 = vunpack.c.h.b16 %v2086
        %v2754 = vunpack.c.l.b16 %v2087
        %v2755 = vunpack.c.h.b16 %v2087
        %v2756 = vunpack.c.l.b16 %v2088
        %v2757 = vunpack.c.h.b16 %v2088
        %v2758 = vunpack.c.l.b16 %v2089
        %v2759 = vunpack.c.h.b16 %v2089
        %v2760 = vunpack.c.l.b16 %v2090
        %v2761 = vunpack.c.h.b16 %v2090
        %v2762 = vunpack.c.l.b16 %v2091
        %v2763 = vunpack.c.h.b16 %v2091
        %v2764 = vunpack.c.l.b16 %v2092
        %v2765 = vunpack.c.h.b16 %v2092
        %v2766 = vunpack.c.l.b16 %v2093
        %v2767 = vunpack.c.h.b16 %v2093
        %v2768 = vunpack.c.l.b16 %v2094
        %v2769 = vunpack.c.h.b16 %v2094
        %v2770 = vunpack.c.l.b16 %v2095
        %v2771 = vunpack.c.h.b16 %v2095
        %v2772 = vunpack.c.l.b16 %v2096
        %v2773 = vunpack.c.h.b16 %v2096
        %v2774 = vunpack.c.l.b16 %v2097
        %v2775 = vunpack.c.h.b16 %v2097
        %v2776 = vunpack.c.l.b16 %v2098
        %v2777 = vunpack.c.h.b16 %v2098
        %v2778 = vunpack.c.l.b16 %v2099
        %v2779 = vunpack.c.h.b16 %v2099
        %v2780 = vunpack.c.l.b16 %v2100
        %v2781 = vunpack.c.h.b16 %v2100
        %v2782 = vunpack.c.l.b16 %v2101
        %v2783 = vunpack.c.h.b16 %v2101
        %v2784 = vunpack.c.l.b16 %v2102
        %v2785 = vunpack.c.h.b16 %v2102
        %v2786 = vunpack.c.l.b16 %v2103
        %v2787 = vunpack.c.h.b16 %v2103
        %v2788 = vunpack.c.l.b16 %v2104
        %v2789 = vunpack.c.h.b16 %v2104
        %v2790 = vunpack.c.l.b16 %v2105
        %v2791 = vunpack.c.h.b16 %v2105
        %v2792 = vunpack.c.l.b16 %v2106
        %v2793 = vunpack.c.h.b16 %v2106
        %v2794 = vunpack.c.l.b16 %v2107
        %v2795 = vunpack.c.h.b16 %v2107
        %v2796 = vunpack.c.l.b16 %v2108
        %v2797 = vunpack.c.h.b16 %v2108
        %v2798 = vunpack.c.l.b16 %v2109
        %v2799 = vunpack.c.h.b16 %v2109
        %v2800 = vunpack.c.l.b16 %v2110
        %v2801 = vunpack.c.h.b16 %v2110
        %v2802 = vunpack.c.l.b16 %v2111
        %v2803 = vunpack.c.h.b16 %v2111
        %v2804 = vunpack.c.l.b16 %v2112
        %v2805 = vunpack.c.h.b16 %v2112
        %v2806 = vunpack.c.l.b16 %v2113
        %v2807 = vunpack.c.h.b16 %v2113
        %v2808 = vunpack.c.l.b16 %v2114
        %v2809 = vunpack.c.h.b16 %v2114
        %v2810 = vunpack.c.l.b16 %v2115
        %v2811 = vunpack.c.h.b16 %v2115
        %v2812 = vunpack.c.l.b16 %v2116
        %v2813 = vunpack.c.h.b16 %v2116
        %v2814 = vunpack.c.l.b16 %v2117
        %v2815 = vunpack.c.h.b16 %v2117
        %v2816 = vunpack.c.l.b16 %v2118
        %v2817 = vunpack.c.h.b16 %v2118
        %v2818 = vunpack.c.l.b16 %v2119
        %v2819 = vunpack.c.h.b16 %v2119
        %v2820 = vunpack.c.l.b16 %v2120
        %v2821 = vunpack.c.h.b16 %v2120
        %v2822 = vunpack.c.l.b16 %v2121
        %v2823 = vunpack.c.h.b16 %v2121
        %v2824 = vunpack.c.l.b16 %v2122
        %v2825 = vunpack.c.h.b16 %v2122
        %v2826 = vunpack.c.l.b16 %v2123
        %v2827 = vunpack.c.h.b16 %v2123
        %v2828 = vunpack.c.l.b16 %v2124
        %v2829 = vunpack.c.h.b16 %v2124
        %v2830 = vunpack.c.l.b16 %v2125
        %v2831 = vunpack.c.h.b16 %v2125
        %v2832 = vunpack.c.l.b16 %v2126
        %v2833 = vunpack.c.h.b16 %v2126
        %v2834 = vunpack.c.l.b16 %v2127
        %v2835 = vunpack.c.h.b16 %v2127
        %v2836 = vunpack.c.l.b16 %v2128
        %v2837 = vunpack.c.h.b16 %v2128
        %v2838 = vunpack.c.l.b16 %v2129
        %v2839 = vunpack.c.h.b16 %v2129
        %v2840 = vunpack.c.l.b16 %v2130
        %v2841 = vunpack.c.h.b16 %v2130
        %v2842 = vunpack.c.l.b16 %v2131
        %v2843 = vunpack.c.h.b16 %v2131
        %v2844 = vunpack.c.l.b16 %v2132
        %v2845 = vunpack.c.h.b16 %v2132
        %v2846 = vunpack.c.l.b16 %v2133
        %v2847 = vunpack.c.h.b16 %v2133
        %v2848 = vunpack.c.l.b16 %v2134
        %v2849 = vunpack.c.h.b16 %v2134
        %v2850 = vunpack.c.l.b16 %v2135
        %v2851 = vunpack.c.h.b16 %v2135
        %v2852 = vunpack.c.l.b16 %v2136
        %v2853 = vunpack.c.h.b16 %v2136
        %v2854 = vunpack.c.l.b16 %v2137
        %v2855 = vunpack.c.h.b16 %v2137
        %v2856 = vunpack.c.l.b16 %v2138
        %v2857 = vunpack.c.h.b16 %v2138
        %v2858 = vunpack.c.l.b16 %v2139
        %v2859 = vunpack.c.h.b16 %v2139
        %v2860 = vunpack.c.l.b16 %v2140
        %v2861 = vunpack.c.h.b16 %v2140
        %v2862 = vunpack.c.l.b16 %v2141
        %v2863 = vunpack.c.h.b16 %v2141
        %v2864 = vunpack.c.l.b16 %v2142
        %v2865 = vunpack.c.h.b16 %v2142
        %v2866 = vunpack.c.l.b16 %v2143
        %v2867 = vunpack.c.h.b16 %v2143
        %v2868 = vunpack.c.l.b16 %v2144
        %v2869 = vunpack.c.h.b16 %v2144
        %v2870 = vunpack.c.l.b16 %v2145
        %v2871 = vunpack.c.h.b16 %v2145
        %v2872 = vunpack.c.l.b16 %v2146
        %v2873 = vunpack.c.h.b16 %v2146
        %v2874 = vunpack.c.l.b16 %v2147
        %v2875 = vunpack.c.h.b16 %v2147
        %v2876 = vunpack.c.l.b16 %v2148
        %v2877 = vunpack.c.h.b16 %v2148
        %v2878 = vunpack.c.l.b16 %v2149
        %v2879 = vunpack.c.h.b16 %v2149
        %v2880 = vunpack.c.l.b16 %v2150
        %v2881 = vunpack.c.h.b16 %v2150
        %v2882 = vunpack.c.l.b16 %v2151
        %v2883 = vunpack.c.h.b16 %v2151
        %v2884 = vunpack.c.l.b16 %v2152
        %v2885 = vunpack.c.h.b16 %v2152
        %v2886 = vunpack.c.l.b16 %v2153
        %v2887 = vunpack.c.h.b16 %v2153
        %v2888 = vunpack.c.l.b16 %v2154
        %v2889 = vunpack.c.h.b16 %v2154
        %v2890 = vunpack.c.l.b16 %v2155
        %v2891 = vunpack.c.h.b16 %v2155
        %v2892 = vunpack.c.l.b16 %v2156
        %v2893 = vunpack.c.h.b16 %v2156
        %v2894 = vunpack.c.l.b16 %v2157
        %v2895 = vunpack.c.h.b16 %v2157
        %v2896 = vunpack.c.l.b16 %v2158
        %v2897 = vunpack.c.h.b16 %v2158
        %v2898 = vunpack.c.l.b16 %v2159
        %v2899 = vunpack.c.h.b16 %v2159
        %v2900 = vunpack.c.l.b16 %v2160
        %v2901 = vunpack.c.h.b16 %v2160
        %v2902 = vunpack.c.l.b16 %v2161
        %v2903 = vunpack.c.h.b16 %v2161
        %v2904 = vunpack.c.l.b16 %v2162
        %v2905 = vunpack.c.h.b16 %v2162
        %v2906 = vunpack.c.l.b16 %v2163
        %v2907 = vunpack.c.h.b16 %v2163
        %v2908 = vunpack.c.l.b16 %v2164
        %v2909 = vunpack.c.h.b16 %v2164
        %v2910 = vunpack.c.l.b16 %v2165
        %v2911 = vunpack.c.h.b16 %v2165
        %v2912 = vunpack.c.l.b16 %v2166
        %v2913 = vunpack.c.h.b16 %v2166
        %v2914 = vunpack.c.l.b16 %v2167
        %v2915 = vunpack.c.h.b16 %v2167
        %v2916 = vunpack.c.l.b16 %v2168
        %v2917 = vunpack.c.h.b16 %v2168
        %v2918 = vunpack.c.l.b16 %v2169
        %v2919 = vunpack.c.h.b16 %v2169
        %v2920 = vunpack.c.l.b16 %v2170
        %v2921 = vunpack.c.h.b16 %v2170
        %v2922 = vunpack.c.l.b16 %v2171
        %v2923 = vunpack.c.h.b16 %v2171
        %v2924 = vunpack.c.l.b16 %v2172
        %v2925 = vunpack.c.h.b16 %v2172
        %v2926 = vunpack.c.l.b16 %v2173
        %v2927 = vunpack.c.h.b16 %v2173
        %v2928 = vunpack.c.l.b16 %v2174
        %v2929 = vunpack.c.h.b16 %v2174
        %v2930 = vunpack.c.l.b16 %v2175
        %v2931 = vunpack.c.h.b16 %v2175
        %v2932 = vunpack.c.l.b16 %v2176
        %v2933 = vunpack.c.h.b16 %v2176
        %v2934 = vunpack.c.l.b16 %v2177
        %v2935 = vunpack.c.h.b16 %v2177
        %v2936 = vunpack.c.l.b16 %v2178
        %v2937 = vunpack.c.h.b16 %v2178
        %v2938 = vunpack.c.l.b16 %v2179
        %v2939 = vunpack.c.h.b16 %v2179
        %v2940 = vunpack.c.l.b16 %v2180
        %v2941 = vunpack.c.h.b16 %v2180
        %v2942 = vunpack.c.l.b16 %v2181
        %v2943 = vunpack.c.h.b16 %v2181
        %v2944 = vunpack.c.l.b16 %v2182
        %v2945 = vunpack.c.h.b16 %v2182
        %v2946 = vunpack.c.l.b16 %v2183
        %v2947 = vunpack.c.h.b16 %v2183
        %v2948 = vunpack.c.l.b16 %v2184
        %v2949 = vunpack.c.h.b16 %v2184
        %v2950 = vunpack.c.l.b16 %v2185
        %v2951 = vunpack.c.h.b16 %v2185
        %v2952 = vunpack.c.l.b16 %v2186
        %v2953 = vunpack.c.h.b16 %v2186
        %v2954 = vunpack.c.l.b16 %v2187
        %v2955 = vunpack.c.h.b16 %v2187
        %v2956 = vunpack.c.l.b16 %v2188
        %v2957 = vunpack.c.h.b16 %v2188
        %v2958 = vunpack.c.l.b16 %v2189
        %v2959 = vunpack.c.h.b16 %v2189
        %v2960 = vunpack.c.l.b16 %v2190
        %v2961 = vunpack.c.h.b16 %v2190
        %v2962 = vunpack.c.l.b16 %v2191
        %v2963 = vunpack.c.h.b16 %v2191
        %v2964 = vunpack.c.l.b16 %v2192
        %v2965 = vunpack.c.h.b16 %v2192
        %v2966 = vunpack.c.l.b16 %v2193
        %v2967 = vunpack.c.h.b16 %v2193
        %v2968 = vunpack.c.l.b16 %v2194
        %v2969 = vunpack.c.h.b16 %v2194
        %v2970 = vunpack.c.l.b16 %v2195
        %v2971 = vunpack.c.h.b16 %v2195
        %v2972 = vunpack.c.l.b16 %v2196
        %v2973 = vunpack.c.h.b16 %v2196
        %v2974 = vunpack.c.l.b16 %v2197
        %v2975 = vunpack.c.h.b16 %v2197
        %v2976 = vunpack.c.l.b16 %v2198
        %v2977 = vunpack.c.h.b16 %v2198
        %v2978 = vunpack.c.l.b16 %v2199
        %v2979 = vunpack.c.h.b16 %v2199
        %v2980 = vunpack.c.l.b16 %v2200
        %v2981 = vunpack.c.h.b16 %v2200
        %v2982 = vunpack.c.l.b16 %v2201
        %v2983 = vunpack.c.h.b16 %v2201
        %v2984 = vunpack.c.l.b16 %v2202
        %v2985 = vunpack.c.h.b16 %v2202
        %v2986 = vunpack.c.l.b16 %v2203
        %v2987 = vunpack.c.h.b16 %v2203
        %v2988 = vunpack.c.l.b16 %v2204
        %v2989 = vunpack.c.h.b16 %v2204
        %v2990 = vunpack.c.l.b16 %v2205
        %v2991 = vunpack.c.h.b16 %v2205
        %v2992 = vunpack.c.l.b16 %v2206
        %v2993 = vunpack.c.h.b16 %v2206
        %v2994 = vunpack.c.l.b16 %v2207
        %v2995 = vunpack.c.h.b16 %v2207
        %v2996 = vunpack.c.l.b16 %v2208
        %v2997 = vunpack.c.h.b16 %v2208
        %v2998 = vunpack.c.l.b16 %v2209
        %v2999 = vunpack.c.h.b16 %v2209
        %v3000 = vunpack.c.l.b16 %v2210
        %v3001 = vunpack.c.h.b16 %v2210
        %v3002 = vunpack.c.l.b16 %v2211
        %v3003 = vunpack.c.h.b16 %v2211
        %v3004 = vunpack.c.l.b16 %v2212
        %v3005 = vunpack.c.h.b16 %v2212
        %v3006 = vunpack.c.l.b16 %v2213
        %v3007 = vunpack.c.h.b16 %v2213
        %v3008 = vunpack.c.l.b16 %v2214
        %v3009 = vunpack.c.h.b16 %v2214
        %v3010 = vunpack.c.l.b16 %v2215
        %v3011 = vunpack.c.h.b16 %v2215
        %v3012 = vunpack.c.l.b16 %v2216
        %v3013 = vunpack.c.h.b16 %v2216
        %v3014 = vunpack.c.l.b16 %v2217
        %v3015 = vunpack.c.h.b16 %v2217
        %v3016 = vunpack.c.l.b16 %v2218
        %v3017 = vunpack.c.h.b16 %v2218
        %v3018 = vunpack.c.l.b16 %v2219
        %v3019 = vunpack.c.h.b16 %v2219
        %v3020 = vunpack.c.l.b16 %v2220
        %v3021 = vunpack.c.h.b16 %v2220
        %v3022 = vunpack.c.l.b16 %v2221
        %v3023 = vunpack.c.h.b16 %v2221
        %v3024 = vunpack.c.l.b16 %v2222
        %v3025 = vunpack.c.h.b16 %v2222
        %v3026 = vunpack.c.l.b16 %v2223
        %v3027 = vunpack.c.h.b16 %v2223
        %v3028 = vunpack.c.l.b16 %v2224
        %v3029 = vunpack.c.h.b16 %v2224
        %v3030 = vunpack.c.l.b16 %v2225
        %v3031 = vunpack.c.h.b16 %v2225
        %v3032 = vunpack.c.l.b16 %v2226
        %v3033 = vunpack.c.h.b16 %v2226
        %v3034 = vunpack.c.l.b16 %v2227
        %v3035 = vunpack.c.h.b16 %v2227
        %v3036 = vunpack.c.l.b16 %v2228
        %v3037 = vunpack.c.h.b16 %v2228
        %v3038 = vunpack.c.l.b16 %v2229
        %v3039 = vunpack.c.h.b16 %v2229
        %v3040 = vunpack.c.l.b16 %v2230
        %v3041 = vunpack.c.h.b16 %v2230
        %v3042 = vunpack.c.l.b16 %v2231
        %v3043 = vunpack.c.h.b16 %v2231
        %v3044 = vunpack.c.l.b16 %v2232
        %v3045 = vunpack.c.h.b16 %v2232
        %v3046 = vunpack.c.l.b16 %v2233
        %v3047 = vunpack.c.h.b16 %v2233
        %v3048 = vunpack.c.l.b16 %v2234
        %v3049 = vunpack.c.h.b16 %v2234
        %v3050 = vunpack.c.l.b16 %v2235
        %v3051 = vunpack.c.h.b16 %v2235
        %v3052 = vunpack.c.l.b16 %v2236
        %v3053 = vunpack.c.h.b16 %v2236
        %v3054 = vunpack.c.l.b16 %v2237
        %v3055 = vunpack.c.h.b16 %v2237
        %v3056 = vunpack.c.l.b16 %v2238
        %v3057 = vunpack.c.h.b16 %v2238
        %v3058 = vunpack.c.l.b16 %v2239
        %v3059 = vunpack.c.h.b16 %v2239
        %v3060 = vunpack.c.l.b16 %v2240
        %v3061 = vunpack.c.h.b16 %v2240
        %v3062 = vunpack.c.l.b16 %v2241
        %v3063 = vunpack.c.h.b16 %v2241
        %v3064 = vunpack.c.l.b16 %v2242
        %v3065 = vunpack.c.h.b16 %v2242
        %v3066 = vunpack.c.l.b16 %v2243
        %v3067 = vunpack.c.h.b16 %v2243
        %v3068 = vunpack.c.l.b16 %v2244
        %v3069 = vunpack.c.h.b16 %v2244
        %v3070 = vunpack.c.l.b16 %v2245
        %v3071 = vunpack.c.h.b16 %v2245
        %v3072 = vpack.c.b16 %v2544, %v2528
        %v3073 = vpack.c.b16 %v2545, %v2529
        %v3074 = vpack.c.b16 %v2546, %v2530
        %v3075 = vpack.c.b16 %v2547, %v2531
        %v3076 = vpack.c.b16 %v2548, %v2532
        %v3077 = vpack.c.b16 %v2549, %v2533
        %v3078 = vpack.c.b16 %v2550, %v2534
        %v3079 = vpack.c.b16 %v2551, %v2535
        %v3080 = vpack.c.b16 %v2552, %v2536
        %v3081 = vpack.c.b16 %v2553, %v2537
        %v3082 = vpack.c.b16 %v2554, %v2538
        %v3083 = vpack.c.b16 %v2555, %v2539
        %v3084 = vpack.c.b16 %v2556, %v2540
        %v3085 = vpack.c.b16 %v2557, %v2541
        %v3086 = vpack.c.b16 %v2558, %v2542
        %v3087 = vpack.c.b16 %v2559, %v2543
        %v3088 = vpack.c.b16 %v2576, %v2560
        %v3089 = vpack.c.b16 %v2577, %v2561
        %v3090 = vpack.c.b16 %v2578, %v2562
        %v3091 = vpack.c.b16 %v2579, %v2563
        %v3092 = vpack.c.b16 %v2580, %v2564
        %v3093 = vpack.c.b16 %v2581, %v2565
        %v3094 = vpack.c.b16 %v2582, %v2566
        %v3095 = vpack.c.b16 %v2583, %v2567
        %v3096 = vpack.c.b16 %v2584, %v2568
        %v3097 = vpack.c.b16 %v2585, %v2569
        %v3098 = vpack.c.b16 %v2586, %v2570
        %v3099 = vpack.c.b16 %v2587, %v2571
        %v3100 = vpack.c.b16 %v2588, %v2572
        %v3101 = vpack.c.b16 %v2589, %v2573
        %v3102 = vpack.c.b16 %v2590, %v2574
        %v3103 = vpack.c.b16 %v2591, %v2575
        %v3104 = vpack.c.b16 %v2608, %v2592
        %v3105 = vpack.c.b16 %v2609, %v2593
        %v3106 = vpack.c.b16 %v2610, %v2594
        %v3107 = vpack.c.b16 %v2611, %v2595
        %v3108 = vpack.c.b16 %v2612, %v2596
        %v3109 = vpack.c.b16 %v2613, %v2597
        %v3110 = vpack.c.b16 %v2614, %v2598
        %v3111 = vpack.c.b16 %v2615, %v2599
        %v3112 = vpack.c.b16 %v2616, %v2600
        %v3113 = vpack.c.b16 %v2617, %v2601
        %v3114 = vpack.c.b16 %v2618, %v2602
        %v3115 = vpack.c.b16 %v2619, %v2603
        %v3116 = vpack.c.b16 %v2620, %v2604
        %v3117 = vpack.c.b16 %v2621, %v2605
        %v3118 = vpack.c.b16 %v2622, %v2606
        %v3119 = vpack.c.b16 %v2623, %v2607
        %v3120 = vpack.c.b16 %v2640, %v2624
        %v3121 = vpack.c.b16 %v2641, %v2625
        %v3122 = vpack.c.b16 %v2642, %v2626
        %v3123 = vpack.c.b16 %v2643, %v2627
        %v3124 = vpack.c.b16 %v2644, %v2628
        %v3125 = vpack.c.b16 %v2645, %v2629
        %v3126 = vpack.c.b16 %v2646, %v2630
        %v3127 = vpack.c.b16 %v2647, %v2631
        %v3128 = vpack.c.b16 %v2648, %v2632
        %v3129 = vpack.c.b16 %v2649, %v2633
        %v3130 = vpack.c.b16 %v2650, %v2634
        %v3131 = vpack.c.b16 %v2651, %v2635
        %v3132 = vpack.c.b16 %v2652, %v2636
        %v3133 = vpack.c.b16 %v2653, %v2637
        %v3134 = vpack.c.b16 %v2654, %v2638
        %v3135 = vpack.c.b16 %v2655, %v2639
        %v3136 = vpack.c.b16 %v2672, %v2656
        %v3137 = vpack.c.b16 %v2673, %v2657
        %v3138 = vpack.c.b16 %v2674, %v2658
        %v3139 = vpack.c.b16 %v2675, %v2659
        %v3140 = vpack.c.b16 %v2676, %v2660
        %v3141 = vpack.c.b16 %v2677, %v2661
        %v3142 = vpack.c.b16 %v2678, %v2662
        %v3143 = vpack.c.b16 %v2679, %v2663
        %v3144 = vpack.c.b16 %v2680, %v2664
        %v3145 = vpack.c.b16 %v2681, %v2665
        %v3146 = vpack.c.b16 %v2682, %v2666
        %v3147 = vpack.c.b16 %v2683, %v2667
        %v3148 = vpack.c.b16 %v2684, %v2668
        %v3149 = vpack.c.b16 %v2685, %v2669
        %v3150 = vpack.c.b16 %v2686, %v2670
        %v3151 = vpack.c.b16 %v2687, %v2671
        %v3152 = vpack.c.b16 %v2704, %v2688
        %v3153 = vpack.c.b16 %v2705, %v2689
        %v3154 = vpack.c.b16 %v2706, %v2690
        %v3155 = vpack.c.b16 %v2707, %v2691
        %v3156 = vpack.c.b16 %v2708, %v2692
        %v3157 = vpack.c.b16 %v2709, %v2693
        %v3158 = vpack.c.b16 %v2710, %v2694
        %v3159 = vpack.c.b16 %v2711, %v2695
        %v3160 = vpack.c.b16 %v2712, %v2696
        %v3161 = vpack.c.b16 %v2713, %v2697
        %v3162 = vpack.c.b16 %v2714, %v2698
        %v3163 = vpack.c.b16 %v2715, %v2699
        %v3164 = vpack.c.b16 %v2716, %v2700
        %v3165 = vpack.c.b16 %v2717, %v2701
        %v3166 = vpack.c.b16 %v2718, %v2702
        %v3167 = vpack.c.b16 %v2719, %v2703
        %v3168 = vpack.c.b16 %v2736, %v2720
        %v3169 = vpack.c.b16 %v2737, %v2721
        %v3170 = vpack.c.b16 %v2738, %v2722
        %v3171 = vpack.c.b16 %v2739, %v2723
        %v3172 = vpack.c.b16 %v2740, %v2724
        %v3173 = vpack.c.b16 %v2741, %v2725
        %v3174 = vpack.c.b16 %v2742, %v2726
        %v3175 = vpack.c.b16 %v2743, %v2727
        %v3176 = vpack.c.b16 %v2744, %v2728
        %v3177 = vpack.c.b16 %v2745, %v2729
        %v3178 = vpack.c.b16 %v2746, %v2730
        %v3179 = vpack.c.b16 %v2747, %v2731
        %v3180 = vpack.c.b16 %v2748, %v2732
        %v3181 = vpack.c.b16 %v2749, %v2733
        %v3182 = vpack.c.b16 %v2750, %v2734
        %v3183 = vpack.c.b16 %v2751, %v2735
        %v3184 = vpack.c.b16 %v2768, %v2752
        %v3185 = vpack.c.b16 %v2769, %v2753
        %v3186 = vpack.c.b16 %v2770, %v2754
        %v3187 = vpack.c.b16 %v2771, %v2755
        %v3188 = vpack.c.b16 %v2772, %v2756
        %v3189 = vpack.c.b16 %v2773, %v2757
        %v3190 = vpack.c.b16 %v2774, %v2758
        %v3191 = vpack.c.b16 %v2775, %v2759
        %v3192 = vpack.c.b16 %v2776, %v2760
        %v3193 = vpack.c.b16 %v2777, %v2761
        %v3194 = vpack.c.b16 %v2778, %v2762
        %v3195 = vpack.c.b16 %v2779, %v2763
        %v3196 = vpack.c.b16 %v2780, %v2764
        %v3197 = vpack.c.b16 %v2781, %v2765
        %v3198 = vpack.c.b16 %v2782, %v2766
        %v3199 = vpack.c.b16 %v2783, %v2767
        %v3200 = vpack.c.b16 %v2800, %v2784
        %v3201 = vpack.c.b16 %v2801, %v2785
        %v3202 = vpack.c.b16 %v2802, %v2786
        %v3203 = vpack.c.b16 %v2803, %v2787
        %v3204 = vpack.c.b16 %v2804, %v2788
        %v3205 = vpack.c.b16 %v2805, %v2789
        %v3206 = vpack.c.b16 %v2806, %v2790
        %v3207 = vpack.c.b16 %v2807, %v2791
        %v3208 = vpack.c.b16 %v2808, %v2792
        %v3209 = vpack.c.b16 %v2809, %v2793
        %v3210 = vpack.c.b16 %v2810, %v2794
        %v3211 = vpack.c.b16 %v2811, %v2795
        %v3212 = vpack.c.b16 %v2812, %v2796
        %v3213 = vpack.c.b16 %v2813, %v2797
        %v3214 = vpack.c.b16 %v2814, %v2798
        %v3215 = vpack.c.b16 %v2815, %v2799
        %v3216 = vpack.c.b16 %v2832, %v2816
        %v3217 = vpack.c.b16 %v2833, %v2817
        %v3218 = vpack.c.b16 %v2834, %v2818
        %v3219 = vpack.c.b16 %v2835, %v2819
        %v3220 = vpack.c.b16 %v2836, %v2820
        %v3221 = vpack.c.b16 %v2837, %v2821
        %v3222 = vpack.c.b16 %v2838, %v2822
        %v3223 = vpack.c.b16 %v2839, %v2823
        %v3224 = vpack.c.b16 %v2840, %v2824
        %v3225 = vpack.c.b16 %v2841, %v2825
        %v3226 = vpack.c.b16 %v2842, %v2826
        %v3227 = vpack.c.b16 %v2843, %v2827
        %v3228 = vpack.c.b16 %v2844, %v2828
        %v3229 = vpack.c.b16 %v2845, %v2829
        %v3230 = vpack.c.b16 %v2846, %v2830
        %v3231 = vpack.c.b16 %v2847, %v2831
        %v3232 = vpack.c.b16 %v2864, %v2848
        %v3233 = vpack.c.b16 %v2865, %v2849
        %v3234 = vpack.c.b16 %v2866, %v2850
        %v3235 = vpack.c.b16 %v2867, %v2851
        %v3236 = vpack.c.b16 %v2868, %v2852
        %v3237 = vpack.c.b16 %v2869, %v2853
        %v3238 = vpack.c.b16 %v2870, %v2854
        %v3239 = vpack.c.b16 %v2871, %v2855
        %v3240 = vpack.c.b16 %v2872, %v2856
        %v3241 = vpack.c.b16 %v2873, %v2857
        %v3242 = vpack.c.b16 %v2874, %v2858
        %v3243 = vpack.c.b16 %v2875, %v2859
        %v3244 = vpack.c.b16 %v2876, %v2860
        %v3245 = vpack.c.b16 %v2877, %v2861
        %v3246 = vpack.c.b16 %v2878, %v2862
        %v3247 = vpack.c.b16 %v2879, %v2863
        %v3248 = vpack.c.b16 %v2896, %v2880
        %v3249 = vpack.c.b16 %v2897, %v2881
        %v3250 = vpack.c.b16 %v2898, %v2882
        %v3251 = vpack.c.b16 %v2899, %v2883
        %v3252 = vpack.c.b16 %v2900, %v2884
        %v3253 = vpack.c.b16 %v2901, %v2885
        %v3254 = vpack.c.b16 %v2902, %v2886
        %v3255 = vpack.c.b16 %v2903, %v2887
        %v3256 = vpack.c.b16 %v2904, %v2888
        %v3257 = vpack.c.b16 %v2905, %v2889
        %v3258 = vpack.c.b16 %v2906, %v2890
        %v3259 = vpack.c.b16 %v2907, %v2891
        %v3260 = vpack.c.b16 %v2908, %v2892
        %v3261 = vpack.c.b16 %v2909, %v2893
        %v3262 = vpack.c.b16 %v2910, %v2894
        %v3263 = vpack.c.b16 %v2911, %v2895
        %v3264 = vpack.c.b16 %v2928, %v2912
        %v3265 = vpack.c.b16 %v2929, %v2913
        %v3266 = vpack.c.b16 %v2930, %v2914
        %v3267 = vpack.c.b16 %v2931, %v2915
        %v3268 = vpack.c.b16 %v2932, %v2916
        %v3269 = vpack.c.b16 %v2933, %v2917
        %v3270 = vpack.c.b16 %v2934, %v2918
        %v3271 = vpack.c.b16 %v2935, %v2919
        %v3272 = vpack.c.b16 %v2936, %v2920
        %v3273 = vpack.c.b16 %v2937, %v2921
        %v3274 = vpack.c.b16 %v2938, %v2922
        %v3275 = vpack.c.b16 %v2939, %v2923
        %v3276 = vpack.c.b16 %v2940, %v2924
        %v3277 = vpack.c.b16 %v2941, %v2925
        %v3278 = vpack.c.b16 %v2942, %v2926
        %v3279 = vpack.c.b16 %v2943, %v2927
        %v3280 = vpack.c.b16 %v2960, %v2944
        %v3281 = vpack.c.b16 %v2961, %v2945
        %v3282 = vpack.c.b16 %v2962, %v2946
        %v3283 = vpack.c.b16 %v2963, %v2947
        %v3284 = vpack.c.b16 %v2964, %v2948
        %v3285 = vpack.c.b16 %v2965, %v2949
        %v3286 = vpack.c.b16 %v2966, %v2950
        %v3287 = vpack.c.b16 %v2967, %v2951
        %v3288 = vpack.c.b16 %v2968, %v2952
        %v3289 = vpack.c.b16 %v2969, %v2953
        %v3290 = vpack.c.b16 %v2970, %v2954
        %v3291 = vpack.c.b16 %v2971, %v2955
        %v3292 = vpack.c.b16 %v2972, %v2956
        %v3293 = vpack.c.b16 %v2973, %v2957
        %v3294 = vpack.c.b16 %v2974, %v2958
        %v3295 = vpack.c.b16 %v2975, %v2959
        %v3296 = vpack.c.b16 %v2992, %v2976
        %v3297 = vpack.c.b16 %v2993, %v2977
        %v3298 = vpack.c.b16 %v2994, %v2978
        %v3299 = vpack.c.b16 %v2995, %v2979
        %v3300 = vpack.c.b16 %v2996, %v2980
        %v3301 = vpack.c.b16 %v2997, %v2981
        %v3302 = vpack.c.b16 %v2998, %v2982
        %v3303 = vpack.c.b16 %v2999, %v2983
        %v3304 = vpack.c.b16 %v3000, %v2984
        %v3305 = vpack.c.b16 %v3001, %v2985
        %v3306 = vpack.c.b16 %v3002, %v2986
        %v3307 = vpack.c.b16 %v3003, %v2987
        %v3308 = vpack.c.b16 %v3004, %v2988
        %v3309 = vpack.c.b16 %v3005, %v2989
        %v3310 = vpack.c.b16 %v3006, %v2990
        %v3311 = vpack.c.b16 %v3007, %v2991
        %v3312 = vpack.c.b16 %v3024, %v3008
        %v3313 = vpack.c.b16 %v3025, %v3009
        %v3314 = vpack.c.b16 %v3026, %v3010
        %v3315 = vpack.c.b16 %v3027, %v3011
        %v3316 = vpack.c.b16 %v3028, %v3012
        %v3317 = vpack.c.b16 %v3029, %v3013
        %v3318 = vpack.c.b16 %v3030, %v3014
        %v3319 = vpack.c.b16 %v3031, %v3015
        %v3320 = vpack.c.b16 %v3032, %v3016
        %v3321 = vpack.c.b16 %v3033, %v3017
        %v3322 = vpack.c.b16 %v3034, %v3018
        %v3323 = vpack.c.b16 %v3035, %v3019
        %v3324 = vpack.c.b16 %v3036, %v3020
        %v3325 = vpack.c.b16 %v3037, %v3021
        %v3326 = vpack.c.b16 %v3038, %v3022
        %v3327 = vpack.c.b16 %v3039, %v3023
        %v3328 = vpack.c.b16 %v3056, %v3040
        %v3329 = vpack.c.b16 %v3057, %v3041
        %v3330 = vpack.c.b16 %v3058, %v3042
        %v3331 = vpack.c.b16 %v3059, %v3043
        %v3332 = vpack.c.b16 %v3060, %v3044
        %v3333 = vpack.c.b16 %v3061, %v3045
        %v3334 = vpack.c.b16 %v3062, %v3046
        %v3335 = vpack.c.b16 %v3063, %v3047
        %v3336 = vpack.c.b16 %v3064, %v3048
        %v3337 = vpack.c.b16 %v3065, %v3049
        %v3338 = vpack.c.b16 %v3066, %v3050
        %v3339 = vpack.c.b16 %v3067, %v3051
        %v3340 = vpack.c.b16 %v3068, %v3052
        %v3341 = vpack.c.b16 %v3069, %v3053
        %v3342 = vpack.c.b16 %v3070, %v3054
        %v3343 = vpack.c.b16 %v3071, %v3055
        %vm3616 = vcmask 130048
        %v3618 = vsel %vm3616, %v2253, 0
        %3620 = vmatprep.subr.bf16.mxu0 %v3185
        %3621 = vmatpush1.bf16.msra.mxu0 %v3184
        %3622 = vmatprep.subr.bf16.mxu0 %v3169
        %3623 = vmatpush1.bf16.msra.mxu0 %v3168
        %3624 = vmatprep.subr.bf16.mxu0 %v3153
        %3625 = vmatpush1.bf16.msra.mxu0 %v3152
        %3626 = vmatprep.subr.bf16.mxu0 %v3137
        %3627 = vmatpush1.bf16.msra.mxu0 %v3136
        %3628 = vmatprep.subr.bf16.mxu0 %v3121
        %3629 = vmatpush1.bf16.msra.mxu0 %v3120
        %3630 = vmatprep.subr.bf16.mxu0 %v3105
        %3631 = vmatpush1.bf16.msra.mxu0 %v3104
        %3632 = vmatprep.subr.bf16.mxu0 %v3089
        %3633 = vmatpush1.bf16.msra.mxu0 %v3088
        %3634 = vmatprep.subr.bf16.mxu0 %v3073
        %3635 = vmatpush1.bf16.msra.mxu0 %v3072
        %3636 = vmatprep.subr.bf16.mxu0 %v3313
        %3637 = vmatpush2.bf16.msra.mxu0 %v3312
        %3638 = vmatprep.subr.bf16.mxu0 %v3297
        %3639 = vmatpush2.bf16.msra.mxu0 %v3296
        %3640 = vmatprep.subr.bf16.mxu0 %v3281
        %3641 = vmatpush2.bf16.msra.mxu0 %v3280
        %3642 = vmatprep.subr.bf16.mxu0 %v3265
        %3643 = vmatpush2.bf16.msra.mxu0 %v3264
        %3644 = vmatprep.subr.bf16.mxu0 %v3249
        %3645 = vmatpush2.bf16.msra.mxu0 %v3248
        %3646 = vmatprep.subr.bf16.mxu0 %v3233
        %3647 = vmatpush2.bf16.msra.mxu0 %v3232
        %3648 = vmatprep.subr.bf16.mxu0 %v3217
        %3649 = vmatpush2.bf16.msra.mxu0 %v3216
        %3650 = vmatprep.subr.bf16.mxu0 %v3201
        %3651 = vmatpush2.bf16.msra.mxu0 %v3200
        %3652 = vmatprep.mubr.bf16.mxu0 %v2252
        %3653 = vmatmul.mubr.bf16.gmra.mxu0 %v2251
        %v3654 = vpop.f32.mrf.mxu0
        %v3655 = vadd.f32 0.0, %v3654
        %v3656 = vpop.f32.mrf.mxu0
        %v3657 = vadd.f32 0.0, %v3656
        %v3658 = vpop.f32.mrf.mxu0
        %v3659 = vpop.f32.mrf.mxu0
        %3660 = vdwg.mxu0
        %3661 = vmatprep.subr.bf16.mxu0 0
        %3662 = vmatpush1.bf16.msra.mxu0 0
        %3663 = vmatprep.subr.bf16.mxu0 0
        %3664 = vmatpush1.bf16.msra.mxu0 0
        %3665 = vmatprep.subr.bf16.mxu0 0
        %3666 = vmatpush1.bf16.msra.mxu0 0
        %3667 = vmatprep.subr.bf16.mxu0 0
        %3668 = vmatpush1.bf16.msra.mxu0 0
        %3669 = vmatprep.subr.bf16.mxu0 0
        %3670 = vmatpush1.bf16.msra.mxu0 0
        %3671 = vmatprep.subr.bf16.mxu0 0
        %3672 = vmatpush1.bf16.msra.mxu0 0
        %3673 = vmatprep.subr.bf16.mxu0 0
        %3674 = vmatpush1.bf16.msra.mxu0 0
        %3675 = vmatprep.subr.bf16.mxu0 %v3329
        %3676 = vmatpush1.bf16.msra.mxu0 %v3328
        %3677 = vmatprep.subr.bf16.mxu0 0
        %3678 = vmatpush2.bf16.msra.mxu0 0
        %3679 = vmatprep.subr.bf16.mxu0 0
        %3680 = vmatpush2.bf16.msra.mxu0 0
        %3681 = vmatprep.subr.bf16.mxu0 0
        %3682 = vmatpush2.bf16.msra.mxu0 0
        %3683 = vmatprep.subr.bf16.mxu0 0
        %3684 = vmatpush2.bf16.msra.mxu0 0
        %3685 = vmatprep.subr.bf16.mxu0 0
        %3686 = vmatpush2.bf16.msra.mxu0 0
        %3687 = vmatprep.subr.bf16.mxu0 0
        %3688 = vmatpush2.bf16.msra.mxu0 0
        %3689 = vmatprep.subr.bf16.mxu0 0
        %3690 = vmatpush2.bf16.msra.mxu0 0
        %3691 = vmatprep.subr.bf16.mxu0 0
        %3692 = vmatpush2.bf16.msra.mxu0 0
        %3693 = vmatprep.mubr.bf16.mxu0 0
        %3694 = vmatmul.mubr.bf16.gmra.mxu0 %v3618
        %v3695 = vpop.f32.mrf.mxu0
        %v3696 = vadd.f32 %v3655, %v3695
        %v3697 = vpop.f32.mrf.mxu0
        %v3698 = vadd.f32 %v3657, %v3697
        %v3699 = vpop.f32.mrf.mxu0
        %v3700 = vpop.f32.mrf.mxu0
        %3701 = vdwg.mxu0
        %3702 = vmatprep.subr.bf16.mxu0 %v3187
        %3703 = vmatpush1.bf16.msra.mxu0 %v3186
        %3704 = vmatprep.subr.bf16.mxu0 %v3171
        %3705 = vmatpush1.bf16.msra.mxu0 %v3170
        %3706 = vmatprep.subr.bf16.mxu0 %v3155
        %3707 = vmatpush1.bf16.msra.mxu0 %v3154
        %3708 = vmatprep.subr.bf16.mxu0 %v3139
        %3709 = vmatpush1.bf16.msra.mxu0 %v3138
        %3710 = vmatprep.subr.bf16.mxu0 %v3123
        %3711 = vmatpush1.bf16.msra.mxu0 %v3122
        %3712 = vmatprep.subr.bf16.mxu0 %v3107
        %3713 = vmatpush1.bf16.msra.mxu0 %v3106
        %3714 = vmatprep.subr.bf16.mxu0 %v3091
        %3715 = vmatpush1.bf16.msra.mxu0 %v3090
        %3716 = vmatprep.subr.bf16.mxu0 %v3075
        %3717 = vmatpush1.bf16.msra.mxu0 %v3074
        %3718 = vmatprep.subr.bf16.mxu0 %v3315
        %3719 = vmatpush2.bf16.msra.mxu0 %v3314
        %3720 = vmatprep.subr.bf16.mxu0 %v3299
        %3721 = vmatpush2.bf16.msra.mxu0 %v3298
        %3722 = vmatprep.subr.bf16.mxu0 %v3283
        %3723 = vmatpush2.bf16.msra.mxu0 %v3282
        %3724 = vmatprep.subr.bf16.mxu0 %v3267
        %3725 = vmatpush2.bf16.msra.mxu0 %v3266
        %3726 = vmatprep.subr.bf16.mxu0 %v3251
        %3727 = vmatpush2.bf16.msra.mxu0 %v3250
        %3728 = vmatprep.subr.bf16.mxu0 %v3235
        %3729 = vmatpush2.bf16.msra.mxu0 %v3234
        %3730 = vmatprep.subr.bf16.mxu0 %v3219
        %3731 = vmatpush2.bf16.msra.mxu0 %v3218
        %3732 = vmatprep.subr.bf16.mxu0 %v3203
        %3733 = vmatpush2.bf16.msra.mxu0 %v3202
        %3734 = vmatprep.mubr.bf16.mxu0 %v2252
        %3735 = vmatmul.mubr.bf16.gmra.mxu0 %v2251
        %v3736 = vpop.f32.mrf.mxu0
        %v3737 = vadd.f32 0.0, %v3736
        %v3738 = vpop.f32.mrf.mxu0
        %v3739 = vadd.f32 0.0, %v3738
        %v3740 = vpop.f32.mrf.mxu0
        %v3741 = vpop.f32.mrf.mxu0
        %3742 = vdwg.mxu0
        %3743 = vmatprep.subr.bf16.mxu0 0
        %3744 = vmatpush1.bf16.msra.mxu0 0
        %3745 = vmatprep.subr.bf16.mxu0 0
        %3746 = vmatpush1.bf16.msra.mxu0 0
        %3747 = vmatprep.subr.bf16.mxu0 0
        %3748 = vmatpush1.bf16.msra.mxu0 0
        %3749 = vmatprep.subr.bf16.mxu0 0
        %3750 = vmatpush1.bf16.msra.mxu0 0
        %3751 = vmatprep.subr.bf16.mxu0 0
        %3752 = vmatpush1.bf16.msra.mxu0 0
        %3753 = vmatprep.subr.bf16.mxu0 0
        %3754 = vmatpush1.bf16.msra.mxu0 0
        %3755 = vmatprep.subr.bf16.mxu0 0
        %3756 = vmatpush1.bf16.msra.mxu0 0
        %3757 = vmatprep.subr.bf16.mxu0 %v3331
        %3758 = vmatpush1.bf16.msra.mxu0 %v3330
        %3759 = vmatprep.subr.bf16.mxu0 0
        %3760 = vmatpush2.bf16.msra.mxu0 0
        %3761 = vmatprep.subr.bf16.mxu0 0
        %3762 = vmatpush2.bf16.msra.mxu0 0
        %3763 = vmatprep.subr.bf16.mxu0 0
        %3764 = vmatpush2.bf16.msra.mxu0 0
        %3765 = vmatprep.subr.bf16.mxu0 0
        %3766 = vmatpush2.bf16.msra.mxu0 0
        %3767 = vmatprep.subr.bf16.mxu0 0
        %3768 = vmatpush2.bf16.msra.mxu0 0
        %3769 = vmatprep.subr.bf16.mxu0 0
        %3770 = vmatpush2.bf16.msra.mxu0 0
        %3771 = vmatprep.subr.bf16.mxu0 0
        %3772 = vmatpush2.bf16.msra.mxu0 0
        %3773 = vmatprep.subr.bf16.mxu0 0
        %3774 = vmatpush2.bf16.msra.mxu0 0
        %3775 = vmatprep.mubr.bf16.mxu0 0
        %3776 = vmatmul.mubr.bf16.gmra.mxu0 %v3618
        %v3777 = vpop.f32.mrf.mxu0
        %v3778 = vadd.f32 %v3737, %v3777
        %v3779 = vpop.f32.mrf.mxu0
        %v3780 = vadd.f32 %v3739, %v3779
        %v3781 = vpop.f32.mrf.mxu0
        %v3782 = vpop.f32.mrf.mxu0
        %3783 = vdwg.mxu0
        %3784 = vmatprep.subr.bf16.mxu0 %v3189
        %3785 = vmatpush1.bf16.msra.mxu0 %v3188
        %3786 = vmatprep.subr.bf16.mxu0 %v3173
        %3787 = vmatpush1.bf16.msra.mxu0 %v3172
        %3788 = vmatprep.subr.bf16.mxu0 %v3157
        %3789 = vmatpush1.bf16.msra.mxu0 %v3156
        %3790 = vmatprep.subr.bf16.mxu0 %v3141
        %3791 = vmatpush1.bf16.msra.mxu0 %v3140
        %3792 = vmatprep.subr.bf16.mxu0 %v3125
        %3793 = vmatpush1.bf16.msra.mxu0 %v3124
        %3794 = vmatprep.subr.bf16.mxu0 %v3109
        %3795 = vmatpush1.bf16.msra.mxu0 %v3108
        %3796 = vmatprep.subr.bf16.mxu0 %v3093
        %3797 = vmatpush1.bf16.msra.mxu0 %v3092
        %3798 = vmatprep.subr.bf16.mxu0 %v3077
        %3799 = vmatpush1.bf16.msra.mxu0 %v3076
        %3800 = vmatprep.subr.bf16.mxu0 %v3317
        %3801 = vmatpush2.bf16.msra.mxu0 %v3316
        %3802 = vmatprep.subr.bf16.mxu0 %v3301
        %3803 = vmatpush2.bf16.msra.mxu0 %v3300
        %3804 = vmatprep.subr.bf16.mxu0 %v3285
        %3805 = vmatpush2.bf16.msra.mxu0 %v3284
        %3806 = vmatprep.subr.bf16.mxu0 %v3269
        %3807 = vmatpush2.bf16.msra.mxu0 %v3268
        %3808 = vmatprep.subr.bf16.mxu0 %v3253
        %3809 = vmatpush2.bf16.msra.mxu0 %v3252
        %3810 = vmatprep.subr.bf16.mxu0 %v3237
        %3811 = vmatpush2.bf16.msra.mxu0 %v3236
        %3812 = vmatprep.subr.bf16.mxu0 %v3221
        %3813 = vmatpush2.bf16.msra.mxu0 %v3220
        %3814 = vmatprep.subr.bf16.mxu0 %v3205
        %3815 = vmatpush2.bf16.msra.mxu0 %v3204
        %3816 = vmatprep.mubr.bf16.mxu0 %v2252
        %3817 = vmatmul.mubr.bf16.gmra.mxu0 %v2251
        %v3818 = vpop.f32.mrf.mxu0
        %v3819 = vadd.f32 0.0, %v3818
        %v3820 = vpop.f32.mrf.mxu0
        %v3821 = vadd.f32 0.0, %v3820
        %v3822 = vpop.f32.mrf.mxu0
        %v3823 = vpop.f32.mrf.mxu0
        %3824 = vdwg.mxu0
        %3825 = vmatprep.subr.bf16.mxu0 0
        %3826 = vmatpush1.bf16.msra.mxu0 0
        %3827 = vmatprep.subr.bf16.mxu0 0
        %3828 = vmatpush1.bf16.msra.mxu0 0
        %3829 = vmatprep.subr.bf16.mxu0 0
        %3830 = vmatpush1.bf16.msra.mxu0 0
        %3831 = vmatprep.subr.bf16.mxu0 0
        %3832 = vmatpush1.bf16.msra.mxu0 0
        %3833 = vmatprep.subr.bf16.mxu0 0
        %3834 = vmatpush1.bf16.msra.mxu0 0
        %3835 = vmatprep.subr.bf16.mxu0 0
        %3836 = vmatpush1.bf16.msra.mxu0 0
        %3837 = vmatprep.subr.bf16.mxu0 0
        %3838 = vmatpush1.bf16.msra.mxu0 0
        %3839 = vmatprep.subr.bf16.mxu0 %v3333
        %3840 = vmatpush1.bf16.msra.mxu0 %v3332
        %3841 = vmatprep.subr.bf16.mxu0 0
        %3842 = vmatpush2.bf16.msra.mxu0 0
        %3843 = vmatprep.subr.bf16.mxu0 0
        %3844 = vmatpush2.bf16.msra.mxu0 0
        %3845 = vmatprep.subr.bf16.mxu0 0
        %3846 = vmatpush2.bf16.msra.mxu0 0
        %3847 = vmatprep.subr.bf16.mxu0 0
        %3848 = vmatpush2.bf16.msra.mxu0 0
        %3849 = vmatprep.subr.bf16.mxu0 0
        %3850 = vmatpush2.bf16.msra.mxu0 0
        %3851 = vmatprep.subr.bf16.mxu0 0
        %3852 = vmatpush2.bf16.msra.mxu0 0
        %3853 = vmatprep.subr.bf16.mxu0 0
        %3854 = vmatpush2.bf16.msra.mxu0 0
        %3855 = vmatprep.subr.bf16.mxu0 0
        %3856 = vmatpush2.bf16.msra.mxu0 0
        %3857 = vmatprep.mubr.bf16.mxu0 0
        %3858 = vmatmul.mubr.bf16.gmra.mxu0 %v3618
        %v3859 = vpop.f32.mrf.mxu0
        %v3860 = vadd.f32 %v3819, %v3859
        %v3861 = vpop.f32.mrf.mxu0
        %v3862 = vadd.f32 %v3821, %v3861
        %v3863 = vpop.f32.mrf.mxu0
        %v3864 = vpop.f32.mrf.mxu0
        %3865 = vdwg.mxu0
        %3866 = vmatprep.subr.bf16.mxu0 %v3191
        %3867 = vmatpush1.bf16.msra.mxu0 %v3190
        %3868 = vmatprep.subr.bf16.mxu0 %v3175
        %3869 = vmatpush1.bf16.msra.mxu0 %v3174
        %3870 = vmatprep.subr.bf16.mxu0 %v3159
        %3871 = vmatpush1.bf16.msra.mxu0 %v3158
        %3872 = vmatprep.subr.bf16.mxu0 %v3143
        %3873 = vmatpush1.bf16.msra.mxu0 %v3142
        %3874 = vmatprep.subr.bf16.mxu0 %v3127
        %3875 = vmatpush1.bf16.msra.mxu0 %v3126
        %3876 = vmatprep.subr.bf16.mxu0 %v3111
        %3877 = vmatpush1.bf16.msra.mxu0 %v3110
        %3878 = vmatprep.subr.bf16.mxu0 %v3095
        %3879 = vmatpush1.bf16.msra.mxu0 %v3094
        %3880 = vmatprep.subr.bf16.mxu0 %v3079
        %3881 = vmatpush1.bf16.msra.mxu0 %v3078
        %3882 = vmatprep.subr.bf16.mxu0 %v3319
        %3883 = vmatpush2.bf16.msra.mxu0 %v3318
        %3884 = vmatprep.subr.bf16.mxu0 %v3303
        %3885 = vmatpush2.bf16.msra.mxu0 %v3302
        %3886 = vmatprep.subr.bf16.mxu0 %v3287
        %3887 = vmatpush2.bf16.msra.mxu0 %v3286
        %3888 = vmatprep.subr.bf16.mxu0 %v3271
        %3889 = vmatpush2.bf16.msra.mxu0 %v3270
        %3890 = vmatprep.subr.bf16.mxu0 %v3255
        %3891 = vmatpush2.bf16.msra.mxu0 %v3254
        %3892 = vmatprep.subr.bf16.mxu0 %v3239
        %3893 = vmatpush2.bf16.msra.mxu0 %v3238
        %3894 = vmatprep.subr.bf16.mxu0 %v3223
        %3895 = vmatpush2.bf16.msra.mxu0 %v3222
        %3896 = vmatprep.subr.bf16.mxu0 %v3207
        %3897 = vmatpush2.bf16.msra.mxu0 %v3206
        %3898 = vmatprep.mubr.bf16.mxu0 %v2252
        %3899 = vmatmul.mubr.bf16.gmra.mxu0 %v2251
        %v3900 = vpop.f32.mrf.mxu0
        %v3901 = vadd.f32 0.0, %v3900
        %v3902 = vpop.f32.mrf.mxu0
        %v3903 = vadd.f32 0.0, %v3902
        %v3904 = vpop.f32.mrf.mxu0
        %v3905 = vpop.f32.mrf.mxu0
        %3906 = vdwg.mxu0
        %3907 = vmatprep.subr.bf16.mxu0 0
        %3908 = vmatpush1.bf16.msra.mxu0 0
        %3909 = vmatprep.subr.bf16.mxu0 0
        %3910 = vmatpush1.bf16.msra.mxu0 0
        %3911 = vmatprep.subr.bf16.mxu0 0
        %3912 = vmatpush1.bf16.msra.mxu0 0
        %3913 = vmatprep.subr.bf16.mxu0 0
        %3914 = vmatpush1.bf16.msra.mxu0 0
        %3915 = vmatprep.subr.bf16.mxu0 0
        %3916 = vmatpush1.bf16.msra.mxu0 0
        %3917 = vmatprep.subr.bf16.mxu0 0
        %3918 = vmatpush1.bf16.msra.mxu0 0
        %3919 = vmatprep.subr.bf16.mxu0 0
        %3920 = vmatpush1.bf16.msra.mxu0 0
        %3921 = vmatprep.subr.bf16.mxu0 %v3335
        %3922 = vmatpush1.bf16.msra.mxu0 %v3334
        %3923 = vmatprep.subr.bf16.mxu0 0
        %3924 = vmatpush2.bf16.msra.mxu0 0
        %3925 = vmatprep.subr.bf16.mxu0 0
        %3926 = vmatpush2.bf16.msra.mxu0 0
        %3927 = vmatprep.subr.bf16.mxu0 0
        %3928 = vmatpush2.bf16.msra.mxu0 0
        %3929 = vmatprep.subr.bf16.mxu0 0
        %3930 = vmatpush2.bf16.msra.mxu0 0
        %3931 = vmatprep.subr.bf16.mxu0 0
        %3932 = vmatpush2.bf16.msra.mxu0 0
        %3933 = vmatprep.subr.bf16.mxu0 0
        %3934 = vmatpush2.bf16.msra.mxu0 0
        %3935 = vmatprep.subr.bf16.mxu0 0
        %3936 = vmatpush2.bf16.msra.mxu0 0
        %3937 = vmatprep.subr.bf16.mxu0 0
        %3938 = vmatpush2.bf16.msra.mxu0 0
        %3939 = vmatprep.mubr.bf16.mxu0 0
        %3940 = vmatmul.mubr.bf16.gmra.mxu0 %v3618
        %v3941 = vpop.f32.mrf.mxu0
        %v3942 = vadd.f32 %v3901, %v3941
        %v3943 = vpop.f32.mrf.mxu0
        %v3944 = vadd.f32 %v3903, %v3943
        %v3945 = vpop.f32.mrf.mxu0
        %v3946 = vpop.f32.mrf.mxu0
        %3947 = vdwg.mxu0
        %3948 = vmatprep.subr.bf16.mxu0 %v3193
        %3949 = vmatpush1.bf16.msra.mxu0 %v3192
        %3950 = vmatprep.subr.bf16.mxu0 %v3177
        %3951 = vmatpush1.bf16.msra.mxu0 %v3176
        %3952 = vmatprep.subr.bf16.mxu0 %v3161
        %3953 = vmatpush1.bf16.msra.mxu0 %v3160
        %3954 = vmatprep.subr.bf16.mxu0 %v3145
        %3955 = vmatpush1.bf16.msra.mxu0 %v3144
        %3956 = vmatprep.subr.bf16.mxu0 %v3129
        %3957 = vmatpush1.bf16.msra.mxu0 %v3128
        %3958 = vmatprep.subr.bf16.mxu0 %v3113
        %3959 = vmatpush1.bf16.msra.mxu0 %v3112
        %3960 = vmatprep.subr.bf16.mxu0 %v3097
        %3961 = vmatpush1.bf16.msra.mxu0 %v3096
        %3962 = vmatprep.subr.bf16.mxu0 %v3081
        %3963 = vmatpush1.bf16.msra.mxu0 %v3080
        %3964 = vmatprep.subr.bf16.mxu0 %v3321
        %3965 = vmatpush2.bf16.msra.mxu0 %v3320
        %3966 = vmatprep.subr.bf16.mxu0 %v3305
        %3967 = vmatpush2.bf16.msra.mxu0 %v3304
        %3968 = vmatprep.subr.bf16.mxu0 %v3289
        %3969 = vmatpush2.bf16.msra.mxu0 %v3288
        %3970 = vmatprep.subr.bf16.mxu0 %v3273
        %3971 = vmatpush2.bf16.msra.mxu0 %v3272
        %3972 = vmatprep.subr.bf16.mxu0 %v3257
        %3973 = vmatpush2.bf16.msra.mxu0 %v3256
        %3974 = vmatprep.subr.bf16.mxu0 %v3241
        %3975 = vmatpush2.bf16.msra.mxu0 %v3240
        %3976 = vmatprep.subr.bf16.mxu0 %v3225
        %3977 = vmatpush2.bf16.msra.mxu0 %v3224
        %3978 = vmatprep.subr.bf16.mxu0 %v3209
        %3979 = vmatpush2.bf16.msra.mxu0 %v3208
        %3980 = vmatprep.mubr.bf16.mxu0 %v2252
        %3981 = vmatmul.mubr.bf16.gmra.mxu0 %v2251
        %v3982 = vpop.f32.mrf.mxu0
        %v3983 = vadd.f32 0.0, %v3982
        %v3984 = vpop.f32.mrf.mxu0
        %v3985 = vadd.f32 0.0, %v3984
        %v3986 = vpop.f32.mrf.mxu0
        %v3987 = vpop.f32.mrf.mxu0
        %3988 = vdwg.mxu0
        %3989 = vmatprep.subr.bf16.mxu0 0
        %3990 = vmatpush1.bf16.msra.mxu0 0
        %3991 = vmatprep.subr.bf16.mxu0 0
        %3992 = vmatpush1.bf16.msra.mxu0 0
        %3993 = vmatprep.subr.bf16.mxu0 0
        %3994 = vmatpush1.bf16.msra.mxu0 0
        %3995 = vmatprep.subr.bf16.mxu0 0
        %3996 = vmatpush1.bf16.msra.mxu0 0
        %3997 = vmatprep.subr.bf16.mxu0 0
        %3998 = vmatpush1.bf16.msra.mxu0 0
        %3999 = vmatprep.subr.bf16.mxu0 0
        %4000 = vmatpush1.bf16.msra.mxu0 0
        %4001 = vmatprep.subr.bf16.mxu0 0
        %4002 = vmatpush1.bf16.msra.mxu0 0
        %4003 = vmatprep.subr.bf16.mxu0 %v3337
        %4004 = vmatpush1.bf16.msra.mxu0 %v3336
        %4005 = vmatprep.subr.bf16.mxu0 0
        %4006 = vmatpush2.bf16.msra.mxu0 0
        %4007 = vmatprep.subr.bf16.mxu0 0
        %4008 = vmatpush2.bf16.msra.mxu0 0
        %4009 = vmatprep.subr.bf16.mxu0 0
        %4010 = vmatpush2.bf16.msra.mxu0 0
        %4011 = vmatprep.subr.bf16.mxu0 0
        %4012 = vmatpush2.bf16.msra.mxu0 0
        %4013 = vmatprep.subr.bf16.mxu0 0
        %4014 = vmatpush2.bf16.msra.mxu0 0
        %4015 = vmatprep.subr.bf16.mxu0 0
        %4016 = vmatpush2.bf16.msra.mxu0 0
        %4017 = vmatprep.subr.bf16.mxu0 0
        %4018 = vmatpush2.bf16.msra.mxu0 0
        %4019 = vmatprep.subr.bf16.mxu0 0
        %4020 = vmatpush2.bf16.msra.mxu0 0
        %4021 = vmatprep.mubr.bf16.mxu0 0
        %4022 = vmatmul.mubr.bf16.gmra.mxu0 %v3618
        %v4023 = vpop.f32.mrf.mxu0
        %v4024 = vadd.f32 %v3983, %v4023
        %v4025 = vpop.f32.mrf.mxu0
        %v4026 = vadd.f32 %v3985, %v4025
        %v4027 = vpop.f32.mrf.mxu0
        %v4028 = vpop.f32.mrf.mxu0
        %4029 = vdwg.mxu0
        %4030 = vmatprep.subr.bf16.mxu0 %v3195
        %4031 = vmatpush1.bf16.msra.mxu0 %v3194
        %4032 = vmatprep.subr.bf16.mxu0 %v3179
        %4033 = vmatpush1.bf16.msra.mxu0 %v3178
        %4034 = vmatprep.subr.bf16.mxu0 %v3163
        %4035 = vmatpush1.bf16.msra.mxu0 %v3162
        %4036 = vmatprep.subr.bf16.mxu0 %v3147
        %4037 = vmatpush1.bf16.msra.mxu0 %v3146
        %4038 = vmatprep.subr.bf16.mxu0 %v3131
        %4039 = vmatpush1.bf16.msra.mxu0 %v3130
        %4040 = vmatprep.subr.bf16.mxu0 %v3115
        %4041 = vmatpush1.bf16.msra.mxu0 %v3114
        %4042 = vmatprep.subr.bf16.mxu0 %v3099
        %4043 = vmatpush1.bf16.msra.mxu0 %v3098
        %4044 = vmatprep.subr.bf16.mxu0 %v3083
        %4045 = vmatpush1.bf16.msra.mxu0 %v3082
        %4046 = vmatprep.subr.bf16.mxu0 %v3323
        %4047 = vmatpush2.bf16.msra.mxu0 %v3322
        %4048 = vmatprep.subr.bf16.mxu0 %v3307
        %4049 = vmatpush2.bf16.msra.mxu0 %v3306
        %4050 = vmatprep.subr.bf16.mxu0 %v3291
        %4051 = vmatpush2.bf16.msra.mxu0 %v3290
        %4052 = vmatprep.subr.bf16.mxu0 %v3275
        %4053 = vmatpush2.bf16.msra.mxu0 %v3274
        %4054 = vmatprep.subr.bf16.mxu0 %v3259
        %4055 = vmatpush2.bf16.msra.mxu0 %v3258
        %4056 = vmatprep.subr.bf16.mxu0 %v3243
        %4057 = vmatpush2.bf16.msra.mxu0 %v3242
        %4058 = vmatprep.subr.bf16.mxu0 %v3227
        %4059 = vmatpush2.bf16.msra.mxu0 %v3226
        %4060 = vmatprep.subr.bf16.mxu0 %v3211
        %4061 = vmatpush2.bf16.msra.mxu0 %v3210
        %4062 = vmatprep.mubr.bf16.mxu0 %v2252
        %4063 = vmatmul.mubr.bf16.gmra.mxu0 %v2251
        %v4064 = vpop.f32.mrf.mxu0
        %v4065 = vadd.f32 0.0, %v4064
        %v4066 = vpop.f32.mrf.mxu0
        %v4067 = vadd.f32 0.0, %v4066
        %v4068 = vpop.f32.mrf.mxu0
        %v4069 = vpop.f32.mrf.mxu0
        %4070 = vdwg.mxu0
        %4071 = vmatprep.subr.bf16.mxu0 0
        %4072 = vmatpush1.bf16.msra.mxu0 0
        %4073 = vmatprep.subr.bf16.mxu0 0
        %4074 = vmatpush1.bf16.msra.mxu0 0
        %4075 = vmatprep.subr.bf16.mxu0 0
        %4076 = vmatpush1.bf16.msra.mxu0 0
        %4077 = vmatprep.subr.bf16.mxu0 0
        %4078 = vmatpush1.bf16.msra.mxu0 0
        %4079 = vmatprep.subr.bf16.mxu0 0
        %4080 = vmatpush1.bf16.msra.mxu0 0
        %4081 = vmatprep.subr.bf16.mxu0 0
        %4082 = vmatpush1.bf16.msra.mxu0 0
        %4083 = vmatprep.subr.bf16.mxu0 0
        %4084 = vmatpush1.bf16.msra.mxu0 0
        %4085 = vmatprep.subr.bf16.mxu0 %v3339
        %4086 = vmatpush1.bf16.msra.mxu0 %v3338
        %4087 = vmatprep.subr.bf16.mxu0 0
        %4088 = vmatpush2.bf16.msra.mxu0 0
        %4089 = vmatprep.subr.bf16.mxu0 0
        %4090 = vmatpush2.bf16.msra.mxu0 0
        %4091 = vmatprep.subr.bf16.mxu0 0
        %4092 = vmatpush2.bf16.msra.mxu0 0
        %4093 = vmatprep.subr.bf16.mxu0 0
        %4094 = vmatpush2.bf16.msra.mxu0 0
        %4095 = vmatprep.subr.bf16.mxu0 0
        %4096 = vmatpush2.bf16.msra.mxu0 0
        %4097 = vmatprep.subr.bf16.mxu0 0
        %4098 = vmatpush2.bf16.msra.mxu0 0
        %4099 = vmatprep.subr.bf16.mxu0 0
        %4100 = vmatpush2.bf16.msra.mxu0 0
        %4101 = vmatprep.subr.bf16.mxu0 0
        %4102 = vmatpush2.bf16.msra.mxu0 0
        %4103 = vmatprep.mubr.bf16.mxu0 0
        %4104 = vmatmul.mubr.bf16.gmra.mxu0 %v3618
        %v4105 = vpop.f32.mrf.mxu0
        %v4106 = vadd.f32 %v4065, %v4105
        %v4107 = vpop.f32.mrf.mxu0
        %v4108 = vadd.f32 %v4067, %v4107
        %v4109 = vpop.f32.mrf.mxu0
        %v4110 = vpop.f32.mrf.mxu0
        %4111 = vdwg.mxu0
        %4112 = vmatprep.subr.bf16.mxu0 %v3197
        %4113 = vmatpush1.bf16.msra.mxu0 %v3196
        %4114 = vmatprep.subr.bf16.mxu0 %v3181
        %4115 = vmatpush1.bf16.msra.mxu0 %v3180
        %4116 = vmatprep.subr.bf16.mxu0 %v3165
        %4117 = vmatpush1.bf16.msra.mxu0 %v3164
        %4118 = vmatprep.subr.bf16.mxu0 %v3149
        %4119 = vmatpush1.bf16.msra.mxu0 %v3148
        %4120 = vmatprep.subr.bf16.mxu0 %v3133
        %4121 = vmatpush1.bf16.msra.mxu0 %v3132
        %4122 = vmatprep.subr.bf16.mxu0 %v3117
        %4123 = vmatpush1.bf16.msra.mxu0 %v3116
        %4124 = vmatprep.subr.bf16.mxu0 %v3101
        %4125 = vmatpush1.bf16.msra.mxu0 %v3100
        %4126 = vmatprep.subr.bf16.mxu0 %v3085
        %4127 = vmatpush1.bf16.msra.mxu0 %v3084
        %4128 = vmatprep.subr.bf16.mxu0 %v3325
        %4129 = vmatpush2.bf16.msra.mxu0 %v3324
        %4130 = vmatprep.subr.bf16.mxu0 %v3309
        %4131 = vmatpush2.bf16.msra.mxu0 %v3308
        %4132 = vmatprep.subr.bf16.mxu0 %v3293
        %4133 = vmatpush2.bf16.msra.mxu0 %v3292
        %4134 = vmatprep.subr.bf16.mxu0 %v3277
        %4135 = vmatpush2.bf16.msra.mxu0 %v3276
        %4136 = vmatprep.subr.bf16.mxu0 %v3261
        %4137 = vmatpush2.bf16.msra.mxu0 %v3260
        %4138 = vmatprep.subr.bf16.mxu0 %v3245
        %4139 = vmatpush2.bf16.msra.mxu0 %v3244
        %4140 = vmatprep.subr.bf16.mxu0 %v3229
        %4141 = vmatpush2.bf16.msra.mxu0 %v3228
        %4142 = vmatprep.subr.bf16.mxu0 %v3213
        %4143 = vmatpush2.bf16.msra.mxu0 %v3212
        %4144 = vmatprep.mubr.bf16.mxu0 %v2252
        %4145 = vmatmul.mubr.bf16.gmra.mxu0 %v2251
        %v4146 = vpop.f32.mrf.mxu0
        %v4147 = vadd.f32 0.0, %v4146
        %v4148 = vpop.f32.mrf.mxu0
        %v4149 = vadd.f32 0.0, %v4148
        %v4150 = vpop.f32.mrf.mxu0
        %v4151 = vpop.f32.mrf.mxu0
        %4152 = vdwg.mxu0
        %4153 = vmatprep.subr.bf16.mxu0 0
        %4154 = vmatpush1.bf16.msra.mxu0 0
        %4155 = vmatprep.subr.bf16.mxu0 0
        %4156 = vmatpush1.bf16.msra.mxu0 0
        %4157 = vmatprep.subr.bf16.mxu0 0
        %4158 = vmatpush1.bf16.msra.mxu0 0
        %4159 = vmatprep.subr.bf16.mxu0 0
        %4160 = vmatpush1.bf16.msra.mxu0 0
        %4161 = vmatprep.subr.bf16.mxu0 0
        %4162 = vmatpush1.bf16.msra.mxu0 0
        %4163 = vmatprep.subr.bf16.mxu0 0
        %4164 = vmatpush1.bf16.msra.mxu0 0
        %4165 = vmatprep.subr.bf16.mxu0 0
        %4166 = vmatpush1.bf16.msra.mxu0 0
        %4167 = vmatprep.subr.bf16.mxu0 %v3341
        %4168 = vmatpush1.bf16.msra.mxu0 %v3340
        %4169 = vmatprep.subr.bf16.mxu0 0
        %4170 = vmatpush2.bf16.msra.mxu0 0
        %4171 = vmatprep.subr.bf16.mxu0 0
        %4172 = vmatpush2.bf16.msra.mxu0 0
        %4173 = vmatprep.subr.bf16.mxu0 0
        %4174 = vmatpush2.bf16.msra.mxu0 0
        %4175 = vmatprep.subr.bf16.mxu0 0
        %4176 = vmatpush2.bf16.msra.mxu0 0
        %4177 = vmatprep.subr.bf16.mxu0 0
        %4178 = vmatpush2.bf16.msra.mxu0 0
        %4179 = vmatprep.subr.bf16.mxu0 0
        %4180 = vmatpush2.bf16.msra.mxu0 0
        %4181 = vmatprep.subr.bf16.mxu0 0
        %4182 = vmatpush2.bf16.msra.mxu0 0
        %4183 = vmatprep.subr.bf16.mxu0 0
        %4184 = vmatpush2.bf16.msra.mxu0 0
        %4185 = vmatprep.mubr.bf16.mxu0 0
        %4186 = vmatmul.mubr.bf16.gmra.mxu0 %v3618
        %v4187 = vpop.f32.mrf.mxu0
        %v4188 = vadd.f32 %v4147, %v4187
        %v4189 = vpop.f32.mrf.mxu0
        %v4190 = vadd.f32 %v4149, %v4189
        %v4191 = vpop.f32.mrf.mxu0
        %v4192 = vpop.f32.mrf.mxu0
        %4193 = vdwg.mxu0
        %4194 = vmatprep.subr.bf16.mxu0 %v3199
        %4195 = vmatpush1.bf16.msra.mxu0 %v3198
        %4196 = vmatprep.subr.bf16.mxu0 %v3183
        %4197 = vmatpush1.bf16.msra.mxu0 %v3182
        %4198 = vmatprep.subr.bf16.mxu0 %v3167
        %4199 = vmatpush1.bf16.msra.mxu0 %v3166
        %4200 = vmatprep.subr.bf16.mxu0 %v3151
        %4201 = vmatpush1.bf16.msra.mxu0 %v3150
        %4202 = vmatprep.subr.bf16.mxu0 %v3135
        %4203 = vmatpush1.bf16.msra.mxu0 %v3134
        %4204 = vmatprep.subr.bf16.mxu0 %v3119
        %4205 = vmatpush1.bf16.msra.mxu0 %v3118
        %4206 = vmatprep.subr.bf16.mxu0 %v3103
        %4207 = vmatpush1.bf16.msra.mxu0 %v3102
        %4208 = vmatprep.subr.bf16.mxu0 %v3087
        %4209 = vmatpush1.bf16.msra.mxu0 %v3086
        %4210 = vmatprep.subr.bf16.mxu0 %v3327
        %4211 = vmatpush2.bf16.msra.mxu0 %v3326
        %4212 = vmatprep.subr.bf16.mxu0 %v3311
        %4213 = vmatpush2.bf16.msra.mxu0 %v3310
        %4214 = vmatprep.subr.bf16.mxu0 %v3295
        %4215 = vmatpush2.bf16.msra.mxu0 %v3294
        %4216 = vmatprep.subr.bf16.mxu0 %v3279
        %4217 = vmatpush2.bf16.msra.mxu0 %v3278
        %4218 = vmatprep.subr.bf16.mxu0 %v3263
        %4219 = vmatpush2.bf16.msra.mxu0 %v3262
        %4220 = vmatprep.subr.bf16.mxu0 %v3247
        %4221 = vmatpush2.bf16.msra.mxu0 %v3246
        %4222 = vmatprep.subr.bf16.mxu0 %v3231
        %4223 = vmatpush2.bf16.msra.mxu0 %v3230
        %4224 = vmatprep.subr.bf16.mxu0 %v3215
        %4225 = vmatpush2.bf16.msra.mxu0 %v3214
        %4226 = vmatprep.mubr.bf16.mxu0 %v2252
        %4227 = vmatmul.mubr.bf16.gmra.mxu0 %v2251
        %v4228 = vpop.f32.mrf.mxu0
        %v4229 = vadd.f32 0.0, %v4228
        %v4230 = vpop.f32.mrf.mxu0
        %v4231 = vadd.f32 0.0, %v4230
        %v4232 = vpop.f32.mrf.mxu0
        %v4233 = vpop.f32.mrf.mxu0
        %4234 = vdwg.mxu0
        %4235 = vmatprep.subr.bf16.mxu0 0
        %4236 = vmatpush1.bf16.msra.mxu0 0
        %4237 = vmatprep.subr.bf16.mxu0 0
        %4238 = vmatpush1.bf16.msra.mxu0 0
        %4239 = vmatprep.subr.bf16.mxu0 0
        %4240 = vmatpush1.bf16.msra.mxu0 0
        %4241 = vmatprep.subr.bf16.mxu0 0
        %4242 = vmatpush1.bf16.msra.mxu0 0
        %4243 = vmatprep.subr.bf16.mxu0 0
        %4244 = vmatpush1.bf16.msra.mxu0 0
        %4245 = vmatprep.subr.bf16.mxu0 0
        %4246 = vmatpush1.bf16.msra.mxu0 0
        %4247 = vmatprep.subr.bf16.mxu0 0
        %4248 = vmatpush1.bf16.msra.mxu0 0
        %4249 = vmatprep.subr.bf16.mxu0 %v3343
        %4250 = vmatpush1.bf16.msra.mxu0 %v3342
        %4251 = vmatprep.subr.bf16.mxu0 0
        %4252 = vmatpush2.bf16.msra.mxu0 0
        %4253 = vmatprep.subr.bf16.mxu0 0
        %4254 = vmatpush2.bf16.msra.mxu0 0
        %4255 = vmatprep.subr.bf16.mxu0 0
        %4256 = vmatpush2.bf16.msra.mxu0 0
        %4257 = vmatprep.subr.bf16.mxu0 0
        %4258 = vmatpush2.bf16.msra.mxu0 0
        %4259 = vmatprep.subr.bf16.mxu0 0
        %4260 = vmatpush2.bf16.msra.mxu0 0
        %4261 = vmatprep.subr.bf16.mxu0 0
        %4262 = vmatpush2.bf16.msra.mxu0 0
        %4263 = vmatprep.subr.bf16.mxu0 0
        %4264 = vmatpush2.bf16.msra.mxu0 0
        %4265 = vmatprep.subr.bf16.mxu0 0
        %4266 = vmatpush2.bf16.msra.mxu0 0
        %4267 = vmatprep.mubr.bf16.mxu0 0
        %4268 = vmatmul.mubr.bf16.gmra.mxu0 %v3618
        %v4269 = vpop.f32.mrf.mxu0
        %v4270 = vadd.f32 %v4229, %v4269
        %v4271 = vpop.f32.mrf.mxu0
        %v4272 = vadd.f32 %v4231, %v4271
        %v4273 = vpop.f32.mrf.mxu0
        %v4274 = vpop.f32.mrf.mxu0
        %4275 = vdwg.mxu0
        %4276 = vst [vmem:[%s652] sm:$0xff] %v3696
        %4277 = vst [vmem:[%s652 + $0x8] sm:$0xff] %v3698
        %4278 = vst [vmem:[%s652 + $0x10] sm:$0xff] %v3778
        %4279 = vst [vmem:[%s652 + $0x18] sm:$0xff] %v3780
        %4280 = vst [vmem:[%s652 + $0x20] sm:$0xff] %v3860
        %4281 = vst [vmem:[%s652 + $0x28] sm:$0xff] %v3862
        %4282 = vst [vmem:[%s652 + $0x30] sm:$0xff] %v3942
        %4283 = vst [vmem:[%s652 + $0x38] sm:$0xff] %v3944
        %4284 = vst [vmem:[%s652 + $0x40] sm:$0xff] %v4024
        %4285 = vst [vmem:[%s652 + $0x48] sm:$0xff] %v4026
        %4286 = vst [vmem:[%s652 + $0x50] sm:$0xff] %v4106
        %4287 = vst [vmem:[%s652 + $0x58] sm:$0xff] %v4108
        %4288 = vst [vmem:[%s652 + $0x60] sm:$0xff] %v4188
        %4289 = vst [vmem:[%s652 + $0x68] sm:$0xff] %v4190
        %4290 = vst [vmem:[%s652 + $0x70] sm:$0xff] %v4270
        %4291 = vst [vmem:[%s652 + $0x78] sm:$0xff] %v4272
        %v4292 = vld [vmem:[#allocation3] sm:$0xff]
        %v4293 = vmax.f32 %v3696, %v3860
        %v4294 = vmax.f32 %v3698, %v3862
        %v4295 = vmax.f32 %v3778, %v3942
        %v4296 = vmax.f32 %v3780, %v3944
        %v4297 = vmax.f32 %v4293, %v4024
        %v4298 = vmax.f32 %v4294, %v4026
        %v4299 = vmax.f32 %v4295, %v4106
        %v4300 = vmax.f32 %v4296, %v4108
        %v4301 = vmax.f32 %v4297, %v4188
        %v4302 = vmax.f32 %v4298, %v4190
        %v4303 = vmax.f32 %v4299, %v4270
        %v4304 = vmax.f32 %v4300, %v4272
        %v4305 = vmax.f32 %v4301, %v4302
        %v4306 = vmax.f32 %v4303, %v4304
        %v4307 = vmax.f32 %v4305, %v4306
        %4308 = vmax.xlane.f32.xlu0 %v4307
        %v4309 = vpop.xlane.xlu0 %4308
        %v4310 = vmax.f32 %v4292, %v4309
        %4312 = vset.pattern.permute.xlu0 0
        %4313 = vperm.xlu0 %4312, %v4310
        %v4314 = vpop.permute.xlu0 %4313
        %v4316 = vsub.f32 %v3696, %v4314
        %v4317 = vsub.f32 %v3698, %v4314
        %v4318 = vsub.f32 %v3778, %v4314
        %v4319 = vsub.f32 %v3780, %v4314
        %v4320 = vsub.f32 %v3860, %v4314
        %v4321 = vsub.f32 %v3862, %v4314
        %v4322 = vsub.f32 %v3942, %v4314
        %v4323 = vsub.f32 %v3944, %v4314
        %v4324 = vsub.f32 %v4024, %v4314
        %v4325 = vsub.f32 %v4026, %v4314
        %v4326 = vsub.f32 %v4106, %v4314
        %v4327 = vsub.f32 %v4108, %v4314
        %v4328 = vsub.f32 %v4188, %v4314
        %v4329 = vsub.f32 %v4190, %v4314
        %v4330 = vsub.f32 %v4270, %v4314
        %v4331 = vsub.f32 %v4272, %v4314
        %v4332 = vmul.f32 %v4316, 1.442695
        %v4333 = vpow.pop %v4332
        %v4334 = vmul.f32 %v4317, 1.442695
        %v4335 = vpow.pop %v4334
        %v4336 = vmul.f32 %v4318, 1.442695
        %v4337 = vpow.pop %v4336
        %v4338 = vmul.f32 %v4319, 1.442695
        %v4339 = vpow.pop %v4338
        %v4340 = vmul.f32 %v4320, 1.442695
        %v4341 = vpow.pop %v4340
        %v4342 = vmul.f32 %v4321, 1.442695
        %v4343 = vpow.pop %v4342
        %v4344 = vmul.f32 %v4322, 1.442695
        %v4345 = vpow.pop %v4344
        %v4346 = vmul.f32 %v4323, 1.442695
        %v4347 = vpow.pop %v4346
        %v4348 = vmul.f32 %v4324, 1.442695
        %v4349 = vpow.pop %v4348
        %v4350 = vmul.f32 %v4325, 1.442695
        %v4351 = vpow.pop %v4350
        %v4352 = vmul.f32 %v4326, 1.442695
        %v4353 = vpow.pop %v4352
        %v4354 = vmul.f32 %v4327, 1.442695
        %v4355 = vpow.pop %v4354
        %v4356 = vmul.f32 %v4328, 1.442695
        %v4357 = vpow.pop %v4356
        %v4358 = vmul.f32 %v4329, 1.442695
        %v4359 = vpow.pop %v4358
        %v4360 = vmul.f32 %v4330, 1.442695
        %v4361 = vpow.pop %v4360
        %v4362 = vmul.f32 %v4331, 1.442695
        %v4363 = vpow.pop %v4362
        %v4364 = vadd.f32 %v4333, %v4335
        %v4365 = vadd.f32 %v4364, %v4337
        %v4366 = vadd.f32 %v4365, %v4339
        %v4367 = vadd.f32 %v4366, %v4341
        %v4368 = vadd.f32 %v4367, %v4343
        %v4369 = vadd.f32 %v4368, %v4345
        %v4370 = vadd.f32 %v4369, %v4347
        %v4371 = vadd.f32 %v4370, %v4349
        %v4372 = vadd.f32 %v4371, %v4351
        %v4373 = vadd.f32 %v4372, %v4353
        %v4374 = vadd.f32 %v4373, %v4355
        %v4375 = vadd.f32 %v4374, %v4357
        %v4376 = vadd.f32 %v4375, %v4359
        %v4377 = vadd.f32 %v4376, %v4361
        %v4378 = vadd.f32 %v4377, %v4363
        %4379 = vadd.xlane.f32.xlu0 %v4378
        %v4380 = vpop.xlane.xlu0 %4379
        %v4381 = vld [vmem:[#allocation4] sm:$0xff]
        %v4382 = vsub.f32 %v4292, %v4310
        %v4383 = vmul.f32 %v4382, 1.442695
        %v4384 = vpow.pop %v4383
        %v4385 = vmul.f32 %v4381, %v4384
        %v4386 = vadd.f32 %v4385, %v4380
        %4387 = vst [vmem:[#allocation4] sm:$0xff] %v4386
        %4388 = vst [vmem:[#allocation3] sm:$0xff] %v4310
        %p4389 = scmp.eq.s32.totalorder %s39, 1
        // Predicated region
        $region113: #{decoder_step.1} parent=67 // pred_check
          %p4390 = pneg %p4389
        $region114: #{decoder_step.1} parent=67 // pred_check_branch
          %4392 = sbr.rel (%p4390) target = $region116
        $region115: #{decoder_step.1} parent=67 // pred_region
          %v4393 = vld [vmem:[#allocation3] sm:$0xff]
          %v4394 = vld [vmem:[#allocation4] sm:$0xff]
          %v4395 = vlog2.pop %v4394
          %v4396 = vmul.f32 %v4395, 0.6931472
          %v4397 = vadd.f32 %v4393, %v4396
          %4398 = vst [vmem:[%s659] sm:$0xff] %v4397
        $region116: #{decoder_step.1} parent=67 // pred_fallthru
          _
        %s4399 = smul.u32 %s38, 2
        %s4400 = sadd.s32 %s4399, %s39
        %s4401 = smul.u32 16, %s4400
        %p4402 = scmp.lt.s32.totalorder %s4401, 63
        %s4403 = scalar_select %p4402, %s4401, 63
        %s4404 = smul.addr %s4403, 8
        %s4405 = scalar_lea.vmem %s12, %s4404
        %p4406 = scmp.lt.s32.totalorder %s38, 1
        %s4407 = scalar_select %p4406, %s38, 1
        %s4408 = smul.addr %s4407, 8
        %s4409 = scalar_lea.vmem %s13, %s4408
        %p4410 = scmp.lt.s32.totalorder %s38, 1
        %s4411 = scalar_select %p4410, %s38, 1
        %s4412 = smul.addr %s4411, 8
        %s4413 = scalar_lea.vmem %s14, %s4412
        // Predicated region
        $region117: #{decoder_step.1} parent=67 // pred_check
          %p4414 = pneg %p329
        $region118: #{decoder_step.1} parent=67 // pred_check_branch
          %4416 = sbr.rel (%p4414) target = $region120
        $region119: #{decoder_step.1} parent=67 // pred_region
          %s4417 = smul.u32 %s38, 2
          %s4418 = sadd.s32 %s4417, %s39
          %s4419 = smul.u32 16, %s4418
        $region120: #{decoder_step.1} parent=67 // pred_fallthru
          _
        // Predicated region
        $region121: #{decoder_step.1} parent=67 // pred_check
          %p4420 = pneg %p355
        $region122: #{decoder_step.1} parent=67 // pred_check_branch
          %4422 = sbr.rel (%p4420) target = $region124
        $region123: #{decoder_step.1} parent=67 // pred_region
          _
        $region124: #{decoder_step.1} parent=67 // pred_fallthru
          _
        // Predicated region
        $region125: #{decoder_step.1} parent=67 // pred_check
          %p4423 = pneg %p381
        $region126: #{decoder_step.1} parent=67 // pred_check_branch
          %4425 = sbr.rel (%p4423) target = $region128
        $region127: #{decoder_step.1} parent=67 // pred_region
          _
        $region128: #{decoder_step.1} parent=67 // pred_fallthru
          _
      $region68: #{decoder_step.1} parent=5 // pred_fallthru
        _
      %p4426 = scmp.le.s32.totalorder 2, %s29
      // Predicated region
      $region129: #{decoder_step.1} parent=5 // pred_check
        %p4427 = pneg %p4426
      $region130: #{decoder_step.1} parent=5 // pred_check_branch
        %4429 = sbr.rel (%p4427) target = $region132
      $region131: #{decoder_step.1} parent=5 // pred_region
        %s4430 = ssub.s32 %s29, 2
        // Predicated region
        $region133: #{decoder_step.1} parent=131 // pred_check
          %p4431 = pneg %p335
        $region134: #{decoder_step.1} parent=131 // pred_check_branch
          %4433 = sbr.rel (%p4431) target = $region136
        $region135: #{decoder_step.1} parent=131 // pred_region
          %s4434 = smul.u32 %s40, 2
          %s4435 = sadd.s32 %s4434, %s41
          %s4436 = smul.u32 16, %s4435
          %p4437 = scmp.lt.s32.totalorder %s4436, 63
          %s4438 = scalar_select %p4437, %s4436, 63
          %s4439 = smul.addr %s4438, 8
          %s4440 = scalar_lea.vmem %s12, %s4439
        $region136: #{decoder_step.1} parent=131 // pred_fallthru
          _
        // Predicated region
        $region137: #{decoder_step.1} parent=131 // pred_check
          %p4441 = pneg %p361
        $region138: #{decoder_step.1} parent=131 // pred_check_branch
          %4443 = sbr.rel (%p4441) target = $region140
        $region139: #{decoder_step.1} parent=131 // pred_region
          %p4444 = scmp.lt.s32.totalorder %s40, 1
          %s4445 = scalar_select %p4444, %s40, 1
          %s4446 = smul.addr %s4445, 8
          %s4447 = scalar_lea.vmem %s13, %s4446
        $region140: #{decoder_step.1} parent=131 // pred_fallthru
          _
        // Predicated region
        $region141: #{decoder_step.1} parent=131 // pred_check
          %p4448 = pneg %p387
        $region142: #{decoder_step.1} parent=131 // pred_check_branch
          %4450 = sbr.rel (%p4448) target = $region144
        $region143: #{decoder_step.1} parent=131 // pred_region
          %p4451 = scmp.lt.s32.totalorder %s40, 1
          %s4452 = scalar_select %p4451, %s40, 1
          %s4453 = smul.addr %s4452, 8
          %s4454 = scalar_lea.vmem %s14, %s4453
        $region144: #{decoder_step.1} parent=131 // pred_fallthru
          _
      $region132: #{decoder_step.1} parent=5 // pred_fallthru
        _
    $region6: #{decoder_step.1} parent=1 // loop_footer
      %s33 = sadd.s32 1, %s29
    $region7: #{decoder_step.1} parent=1 // loop_footer_branch
      %28 = sbr.rel target = $region3
    $region8: #{decoder_step.1} parent=1 // loop_exit
      _
    %4455 = vsyncpa [#allocation6], 1
    %s4456 = scalar_lea.sflag [#allocation6], 1
    %4457 = vsyncpa %s4456, 1
    %4458 = vsyncpa [#allocation8], 1
    %4459 = vsyncpa [#allocation11], 1
    %4460 = vsyncpa [#allocation14], 1
    %4461 = vsyncpa [#allocation17], 1
    %4462 = vsyncpa [#allocation20], 1
    %s4463 = scalar_lea.sflag [#allocation20], 1
    %4464 = vsyncpa %s4463, 1

</llo_original>
